<compile_context>
chip_gen: v5e
topology: v5e:2x2
jax: 0.10.0
libtpu: 0.0.40
codegen_flags: <defaults>
</compile_context>

<pallas_src>
import functools

import jax
import jax.numpy as jnp
from jax import lax
from jax.experimental import pallas as pl
from jax.experimental.pallas import tpu as pltpu

_VMEM = pl.BlockSpec(memory_space=pltpu.MemorySpace.VMEM)
_VMEM_LIMIT = 32 * 1024 * 1024  # safe scoped-VMEM budget on v5e/v6e/v7x


# ---------------------------------------------------------------------------
# Stage A: conv1 (1D, 12->32, k=5, pad=2) + BN1 + ReLU + MaxPool1d(2)
# ---------------------------------------------------------------------------
def _c1_kernel(x_ref, w_ref, s_ref, sh_ref, o_ref):
    # x_ref : (1, 8, 12, G+1) bf16  phase-8 split of the zero-padded input
    # w_ref : (32, 60) bf16 ; s/sh : (32, 1) f32 (conv bias folded into shift)
    # o_ref : (1, 34, 4, G) bf16 ; rows 0/33 zero halo, row 1+c = channel c,
    #         entry [1+c, q, m] = pooled-time 4m+q of channel c.
    G = o_ref.shape[-1]
    x = x_ref[...]
    w = w_ref[...]
    scale, shift = s_ref[...], sh_ref[...]
    ys = []
    for r in range(8):                                   # conv time = 8m + r
        pieces = [x[0, (r + k) % 8, :, (r + k) // 8:(r + k) // 8 + G]
                  for k in range(5)]
        patch = jnp.concatenate(pieces, axis=0)                      # (60, G)
        a = jnp.dot(w, patch, preferred_element_type=jnp.float32)    # (32, G)
        ys.append(jnp.maximum(a * scale + shift, 0.0))
    pooled = [jnp.maximum(ys[2 * q], ys[2 * q + 1]) for q in range(4)]
    body = jnp.stack(pooled, axis=1).astype(o_ref.dtype)             # (32, 4, G)
    zrow = jnp.zeros((1, 4, G), o_ref.dtype)
    o_ref[0] = jnp.concatenate([zrow, body, zrow], axis=0)           # (34, 4, G)


def conv1_bn_relu_pool(xph, w1t, s1, sh1):
    B, _, _, Gp1 = xph.shape
    G = Gp1 - 1
    flops = 2 * 32 * 60 * 8 * G * B
    bytes_acc = xph.size * 2 + w1t.size * 2 + B * 34 * 4 * G * 2
    # TODO(synk): for very long records / B==1 add a time-tile grid axis so the
    # parallel grid product stays >= 2 on v7x and VMEM stays bounded.
    return pl.pallas_call(
        _c1_kernel,
        out_shape=jax.ShapeDtypeStruct((B, 34, 4, G), jnp.bfloat16),
        grid_spec=pltpu.PrefetchScalarGridSpec(
            num_scalar_prefetch=0,
            grid=(B,),
            in_specs=[
                pl.BlockSpec((1, 8, 12, Gp1), lambda b: (b, 0, 0, 0)),
                pl.BlockSpec((32, 60), lambda b: (0, 0)),
                pl.BlockSpec((32, 1), lambda b: (0, 0)),
                pl.BlockSpec((32, 1), lambda b: (0, 0)),
            ],
            out_specs=pl.BlockSpec((1, 34, 4, G), lambda b: (b, 0, 0, 0)),
        ),
        compiler_params=pltpu.CompilerParams(
            dimension_semantics=("parallel",), vmem_limit_bytes=_VMEM_LIMIT),
        cost_estimate=pl.CostEstimate(flops=flops, transcendentals=0,
                                      bytes_accessed=bytes_acc),
    )(xph, w1t, s1, sh1)


# ---------------------------------------------------------------------------
# Stage B: conv2 (2D, 1->64, 3x3, pad=1) + BN2 + ReLU + MaxPool2d(2,2)   (MXU)
# ---------------------------------------------------------------------------
def _c2_kernel(rA_ref, rB_ref, w_ref, s_ref, sh_ref, o_ref):
    # rA/rB : (1, 2, 4, G) bf16  padded image rows 2i..2i+1 / 2i+2..2i+3 (i=h-1)
    # w_ref : (64, 9) bf16  column = dh*3+dw ; s/sh : (64, 1) f32
    # o_ref : (1, 1, 2, 64, G+1) bf16  phase0 = [0, odd pooled cols],
    #                                  phase1 = [even pooled cols, 0]
    h = pl.program_id(1)
    nh = pl.num_programs(1)
    G = rA_ref.shape[-1]
    top = rA_ref[...]
    bot = rB_ref[...]
    rows = [top[0, 0], top[0, 1], bot[0, 0], bot[0, 1]]       # each (4, G) bf16
    zc = jnp.zeros((1, 1), rows[0].dtype)

    def col(row, q):
        # image column 4m + q (q in [-1, 4]) as a (1, G) vector over groups m
        if q == -1:
            p = rows[row][3:4, :]
            return jnp.concatenate([zc, p[:, :G - 1]], axis=1)
        if q == 4:
            p = rows[row][0:1, :]
            return jnp.concatenate([p[:, 1:], zc], axis=1)
        return rows[row][q:q + 1, :]

    w = w_ref[...]
    scale, shift = s_ref[...], sh_ref[...]
    pooled = []
    for e in range(2):                    # pooled-column parity (j = 2m + e)
        best = None
        for r in range(2):                # conv row inside the 2x2 pool window
            for c in range(2):            # conv col inside the 2x2 pool window
                pieces = [col(r + dh, 2 * e + c + dw - 1)
                          for dh in range(3) for dw in range(3)]
                patch = jnp.concatenate(pieces, axis=0)               # (9, G)
                acc = jnp.dot(w, patch, preferred_element_type=jnp.float32)
                cand = jnp.maximum(acc * scale + shift, 0.0)
                best = cand if best is None else jnp.maximum(best, cand)
        pooled.append(best)               # (64, G) f32

    zcol = jnp.zeros((64, 1), jnp.float32)
    ph0 = jnp.concatenate([zcol, pooled[1]], axis=1)      # odd cols, left pad
    ph1 = jnp.concatenate([pooled[0], zcol], axis=1)      # even cols, right pad
    keep = jnp.logical_and(h > 0, h < nh - 1)             # rows 0/17 = zero halo
    ph0 = jnp.where(keep, ph0, jnp.zeros_like(ph0))
    ph1 = jnp.where(keep, ph1, jnp.zeros_like(ph1))
    o_ref[0, 0, 0] = ph0.astype(o_ref.dtype)
    o_ref[0, 0, 1] = ph1.astype(o_ref.dtype)


def conv2_bn_relu_pool(a_out, w2f, s2, sh2):
    B, Hp, _, G = a_out.shape             # Hp = 34
    nblk = Hp // 2                        # 17 two-row input blocks
    H2p = (Hp - 2) // 2 + 2               # 18 = 16 pooled rows + 2 zero halo rows
    return pl.pallas_call(
        _c2_kernel,
        out_shape=jax.ShapeDtypeStruct((B, H2p, 2, 64, G + 1), jnp.bfloat16),
        grid_spec=pltpu.PrefetchScalarGridSpec(
            num_scalar_prefetch=0,
            grid=(B, H2p),
            in_specs=[
                pl.BlockSpec((1, 2, 4, G),
                             lambda b, h: (b, jnp.maximum(h - 1, 0), 0, 0)),
                pl.BlockSpec((1, 2, 4, G),
                             lambda b, h: (b, jnp.minimum(h, nblk - 1), 0, 0)),
                pl.BlockSpec((64, 9), lambda b, h: (0, 0)),
                pl.BlockSpec((64, 1), lambda b, h: (0, 0)),
                pl.BlockSpec((64, 1), lambda b, h: (0, 0)),
            ],
            out_specs=pl.BlockSpec((1, 1, 2, 64, G + 1),
                                   lambda b, h: (b, h, 0, 0, 0)),
        ),
        compiler_params=pltpu.CompilerParams(
            dimension_semantics=("parallel", "parallel"),
            vmem_limit_bytes=_VMEM_LIMIT),
    )(a_out, a_out, w2f, s2, sh2)


# ---------------------------------------------------------------------------
# Stage C: conv3 (2D, 64->128, 3x3, pad=1) + BN3 + ReLU + MaxPool2d(2,2)
#          + partial global-average-pool                     (MXU, K = 576)
# ---------------------------------------------------------------------------
def _c3_kernel(r01_ref, r23_ref, w_ref, s_ref, sh_ref, gap_ref):
    # r01/r23 : (1, 2, 2, 64, G+1) bf16  padded p2 rows 2h..2h+1 / 2h+2..2h+3
    # w_ref   : (128, 576) bf16  column = (dh*3+dw)*64 + cin ; s/sh : (128,1) f32
    # gap_ref : (1, 1, 1, 128) f32  per-pooled-row GAP partial sum
    G = r01_ref.shape[-1] - 1
    top = r01_ref[...]
    bot = r23_ref[...]
    rows = [top[0, 0], top[0, 1], bot[0, 0], bot[0, 1]]   # each (2, 64, G+1)

    def seg(row, q):                                      # q = s + dw in [0, 3]
        par, off = q & 1, q >> 1
        return rows[row][par, :, off:off + G]             # (64, G)

    bufs = []
    for s in range(2):                                    # pool-window column
        pieces = [seg(row, s + dw) for row in range(4) for dw in range(3)]
        bufs.append(jnp.concatenate(pieces, axis=0))      # (768, G)

    w = w_ref[...]
    scale, shift = s_ref[...], sh_ref[...]
    best = None
    for r in range(2):                                    # pool-window row
        for s in range(2):
            acc = jnp.dot(w, bufs[s][192 * r:192 * r + 576, :],
                          preferred_element_type=jnp.float32)       # (128, G)
            cand = jnp.maximum(acc * scale + shift, 0.0)
            best = cand if best is None else jnp.maximum(best, cand)
    gap_ref[0, 0] = jnp.sum(best, axis=1)[None, :]


def conv3_bn_relu_pool_gap(p2, w3cat, s3, sh3):
    B, Hp2, _, _, Gp1 = p2.shape          # Hp2 = 18
    G = Gp1 - 1
    H3 = (Hp2 - 2) // 2                   # 8
    flops = 2 * 128 * 576 * G * 4 * B * H3
    bytes_acc = B * H3 * 2 * (2 * 2 * 64 * Gp1) * 2 + w3cat.size * 2 + B * H3 * 128 * 4
    # TODO(synk): very long records (G >~ 4k) would want an extra width tile here.
    return pl.pallas_call(
        _c3_kernel,
        out_shape=jax.ShapeDtypeStruct((B, H3, 1, 128), jnp.float32),
        grid_spec=pltpu.PrefetchScalarGridSpec(
            num_scalar_prefetch=0,
            grid=(B, H3),
            in_specs=[
                pl.BlockSpec((1, 2, 2, 64, Gp1), lambda b, h: (b, h, 0, 0, 0)),
                pl.BlockSpec((1, 2, 2, 64, Gp1), lambda b, h: (b, h + 1, 0, 0, 0)),
                pl.BlockSpec((128, 576), lambda b, h: (0, 0)),
                pl.BlockSpec((128, 1), lambda b, h: (0, 0)),
                pl.BlockSpec((128, 1), lambda b, h: (0, 0)),
            ],
            out_specs=pl.BlockSpec((1, 1, 1, 128), lambda b, h: (b, h, 0, 0)),
        ),
        compiler_params=pltpu.CompilerParams(
            dimension_semantics=("parallel", "parallel"),
            vmem_limit_bytes=_VMEM_LIMIT),
        cost_estimate=pl.CostEstimate(flops=flops, transcendentals=0,
                                      bytes_accessed=bytes_acc),
    )(p2, p2, w3cat, s3, sh3)


# ---------------------------------------------------------------------------
# Head: GAP mean + fc1 + ReLU + Dropout(identity) + fc2 (padded to 128 lanes)
# ---------------------------------------------------------------------------
def _head_kernel(g_ref, w1_ref, b1_ref, w2_ref, b2_ref, o_ref, *, inv_hw):
    pooled = jnp.sum(g_ref[...], axis=1) * inv_hw                    # (B, 128)
    hid = jnp.dot(pooled, w1_ref[...], preferred_element_type=jnp.float32) + b1_ref[...]
    hid = jnp.maximum(hid, 0.0)
    # TODO(synk): Dropout(0.5) is inference-mode identity here (no RNG).
    o_ref[...] = jnp.dot(hid, w2_ref[...], preferred_element_type=jnp.float32) + b2_ref[...]


def head(gap, inv_hw, w1, b1, w2p, b2p):
    B = gap.shape[0]
    return pl.pallas_call(
        functools.partial(_head_kernel, inv_hw=inv_hw),
        out_shape=jax.ShapeDtypeStruct((B, 128), jnp.float32),
        in_specs=[_VMEM] * 5,
        out_specs=_VMEM,
    )(gap, w1, b1, w2p, b2p)


# ---------------------------------------------------------------------------
# Parameters (deterministic synthetic init matching the PyTorch shapes)
# ---------------------------------------------------------------------------
def _bn_fold(k, c, eps=1e-5):
    k1, k2, k3, k4 = jax.random.split(k, 4)
    gamma = 1.0 + 0.1 * jax.random.normal(k1, (c,), jnp.float32)
    beta = 0.1 * jax.random.normal(k2, (c,), jnp.float32)
    mean = 0.1 * jax.random.normal(k3, (c,), jnp.float32)
    var = 1.0 + 0.1 * jnp.abs(jax.random.normal(k4, (c,), jnp.float32))
    scale = gamma / jnp.sqrt(var + eps)
    shift = beta - mean * scale
    return scale, shift


def init_params(key):
    ks = jax.random.split(key, 13)
    nrm = lambda k, s: 0.1 * jax.random.normal(k, s, jnp.float32)
    raw = {}
    raw["w1"] = nrm(ks[0], (32, 12, 5)); raw["b1"] = nrm(ks[1], (32,))
    raw["s1"], raw["sh1"] = _bn_fold(ks[2], 32)
    raw["w2"] = nrm(ks[3], (64, 1, 3, 3)); raw["b2"] = nrm(ks[4], (64,))
    raw["s2"], raw["sh2"] = _bn_fold(ks[5], 64)
    raw["w3"] = nrm(ks[6], (128, 64, 3, 3)); raw["b3"] = nrm(ks[7], (128,))
    raw["s3"], raw["sh3"] = _bn_fold(ks[8], 128)
    raw["fc1_w"] = nrm(ks[9], (128, 128)); raw["fc1_b"] = nrm(ks[10], (128,))
    raw["fc2_w"] = nrm(ks[11], (128, 2)); raw["fc2_b"] = nrm(ks[12], (2,))

    p = {}
    # conv1 -> (32, 60) lhs, column = k*12 + cin
    p["w1t"] = jnp.transpose(raw["w1"], (0, 2, 1)).reshape(32, 60).astype(jnp.bfloat16)
    p["s1"] = raw["s1"].reshape(32, 1)
    p["sh1"] = (raw["b1"] * raw["s1"] + raw["sh1"]).reshape(32, 1)
    # conv2 -> (64, 9), column = dh*3 + dw
    p["w2f"] = raw["w2"].reshape(64, 9).astype(jnp.bfloat16)
    p["s2"] = raw["s2"].reshape(64, 1)
    p["sh2"] = (raw["b2"] * raw["s2"] + raw["sh2"]).reshape(64, 1)
    # conv3 -> (128, 576), column = (dh*3 + dw)*64 + cin
    p["w3cat"] = jnp.transpose(raw["w3"], (0, 2, 3, 1)).reshape(128, 576).astype(jnp.bfloat16)
    p["s3"] = raw["s3"].reshape(128, 1)
    p["sh3"] = (raw["b3"] * raw["s3"] + raw["sh3"]).reshape(128, 1)
    # fc layers stored as (in, out); fc2 padded to 128 output lanes
    p["fc1_w"] = raw["fc1_w"]
    p["fc1_b"] = raw["fc1_b"].reshape(1, 128)
    p["fc2_wp"] = jnp.pad(raw["fc2_w"], ((0, 0), (0, 126)))
    p["fc2_bp"] = jnp.pad(raw["fc2_b"], (0, 126)).reshape(1, 128)
    return p, raw


# ---------------------------------------------------------------------------
# Forward pass (Pallas) and pure-JAX reference
# ---------------------------------------------------------------------------
def forward(x, p):
    B, Cin, L = x.shape
    assert Cin == 12 and L % 8 == 0 and L >= 16
    G = L // 8                                   # final width W3 (height is 8)

    # Stage A input: pad + phase-8 split of the raw signal (one small XLA pass).
    xpad = jnp.pad(x.astype(jnp.bfloat16), ((0, 0), (0, 0), (2, 6)))
    xph = jnp.transpose(xpad.reshape(B, 12, G + 1, 8), (0, 3, 1, 2))  # (B,8,12,G+1)

    a_out = conv1_bn_relu_pool(xph, p["w1t"], p["s1"], p["sh1"])      # (B,34,4,G)
    p2 = conv2_bn_relu_pool(a_out, p["w2f"], p["s2"], p["sh2"])       # (B,18,2,64,G+1)
    gap = conv3_bn_relu_pool_gap(p2, p["w3cat"], p["s3"], p["sh3"])   # (B,8,1,128)
    gap = gap.reshape(B, 8, 128)
    out = head(gap, 1.0 / (8 * G), p["fc1_w"], p["fc1_b"], p["fc2_wp"], p["fc2_bp"])
    return out[:, :2]


def ref_forward(x, r):
    HIGH = lax.Precision.HIGHEST
    B, _, L = x.shape
    dn = ("NCHW", "OIHW", "NCHW")
    y = lax.conv_general_dilated(x[:, :, None, :], r["w1"][:, :, None, :], (1, 1),
                                 ((0, 0), (2, 2)), dimension_numbers=dn,
                                 precision=HIGH)[:, :, 0, :]
    y = y + r["b1"][None, :, None]
    y = jnp.maximum(y * r["s1"][None, :, None] + r["sh1"][None, :, None], 0.0)
    y = y.reshape(B, 32, L // 2, 2).max(axis=-1)                       # pool1
    z = y[:, None]
    z = lax.conv_general_dilated(z, r["w2"], (1, 1), ((1, 1), (1, 1)),
                                 dimension_numbers=dn, precision=HIGH)
    z = z + r["b2"][None, :, None, None]
    z = jnp.maximum(z * r["s2"][None, :, None, None] + r["sh2"][None, :, None, None], 0.0)
    B_, C, H, W = z.shape
    z = z.reshape(B_, C, H // 2, 2, W // 2, 2).max(axis=(3, 5))        # pool2
    z = lax.conv_general_dilated(z, r["w3"], (1, 1), ((1, 1), (1, 1)),
                                 dimension_numbers=dn, precision=HIGH)
    z = z + r["b3"][None, :, None, None]
    z = jnp.maximum(z * r["s3"][None, :, None, None] + r["sh3"][None, :, None, None], 0.0)
    B_, C, H, W = z.shape
    z = z.reshape(B_, C, H // 2, 2, W // 2, 2).max(axis=(3, 5))        # pool3
    g = z.mean(axis=(2, 3))                                            # GAP
    hid = jnp.maximum(g @ r["fc1_w"] + r["fc1_b"], 0.0)
    return hid @ r["fc2_w"] + r["fc2_b"]


if __name__ == "__main__":
    key = jax.random.PRNGKey(0)
    pkey, xkey = jax.random.split(key)
    params, raw = init_params(pkey)
    # ECG input: batch=2, 12 leads, sequence length 16 (NCW, as in PyTorch)
    x = jax.random.normal(xkey, (2, 12, 16), jnp.float32)
    out = jax.block_until_ready(jax.jit(forward)(x, params))
    ref = jax.block_until_ready(ref_forward(x, raw))
    assert out.shape == (2, 2) and out.dtype == jnp.float32
    max_err = float(jnp.max(jnp.abs(out - ref)))
    assert jnp.allclose(out, ref, atol=3e-2, rtol=3e-2), f"mismatch: max |err| = {max_err}"
    print("KERNEL_OK")
</pallas_src>

<mosaic_0001>
module attributes {stable_mosaic.version = 11 : i64} {
  func.func @_c1_kernel(%arg0: i32, %arg1: memref<1x8x12x3xbf16, #tpu.memory_space<vmem>>, %arg2: memref<32x60xbf16, #tpu.memory_space<vmem>>, %arg3: memref<32x1xf32, #tpu.memory_space<vmem>>, %arg4: memref<32x1xf32, #tpu.memory_space<vmem>>, %arg5: memref<1x34x4x2xbf16, #tpu.memory_space<vmem>>) attributes {dimension_semantics = [#tpu.dimension_semantics<parallel>], iteration_bounds = array<i64: 2>, scalar_prefetch = 0 : i64, scratch_operands = 0 : i64, tpu.core_type = #tpu.core_type<tc>, window_params = [{transform_indices = @transform_0, window_bounds = array<i64: 1, 8, 12, 3>}, {pipeline_mode = #tpu.pipeline_mode<synchronous>, transform_indices = @transform_1, window_bounds = array<i64: 32, 60>}, {pipeline_mode = #tpu.pipeline_mode<synchronous>, transform_indices = @transform_2, window_bounds = array<i64: 32, 1>}, {pipeline_mode = #tpu.pipeline_mode<synchronous>, transform_indices = @transform_3, window_bounds = array<i64: 32, 1>}, {transform_indices = @transform_4, window_bounds = array<i64: 1, 34, 4, 2>}]} {
    %c0 = arith.constant 0 : index
    %c0_0 = arith.constant 0 : index
    %c0_1 = arith.constant 0 : index
    %c0_2 = arith.constant 0 : index
    %0 = vector.load %arg1[%c0, %c0_0, %c0_1, %c0_2] : memref<1x8x12x3xbf16, #tpu.memory_space<vmem>>, vector<1x8x12x3xbf16>
    %c0_3 = arith.constant 0 : index
    %c0_4 = arith.constant 0 : index
    %1 = vector.load %arg2[%c0_3, %c0_4] : memref<32x60xbf16, #tpu.memory_space<vmem>>, vector<32x60xbf16>
    %c0_5 = arith.constant 0 : index
    %c0_6 = arith.constant 0 : index
    %2 = vector.load %arg3[%c0_5, %c0_6] : memref<32x1xf32, #tpu.memory_space<vmem>>, vector<32x1xf32>
    %c0_7 = arith.constant 0 : index
    %c0_8 = arith.constant 0 : index
    %3 = vector.load %arg4[%c0_7, %c0_8] : memref<32x1xf32, #tpu.memory_space<vmem>>, vector<32x1xf32>
    %4 = vector.extract_strided_slice %0 {offsets = [0, 0, 0, 0], sizes = [1, 1, 12, 2], strides = [1, 1, 1, 1]} : vector<1x8x12x3xbf16> to vector<1x1x12x2xbf16>
    %5 = vector.shape_cast %4 : vector<1x1x12x2xbf16> to vector<12x2xbf16>
    %6 = vector.extract_strided_slice %0 {offsets = [0, 1, 0, 0], sizes = [1, 1, 12, 2], strides = [1, 1, 1, 1]} : vector<1x8x12x3xbf16> to vector<1x1x12x2xbf16>
    %7 = vector.shape_cast %6 : vector<1x1x12x2xbf16> to vector<12x2xbf16>
    %8 = vector.extract_strided_slice %0 {offsets = [0, 2, 0, 0], sizes = [1, 1, 12, 2], strides = [1, 1, 1, 1]} : vector<1x8x12x3xbf16> to vector<1x1x12x2xbf16>
    %9 = vector.shape_cast %8 : vector<1x1x12x2xbf16> to vector<12x2xbf16>
    %10 = vector.extract_strided_slice %0 {offsets = [0, 3, 0, 0], sizes = [1, 1, 12, 2], strides = [1, 1, 1, 1]} : vector<1x8x12x3xbf16> to vector<1x1x12x2xbf16>
    %11 = vector.shape_cast %10 : vector<1x1x12x2xbf16> to vector<12x2xbf16>
    %12 = vector.extract_strided_slice %0 {offsets = [0, 4, 0, 0], sizes = [1, 1, 12, 2], strides = [1, 1, 1, 1]} : vector<1x8x12x3xbf16> to vector<1x1x12x2xbf16>
    %13 = vector.shape_cast %12 : vector<1x1x12x2xbf16> to vector<12x2xbf16>
    %14 = tpu.concatenate %5, %7, %9, %11, %13 in 0 : vector<12x2xbf16>, vector<12x2xbf16>, vector<12x2xbf16>, vector<12x2xbf16>, vector<12x2xbf16> -> vector<60x2xbf16>
    %cst = arith.constant dense<0.000000e+00> : vector<32x2xf32>
    %15 = tpu.matmul %1, %14, %cst {dimension_numbers = #tpu.dot_dimension_numbers<[1], [0], [0], [1], [0, 0, 1, 1], [], []>} : vector<32x60xbf16>, vector<60x2xbf16>, vector<32x2xf32> -> vector<32x2xf32>
    %16 = vector.broadcast %2 : vector<32x1xf32> to vector<32x2xf32>
    %17 = arith.mulf %15, %16 : vector<32x2xf32>
    %18 = vector.broadcast %3 : vector<32x1xf32> to vector<32x2xf32>
    %19 = arith.addf %17, %18 : vector<32x2xf32>
    %cst_9 = arith.constant 0.000000e+00 : f32
    %20 = vector.broadcast %cst_9 : f32 to vector<32x2xf32>
    %21 = arith.maximumf %19, %20 : vector<32x2xf32>
    %22 = vector.extract_strided_slice %0 {offsets = [0, 1, 0, 0], sizes = [1, 1, 12, 2], strides = [1, 1, 1, 1]} : vector<1x8x12x3xbf16> to vector<1x1x12x2xbf16>
    %23 = vector.shape_cast %22 : vector<1x1x12x2xbf16> to vector<12x2xbf16>
    %24 = vector.extract_strided_slice %0 {offsets = [0, 2, 0, 0], sizes = [1, 1, 12, 2], strides = [1, 1, 1, 1]} : vector<1x8x12x3xbf16> to vector<1x1x12x2xbf16>
    %25 = vector.shape_cast %24 : vector<1x1x12x2xbf16> to vector<12x2xbf16>
    %26 = vector.extract_strided_slice %0 {offsets = [0, 3, 0, 0], sizes = [1, 1, 12, 2], strides = [1, 1, 1, 1]} : vector<1x8x12x3xbf16> to vector<1x1x12x2xbf16>
    %27 = vector.shape_cast %26 : vector<1x1x12x2xbf16> to vector<12x2xbf16>
    %28 = vector.extract_strided_slice %0 {offsets = [0, 4, 0, 0], sizes = [1, 1, 12, 2], strides = [1, 1, 1, 1]} : vector<1x8x12x3xbf16> to vector<1x1x12x2xbf16>
    %29 = vector.shape_cast %28 : vector<1x1x12x2xbf16> to vector<12x2xbf16>
    %30 = vector.extract_strided_slice %0 {offsets = [0, 5, 0, 0], sizes = [1, 1, 12, 2], strides = [1, 1, 1, 1]} : vector<1x8x12x3xbf16> to vector<1x1x12x2xbf16>
    %31 = vector.shape_cast %30 : vector<1x1x12x2xbf16> to vector<12x2xbf16>
    %32 = tpu.concatenate %23, %25, %27, %29, %31 in 0 : vector<12x2xbf16>, vector<12x2xbf16>, vector<12x2xbf16>, vector<12x2xbf16>, vector<12x2xbf16> -> vector<60x2xbf16>
    %cst_10 = arith.constant dense<0.000000e+00> : vector<32x2xf32>
    %33 = tpu.matmul %1, %32, %cst_10 {dimension_numbers = #tpu.dot_dimension_numbers<[1], [0], [0], [1], [0, 0, 1, 1], [], []>} : vector<32x60xbf16>, vector<60x2xbf16>, vector<32x2xf32> -> vector<32x2xf32>
    %34 = vector.broadcast %2 : vector<32x1xf32> to vector<32x2xf32>
    %35 = arith.mulf %33, %34 : vector<32x2xf32>
    %36 = vector.broadcast %3 : vector<32x1xf32> to vector<32x2xf32>
    %37 = arith.addf %35, %36 : vector<32x2xf32>
    %cst_11 = arith.constant 0.000000e+00 : f32
    %38 = vector.broadcast %cst_11 : f32 to vector<32x2xf32>
    %39 = arith.maximumf %37, %38 : vector<32x2xf32>
    %40 = vector.extract_strided_slice %0 {offsets = [0, 2, 0, 0], sizes = [1, 1, 12, 2], strides = [1, 1, 1, 1]} : vector<1x8x12x3xbf16> to vector<1x1x12x2xbf16>
    %41 = vector.shape_cast %40 : vector<1x1x12x2xbf16> to vector<12x2xbf16>
    %42 = vector.extract_strided_slice %0 {offsets = [0, 3, 0, 0], sizes = [1, 1, 12, 2], strides = [1, 1, 1, 1]} : vector<1x8x12x3xbf16> to vector<1x1x12x2xbf16>
    %43 = vector.shape_cast %42 : vector<1x1x12x2xbf16> to vector<12x2xbf16>
    %44 = vector.extract_strided_slice %0 {offsets = [0, 4, 0, 0], sizes = [1, 1, 12, 2], strides = [1, 1, 1, 1]} : vector<1x8x12x3xbf16> to vector<1x1x12x2xbf16>
    %45 = vector.shape_cast %44 : vector<1x1x12x2xbf16> to vector<12x2xbf16>
    %46 = vector.extract_strided_slice %0 {offsets = [0, 5, 0, 0], sizes = [1, 1, 12, 2], strides = [1, 1, 1, 1]} : vector<1x8x12x3xbf16> to vector<1x1x12x2xbf16>
    %47 = vector.shape_cast %46 : vector<1x1x12x2xbf16> to vector<12x2xbf16>
    %48 = vector.extract_strided_slice %0 {offsets = [0, 6, 0, 0], sizes = [1, 1, 12, 2], strides = [1, 1, 1, 1]} : vector<1x8x12x3xbf16> to vector<1x1x12x2xbf16>
    %49 = vector.shape_cast %48 : vector<1x1x12x2xbf16> to vector<12x2xbf16>
    %50 = tpu.concatenate %41, %43, %45, %47, %49 in 0 : vector<12x2xbf16>, vector<12x2xbf16>, vector<12x2xbf16>, vector<12x2xbf16>, vector<12x2xbf16> -> vector<60x2xbf16>
    %cst_12 = arith.constant dense<0.000000e+00> : vector<32x2xf32>
    %51 = tpu.matmul %1, %50, %cst_12 {dimension_numbers = #tpu.dot_dimension_numbers<[1], [0], [0], [1], [0, 0, 1, 1], [], []>} : vector<32x60xbf16>, vector<60x2xbf16>, vector<32x2xf32> -> vector<32x2xf32>
    %52 = vector.broadcast %2 : vector<32x1xf32> to vector<32x2xf32>
    %53 = arith.mulf %51, %52 : vector<32x2xf32>
    %54 = vector.broadcast %3 : vector<32x1xf32> to vector<32x2xf32>
    %55 = arith.addf %53, %54 : vector<32x2xf32>
    %cst_13 = arith.constant 0.000000e+00 : f32
    %56 = vector.broadcast %cst_13 : f32 to vector<32x2xf32>
    %57 = arith.maximumf %55, %56 : vector<32x2xf32>
    %58 = vector.extract_strided_slice %0 {offsets = [0, 3, 0, 0], sizes = [1, 1, 12, 2], strides = [1, 1, 1, 1]} : vector<1x8x12x3xbf16> to vector<1x1x12x2xbf16>
    %59 = vector.shape_cast %58 : vector<1x1x12x2xbf16> to vector<12x2xbf16>
    %60 = vector.extract_strided_slice %0 {offsets = [0, 4, 0, 0], sizes = [1, 1, 12, 2], strides = [1, 1, 1, 1]} : vector<1x8x12x3xbf16> to vector<1x1x12x2xbf16>
    %61 = vector.shape_cast %60 : vector<1x1x12x2xbf16> to vector<12x2xbf16>
    %62 = vector.extract_strided_slice %0 {offsets = [0, 5, 0, 0], sizes = [1, 1, 12, 2], strides = [1, 1, 1, 1]} : vector<1x8x12x3xbf16> to vector<1x1x12x2xbf16>
    %63 = vector.shape_cast %62 : vector<1x1x12x2xbf16> to vector<12x2xbf16>
    %64 = vector.extract_strided_slice %0 {offsets = [0, 6, 0, 0], sizes = [1, 1, 12, 2], strides = [1, 1, 1, 1]} : vector<1x8x12x3xbf16> to vector<1x1x12x2xbf16>
    %65 = vector.shape_cast %64 : vector<1x1x12x2xbf16> to vector<12x2xbf16>
    %66 = vector.extract_strided_slice %0 {offsets = [0, 7, 0, 0], sizes = [1, 1, 12, 2], strides = [1, 1, 1, 1]} : vector<1x8x12x3xbf16> to vector<1x1x12x2xbf16>
    %67 = vector.shape_cast %66 : vector<1x1x12x2xbf16> to vector<12x2xbf16>
    %68 = tpu.concatenate %59, %61, %63, %65, %67 in 0 : vector<12x2xbf16>, vector<12x2xbf16>, vector<12x2xbf16>, vector<12x2xbf16>, vector<12x2xbf16> -> vector<60x2xbf16>
    %cst_14 = arith.constant dense<0.000000e+00> : vector<32x2xf32>
    %69 = tpu.matmul %1, %68, %cst_14 {dimension_numbers = #tpu.dot_dimension_numbers<[1], [0], [0], [1], [0, 0, 1, 1], [], []>} : vector<32x60xbf16>, vector<60x2xbf16>, vector<32x2xf32> -> vector<32x2xf32>
    %70 = vector.broadcast %2 : vector<32x1xf32> to vector<32x2xf32>
    %71 = arith.mulf %69, %70 : vector<32x2xf32>
    %72 = vector.broadcast %3 : vector<32x1xf32> to vector<32x2xf32>
    %73 = arith.addf %71, %72 : vector<32x2xf32>
    %cst_15 = arith.constant 0.000000e+00 : f32
    %74 = vector.broadcast %cst_15 : f32 to vector<32x2xf32>
    %75 = arith.maximumf %73, %74 : vector<32x2xf32>
    %76 = vector.extract_strided_slice %0 {offsets = [0, 4, 0, 0], sizes = [1, 1, 12, 2], strides = [1, 1, 1, 1]} : vector<1x8x12x3xbf16> to vector<1x1x12x2xbf16>
    %77 = vector.shape_cast %76 : vector<1x1x12x2xbf16> to vector<12x2xbf16>
    %78 = vector.extract_strided_slice %0 {offsets = [0, 5, 0, 0], sizes = [1, 1, 12, 2], strides = [1, 1, 1, 1]} : vector<1x8x12x3xbf16> to vector<1x1x12x2xbf16>
    %79 = vector.shape_cast %78 : vector<1x1x12x2xbf16> to vector<12x2xbf16>
    %80 = vector.extract_strided_slice %0 {offsets = [0, 6, 0, 0], sizes = [1, 1, 12, 2], strides = [1, 1, 1, 1]} : vector<1x8x12x3xbf16> to vector<1x1x12x2xbf16>
    %81 = vector.shape_cast %80 : vector<1x1x12x2xbf16> to vector<12x2xbf16>
    %82 = vector.extract_strided_slice %0 {offsets = [0, 7, 0, 0], sizes = [1, 1, 12, 2], strides = [1, 1, 1, 1]} : vector<1x8x12x3xbf16> to vector<1x1x12x2xbf16>
    %83 = vector.shape_cast %82 : vector<1x1x12x2xbf16> to vector<12x2xbf16>
    %84 = vector.extract_strided_slice %0 {offsets = [0, 0, 0, 1], sizes = [1, 1, 12, 2], strides = [1, 1, 1, 1]} : vector<1x8x12x3xbf16> to vector<1x1x12x2xbf16>
    %85 = vector.shape_cast %84 : vector<1x1x12x2xbf16> to vector<12x2xbf16>
    %86 = tpu.concatenate %77, %79, %81, %83, %85 in 0 : vector<12x2xbf16>, vector<12x2xbf16>, vector<12x2xbf16>, vector<12x2xbf16>, vector<12x2xbf16> -> vector<60x2xbf16>
    %cst_16 = arith.constant dense<0.000000e+00> : vector<32x2xf32>
    %87 = tpu.matmul %1, %86, %cst_16 {dimension_numbers = #tpu.dot_dimension_numbers<[1], [0], [0], [1], [0, 0, 1, 1], [], []>} : vector<32x60xbf16>, vector<60x2xbf16>, vector<32x2xf32> -> vector<32x2xf32>
    %88 = vector.broadcast %2 : vector<32x1xf32> to vector<32x2xf32>
    %89 = arith.mulf %87, %88 : vector<32x2xf32>
    %90 = vector.broadcast %3 : vector<32x1xf32> to vector<32x2xf32>
    %91 = arith.addf %89, %90 : vector<32x2xf32>
    %cst_17 = arith.constant 0.000000e+00 : f32
    %92 = vector.broadcast %cst_17 : f32 to vector<32x2xf32>
    %93 = arith.maximumf %91, %92 : vector<32x2xf32>
    %94 = vector.extract_strided_slice %0 {offsets = [0, 5, 0, 0], sizes = [1, 1, 12, 2], strides = [1, 1, 1, 1]} : vector<1x8x12x3xbf16> to vector<1x1x12x2xbf16>
    %95 = vector.shape_cast %94 : vector<1x1x12x2xbf16> to vector<12x2xbf16>
    %96 = vector.extract_strided_slice %0 {offsets = [0, 6, 0, 0], sizes = [1, 1, 12, 2], strides = [1, 1, 1, 1]} : vector<1x8x12x3xbf16> to vector<1x1x12x2xbf16>
    %97 = vector.shape_cast %96 : vector<1x1x12x2xbf16> to vector<12x2xbf16>
    %98 = vector.extract_strided_slice %0 {offsets = [0, 7, 0, 0], sizes = [1, 1, 12, 2], strides = [1, 1, 1, 1]} : vector<1x8x12x3xbf16> to vector<1x1x12x2xbf16>
    %99 = vector.shape_cast %98 : vector<1x1x12x2xbf16> to vector<12x2xbf16>
    %100 = vector.extract_strided_slice %0 {offsets = [0, 0, 0, 1], sizes = [1, 1, 12, 2], strides = [1, 1, 1, 1]} : vector<1x8x12x3xbf16> to vector<1x1x12x2xbf16>
    %101 = vector.shape_cast %100 : vector<1x1x12x2xbf16> to vector<12x2xbf16>
    %102 = vector.extract_strided_slice %0 {offsets = [0, 1, 0, 1], sizes = [1, 1, 12, 2], strides = [1, 1, 1, 1]} : vector<1x8x12x3xbf16> to vector<1x1x12x2xbf16>
    %103 = vector.shape_cast %102 : vector<1x1x12x2xbf16> to vector<12x2xbf16>
    %104 = tpu.concatenate %95, %97, %99, %101, %103 in 0 : vector<12x2xbf16>, vector<12x2xbf16>, vector<12x2xbf16>, vector<12x2xbf16>, vector<12x2xbf16> -> vector<60x2xbf16>
    %cst_18 = arith.constant dense<0.000000e+00> : vector<32x2xf32>
    %105 = tpu.matmul %1, %104, %cst_18 {dimension_numbers = #tpu.dot_dimension_numbers<[1], [0], [0], [1], [0, 0, 1, 1], [], []>} : vector<32x60xbf16>, vector<60x2xbf16>, vector<32x2xf32> -> vector<32x2xf32>
    %106 = vector.broadcast %2 : vector<32x1xf32> to vector<32x2xf32>
    %107 = arith.mulf %105, %106 : vector<32x2xf32>
    %108 = vector.broadcast %3 : vector<32x1xf32> to vector<32x2xf32>
    %109 = arith.addf %107, %108 : vector<32x2xf32>
    %cst_19 = arith.constant 0.000000e+00 : f32
    %110 = vector.broadcast %cst_19 : f32 to vector<32x2xf32>
    %111 = arith.maximumf %109, %110 : vector<32x2xf32>
    %112 = vector.extract_strided_slice %0 {offsets = [0, 6, 0, 0], sizes = [1, 1, 12, 2], strides = [1, 1, 1, 1]} : vector<1x8x12x3xbf16> to vector<1x1x12x2xbf16>
    %113 = vector.shape_cast %112 : vector<1x1x12x2xbf16> to vector<12x2xbf16>
    %114 = vector.extract_strided_slice %0 {offsets = [0, 7, 0, 0], sizes = [1, 1, 12, 2], strides = [1, 1, 1, 1]} : vector<1x8x12x3xbf16> to vector<1x1x12x2xbf16>
    %115 = vector.shape_cast %114 : vector<1x1x12x2xbf16> to vector<12x2xbf16>
    %116 = vector.extract_strided_slice %0 {offsets = [0, 0, 0, 1], sizes = [1, 1, 12, 2], strides = [1, 1, 1, 1]} : vector<1x8x12x3xbf16> to vector<1x1x12x2xbf16>
    %117 = vector.shape_cast %116 : vector<1x1x12x2xbf16> to vector<12x2xbf16>
    %118 = vector.extract_strided_slice %0 {offsets = [0, 1, 0, 1], sizes = [1, 1, 12, 2], strides = [1, 1, 1, 1]} : vector<1x8x12x3xbf16> to vector<1x1x12x2xbf16>
    %119 = vector.shape_cast %118 : vector<1x1x12x2xbf16> to vector<12x2xbf16>
    %120 = vector.extract_strided_slice %0 {offsets = [0, 2, 0, 1], sizes = [1, 1, 12, 2], strides = [1, 1, 1, 1]} : vector<1x8x12x3xbf16> to vector<1x1x12x2xbf16>
    %121 = vector.shape_cast %120 : vector<1x1x12x2xbf16> to vector<12x2xbf16>
    %122 = tpu.concatenate %113, %115, %117, %119, %121 in 0 : vector<12x2xbf16>, vector<12x2xbf16>, vector<12x2xbf16>, vector<12x2xbf16>, vector<12x2xbf16> -> vector<60x2xbf16>
    %cst_20 = arith.constant dense<0.000000e+00> : vector<32x2xf32>
    %123 = tpu.matmul %1, %122, %cst_20 {dimension_numbers = #tpu.dot_dimension_numbers<[1], [0], [0], [1], [0, 0, 1, 1], [], []>} : vector<32x60xbf16>, vector<60x2xbf16>, vector<32x2xf32> -> vector<32x2xf32>
    %124 = vector.broadcast %2 : vector<32x1xf32> to vector<32x2xf32>
    %125 = arith.mulf %123, %124 : vector<32x2xf32>
    %126 = vector.broadcast %3 : vector<32x1xf32> to vector<32x2xf32>
    %127 = arith.addf %125, %126 : vector<32x2xf32>
    %cst_21 = arith.constant 0.000000e+00 : f32
    %128 = vector.broadcast %cst_21 : f32 to vector<32x2xf32>
    %129 = arith.maximumf %127, %128 : vector<32x2xf32>
    %130 = vector.extract_strided_slice %0 {offsets = [0, 7, 0, 0], sizes = [1, 1, 12, 2], strides = [1, 1, 1, 1]} : vector<1x8x12x3xbf16> to vector<1x1x12x2xbf16>
    %131 = vector.shape_cast %130 : vector<1x1x12x2xbf16> to vector<12x2xbf16>
    %132 = vector.extract_strided_slice %0 {offsets = [0, 0, 0, 1], sizes = [1, 1, 12, 2], strides = [1, 1, 1, 1]} : vector<1x8x12x3xbf16> to vector<1x1x12x2xbf16>
    %133 = vector.shape_cast %132 : vector<1x1x12x2xbf16> to vector<12x2xbf16>
    %134 = vector.extract_strided_slice %0 {offsets = [0, 1, 0, 1], sizes = [1, 1, 12, 2], strides = [1, 1, 1, 1]} : vector<1x8x12x3xbf16> to vector<1x1x12x2xbf16>
    %135 = vector.shape_cast %134 : vector<1x1x12x2xbf16> to vector<12x2xbf16>
    %136 = vector.extract_strided_slice %0 {offsets = [0, 2, 0, 1], sizes = [1, 1, 12, 2], strides = [1, 1, 1, 1]} : vector<1x8x12x3xbf16> to vector<1x1x12x2xbf16>
    %137 = vector.shape_cast %136 : vector<1x1x12x2xbf16> to vector<12x2xbf16>
    %138 = vector.extract_strided_slice %0 {offsets = [0, 3, 0, 1], sizes = [1, 1, 12, 2], strides = [1, 1, 1, 1]} : vector<1x8x12x3xbf16> to vector<1x1x12x2xbf16>
    %139 = vector.shape_cast %138 : vector<1x1x12x2xbf16> to vector<12x2xbf16>
    %140 = tpu.concatenate %131, %133, %135, %137, %139 in 0 : vector<12x2xbf16>, vector<12x2xbf16>, vector<12x2xbf16>, vector<12x2xbf16>, vector<12x2xbf16> -> vector<60x2xbf16>
    %cst_22 = arith.constant dense<0.000000e+00> : vector<32x2xf32>
    %141 = tpu.matmul %1, %140, %cst_22 {dimension_numbers = #tpu.dot_dimension_numbers<[1], [0], [0], [1], [0, 0, 1, 1], [], []>} : vector<32x60xbf16>, vector<60x2xbf16>, vector<32x2xf32> -> vector<32x2xf32>
    %142 = vector.broadcast %2 : vector<32x1xf32> to vector<32x2xf32>
    %143 = arith.mulf %141, %142 : vector<32x2xf32>
    %144 = vector.broadcast %3 : vector<32x1xf32> to vector<32x2xf32>
    %145 = arith.addf %143, %144 : vector<32x2xf32>
    %cst_23 = arith.constant 0.000000e+00 : f32
    %146 = vector.broadcast %cst_23 : f32 to vector<32x2xf32>
    %147 = arith.maximumf %145, %146 : vector<32x2xf32>
    %148 = arith.maximumf %21, %39 : vector<32x2xf32>
    %149 = arith.maximumf %57, %75 : vector<32x2xf32>
    %150 = arith.maximumf %93, %111 : vector<32x2xf32>
    %151 = arith.maximumf %129, %147 : vector<32x2xf32>
    %152 = vector.shape_cast %148 : vector<32x2xf32> to vector<32x1x2xf32>
    %153 = vector.shape_cast %149 : vector<32x2xf32> to vector<32x1x2xf32>
    %154 = vector.shape_cast %150 : vector<32x2xf32> to vector<32x1x2xf32>
    %155 = vector.shape_cast %151 : vector<32x2xf32> to vector<32x1x2xf32>
    %156 = tpu.concatenate %152, %153, %154, %155 in 1 : vector<32x1x2xf32>, vector<32x1x2xf32>, vector<32x1x2xf32>, vector<32x1x2xf32> -> vector<32x4x2xf32>
    %157 = arith.truncf %156 : vector<32x4x2xf32> to vector<32x4x2xbf16>
    %cst_24 = arith.constant 0.000000e+00 : bf16
    %158 = vector.broadcast %cst_24 : bf16 to vector<1x4x2xbf16>
    %159 = tpu.concatenate %158, %157, %158 in 0 : vector<1x4x2xbf16>, vector<32x4x2xbf16>, vector<1x4x2xbf16> -> vector<34x4x2xbf16>
    %c0_25 = arith.constant 0 : index
    %c0_26 = arith.constant 0 : index
    %c0_27 = arith.constant 0 : index
    %c0_28 = arith.constant 0 : index
    %160 = vector.load %arg5[%c0_25, %c0_26, %c0_27, %c0_28] : memref<1x34x4x2xbf16, #tpu.memory_space<vmem>>, vector<1x34x4x2xbf16>
    %161 = vector.shape_cast %160 : vector<1x34x4x2xbf16> to vector<34x4x2xbf16>
    %162 = vector.shape_cast %159 : vector<34x4x2xbf16> to vector<1x34x4x2xbf16>
    tpu.vector_store %arg5[%c0_25, %c0_26, %c0_27, %c0_28], %162 {strides = array<i32>} : memref<1x34x4x2xbf16, #tpu.memory_space<vmem>>, vector<1x34x4x2xbf16>,
    return
  }
  func.func @transform_0(%arg0: i32) -> (i32, i32, i32, i32) {
    %c0_i32 = arith.constant 0 : i32
    %c0_i32_0 = arith.constant 0 : i32
    %c0_i32_1 = arith.constant 0 : i32
    %c0_i32_2 = arith.constant 0 : i32
    return %arg0, %c0_i32, %c0_i32_0, %c0_i32_1 : i32, i32, i32, i32
  }
  func.func @transform_1(%arg0: i32) -> (i32, i32) {
    %c0_i32 = arith.constant 0 : i32
    %c0_i32_0 = arith.constant 0 : i32
    %c0_i32_1 = arith.constant 0 : i32
    return %c0_i32, %c0_i32_0 : i32, i32
  }
  func.func @transform_2(%arg0: i32) -> (i32, i32) {
    %c0_i32 = arith.constant 0 : i32
    %c0_i32_0 = arith.constant 0 : i32
    %c0_i32_1 = arith.constant 0 : i32
    return %c0_i32, %c0_i32_0 : i32, i32
  }
  func.func @transform_3(%arg0: i32) -> (i32, i32) {
    %c0_i32 = arith.constant 0 : i32
    %c0_i32_0 = arith.constant 0 : i32
    %c0_i32_1 = arith.constant 0 : i32
    return %c0_i32, %c0_i32_0 : i32, i32
  }
  func.func @transform_4(%arg0: i32) -> (i32, i32, i32, i32) {
    %c0_i32 = arith.constant 0 : i32
    %c0_i32_0 = arith.constant 0 : i32
    %c0_i32_1 = arith.constant 0 : i32
    %c0_i32_2 = arith.constant 0 : i32
    return %arg0, %c0_i32, %c0_i32_0, %c0_i32_1 : i32, i32, i32, i32
  }
}

module attributes {stable_mosaic.version = 11 : i64} {
  func.func @_c3_kernel(%arg0: i32, %arg1: i32, %arg2: memref<1x2x2x64x3xbf16, #tpu.memory_space<vmem>>, %arg3: memref<1x2x2x64x3xbf16, #tpu.memory_space<vmem>>, %arg4: memref<128x576xbf16, #tpu.memory_space<vmem>>, %arg5: memref<128x1xf32, #tpu.memory_space<vmem>>, %arg6: memref<128x1xf32, #tpu.memory_space<vmem>>, %arg7: memref<1x1x1x128xf32, #tpu.memory_space<vmem>>) attributes {dimension_semantics = [#tpu.dimension_semantics<parallel>, #tpu.dimension_semantics<parallel>], iteration_bounds = array<i64: 2, 8>, scalar_prefetch = 0 : i64, scratch_operands = 0 : i64, tpu.core_type = #tpu.core_type<tc>, window_params = [{transform_indices = @transform_0, window_bounds = array<i64: 1, 2, 2, 64, 3>}, {transform_indices = @transform_1, window_bounds = array<i64: 1, 2, 2, 64, 3>}, {pipeline_mode = #tpu.pipeline_mode<synchronous>, transform_indices = @transform_2, window_bounds = array<i64: 128, 576>}, {pipeline_mode = #tpu.pipeline_mode<synchronous>, transform_indices = @transform_3, window_bounds = array<i64: 128, 1>}, {pipeline_mode = #tpu.pipeline_mode<synchronous>, transform_indices = @transform_4, window_bounds = array<i64: 128, 1>}, {transform_indices = @transform_5, window_bounds = array<i64: 1, 1, 1, 128>}]} {
    %c0 = arith.constant 0 : index
    %c0_0 = arith.constant 0 : index
    %c0_1 = arith.constant 0 : index
    %c0_2 = arith.constant 0 : index
    %c0_3 = arith.constant 0 : index
    %0 = vector.load %arg2[%c0, %c0_0, %c0_1, %c0_2, %c0_3] : memref<1x2x2x64x3xbf16, #tpu.memory_space<vmem>>, vector<1x2x2x64x3xbf16>
    %c0_4 = arith.constant 0 : index
    %c0_5 = arith.constant 0 : index
    %c0_6 = arith.constant 0 : index
    %c0_7 = arith.constant 0 : index
    %c0_8 = arith.constant 0 : index
    %1 = vector.load %arg3[%c0_4, %c0_5, %c0_6, %c0_7, %c0_8] : memref<1x2x2x64x3xbf16, #tpu.memory_space<vmem>>, vector<1x2x2x64x3xbf16>
    %2 = vector.extract_strided_slice %0 {offsets = [0, 0, 0, 0, 0], sizes = [1, 1, 2, 64, 3], strides = [1, 1, 1, 1, 1]} : vector<1x2x2x64x3xbf16> to vector<1x1x2x64x3xbf16>
    %3 = vector.shape_cast %2 : vector<1x1x2x64x3xbf16> to vector<2x64x3xbf16>
    %4 = vector.extract_strided_slice %0 {offsets = [0, 1, 0, 0, 0], sizes = [1, 1, 2, 64, 3], strides = [1, 1, 1, 1, 1]} : vector<1x2x2x64x3xbf16> to vector<1x1x2x64x3xbf16>
    %5 = vector.shape_cast %4 : vector<1x1x2x64x3xbf16> to vector<2x64x3xbf16>
    %6 = vector.extract_strided_slice %1 {offsets = [0, 0, 0, 0, 0], sizes = [1, 1, 2, 64, 3], strides = [1, 1, 1, 1, 1]} : vector<1x2x2x64x3xbf16> to vector<1x1x2x64x3xbf16>
    %7 = vector.shape_cast %6 : vector<1x1x2x64x3xbf16> to vector<2x64x3xbf16>
    %8 = vector.extract_strided_slice %1 {offsets = [0, 1, 0, 0, 0], sizes = [1, 1, 2, 64, 3], strides = [1, 1, 1, 1, 1]} : vector<1x2x2x64x3xbf16> to vector<1x1x2x64x3xbf16>
    %9 = vector.shape_cast %8 : vector<1x1x2x64x3xbf16> to vector<2x64x3xbf16>
    %10 = vector.extract_strided_slice %3 {offsets = [0, 0, 0], sizes = [1, 64, 2], strides = [1, 1, 1]} : vector<2x64x3xbf16> to vector<1x64x2xbf16>
    %11 = vector.shape_cast %10 : vector<1x64x2xbf16> to vector<64x2xbf16>
    %12 = vector.extract_strided_slice %3 {offsets = [1, 0, 0], sizes = [1, 64, 2], strides = [1, 1, 1]} : vector<2x64x3xbf16> to vector<1x64x2xbf16>
    %13 = vector.shape_cast %12 : vector<1x64x2xbf16> to vector<64x2xbf16>
    %14 = vector.extract_strided_slice %3 {offsets = [0, 0, 1], sizes = [1, 64, 2], strides = [1, 1, 1]} : vector<2x64x3xbf16> to vector<1x64x2xbf16>
    %15 = vector.shape_cast %14 : vector<1x64x2xbf16> to vector<64x2xbf16>
    %16 = vector.extract_strided_slice %5 {offsets = [0, 0, 0], sizes = [1, 64, 2], strides = [1, 1, 1]} : vector<2x64x3xbf16> to vector<1x64x2xbf16>
    %17 = vector.shape_cast %16 : vector<1x64x2xbf16> to vector<64x2xbf16>
    %18 = vector.extract_strided_slice %5 {offsets = [1, 0, 0], sizes = [1, 64, 2], strides = [1, 1, 1]} : vector<2x64x3xbf16> to vector<1x64x2xbf16>
    %19 = vector.shape_cast %18 : vector<1x64x2xbf16> to vector<64x2xbf16>
    %20 = vector.extract_strided_slice %5 {offsets = [0, 0, 1], sizes = [1, 64, 2], strides = [1, 1, 1]} : vector<2x64x3xbf16> to vector<1x64x2xbf16>
    %21 = vector.shape_cast %20 : vector<1x64x2xbf16> to vector<64x2xbf16>
    %22 = vector.extract_strided_slice %7 {offsets = [0, 0, 0], sizes = [1, 64, 2], strides = [1, 1, 1]} : vector<2x64x3xbf16> to vector<1x64x2xbf16>
    %23 = vector.shape_cast %22 : vector<1x64x2xbf16> to vector<64x2xbf16>
    %24 = vector.extract_strided_slice %7 {offsets = [1, 0, 0], sizes = [1, 64, 2], strides = [1, 1, 1]} : vector<2x64x3xbf16> to vector<1x64x2xbf16>
    %25 = vector.shape_cast %24 : vector<1x64x2xbf16> to vector<64x2xbf16>
    %26 = vector.extract_strided_slice %7 {offsets = [0, 0, 1], sizes = [1, 64, 2], strides = [1, 1, 1]} : vector<2x64x3xbf16> to vector<1x64x2xbf16>
    %27 = vector.shape_cast %26 : vector<1x64x2xbf16> to vector<64x2xbf16>
    %28 = vector.extract_strided_slice %9 {offsets = [0, 0, 0], sizes = [1, 64, 2], strides = [1, 1, 1]} : vector<2x64x3xbf16> to vector<1x64x2xbf16>
    %29 = vector.shape_cast %28 : vector<1x64x2xbf16> to vector<64x2xbf16>
    %30 = vector.extract_strided_slice %9 {offsets = [1, 0, 0], sizes = [1, 64, 2], strides = [1, 1, 1]} : vector<2x64x3xbf16> to vector<1x64x2xbf16>
    %31 = vector.shape_cast %30 : vector<1x64x2xbf16> to vector<64x2xbf16>
    %32 = vector.extract_strided_slice %9 {offsets = [0, 0, 1], sizes = [1, 64, 2], strides = [1, 1, 1]} : vector<2x64x3xbf16> to vector<1x64x2xbf16>
    %33 = vector.shape_cast %32 : vector<1x64x2xbf16> to vector<64x2xbf16>
    %34 = tpu.concatenate %11, %13, %15, %17, %19, %21, %23, %25, %27, %29, %31, %33 in 0 : vector<64x2xbf16>, vector<64x2xbf16>, vector<64x2xbf16>, vector<64x2xbf16>, vector<64x2xbf16>, vector<64x2xbf16>, vector<64x2xbf16>, vector<64x2xbf16>, vector<64x2xbf16>, vector<64x2xbf16>, vector<64x2xbf16>, vector<64x2xbf16> -> vector<768x2xbf16>
    %35 = vector.extract_strided_slice %3 {offsets = [1, 0, 0], sizes = [1, 64, 2], strides = [1, 1, 1]} : vector<2x64x3xbf16> to vector<1x64x2xbf16>
    %36 = vector.shape_cast %35 : vector<1x64x2xbf16> to vector<64x2xbf16>
    %37 = vector.extract_strided_slice %3 {offsets = [0, 0, 1], sizes = [1, 64, 2], strides = [1, 1, 1]} : vector<2x64x3xbf16> to vector<1x64x2xbf16>
    %38 = vector.shape_cast %37 : vector<1x64x2xbf16> to vector<64x2xbf16>
    %39 = vector.extract_strided_slice %3 {offsets = [1, 0, 1], sizes = [1, 64, 2], strides = [1, 1, 1]} : vector<2x64x3xbf16> to vector<1x64x2xbf16>
    %40 = vector.shape_cast %39 : vector<1x64x2xbf16> to vector<64x2xbf16>
    %41 = vector.extract_strided_slice %5 {offsets = [1, 0, 0], sizes = [1, 64, 2], strides = [1, 1, 1]} : vector<2x64x3xbf16> to vector<1x64x2xbf16>
    %42 = vector.shape_cast %41 : vector<1x64x2xbf16> to vector<64x2xbf16>
    %43 = vector.extract_strided_slice %5 {offsets = [0, 0, 1], sizes = [1, 64, 2], strides = [1, 1, 1]} : vector<2x64x3xbf16> to vector<1x64x2xbf16>
    %44 = vector.shape_cast %43 : vector<1x64x2xbf16> to vector<64x2xbf16>
    %45 = vector.extract_strided_slice %5 {offsets = [1, 0, 1], sizes = [1, 64, 2], strides = [1, 1, 1]} : vector<2x64x3xbf16> to vector<1x64x2xbf16>
    %46 = vector.shape_cast %45 : vector<1x64x2xbf16> to vector<64x2xbf16>
    %47 = vector.extract_strided_slice %7 {offsets = [1, 0, 0], sizes = [1, 64, 2], strides = [1, 1, 1]} : vector<2x64x3xbf16> to vector<1x64x2xbf16>
    %48 = vector.shape_cast %47 : vector<1x64x2xbf16> to vector<64x2xbf16>
    %49 = vector.extract_strided_slice %7 {offsets = [0, 0, 1], sizes = [1, 64, 2], strides = [1, 1, 1]} : vector<2x64x3xbf16> to vector<1x64x2xbf16>
    %50 = vector.shape_cast %49 : vector<1x64x2xbf16> to vector<64x2xbf16>
    %51 = vector.extract_strided_slice %7 {offsets = [1, 0, 1], sizes = [1, 64, 2], strides = [1, 1, 1]} : vector<2x64x3xbf16> to vector<1x64x2xbf16>
    %52 = vector.shape_cast %51 : vector<1x64x2xbf16> to vector<64x2xbf16>
    %53 = vector.extract_strided_slice %9 {offsets = [1, 0, 0], sizes = [1, 64, 2], strides = [1, 1, 1]} : vector<2x64x3xbf16> to vector<1x64x2xbf16>
    %54 = vector.shape_cast %53 : vector<1x64x2xbf16> to vector<64x2xbf16>
    %55 = vector.extract_strided_slice %9 {offsets = [0, 0, 1], sizes = [1, 64, 2], strides = [1, 1, 1]} : vector<2x64x3xbf16> to vector<1x64x2xbf16>
    %56 = vector.shape_cast %55 : vector<1x64x2xbf16> to vector<64x2xbf16>
    %57 = vector.extract_strided_slice %9 {offsets = [1, 0, 1], sizes = [1, 64, 2], strides = [1, 1, 1]} : vector<2x64x3xbf16> to vector<1x64x2xbf16>
    %58 = vector.shape_cast %57 : vector<1x64x2xbf16> to vector<64x2xbf16>
    %59 = tpu.concatenate %36, %38, %40, %42, %44, %46, %48, %50, %52, %54, %56, %58 in 0 : vector<64x2xbf16>, vector<64x2xbf16>, vector<64x2xbf16>, vector<64x2xbf16>, vector<64x2xbf16>, vector<64x2xbf16>, vector<64x2xbf16>, vector<64x2xbf16>, vector<64x2xbf16>, vector<64x2xbf16>, vector<64x2xbf16>, vector<64x2xbf16> -> vector<768x2xbf16>
    %c0_9 = arith.constant 0 : index
    %c0_10 = arith.constant 0 : index
    %60 = vector.load %arg4[%c0_9, %c0_10] : memref<128x576xbf16, #tpu.memory_space<vmem>>, vector<128x576xbf16>
    %c0_11 = arith.constant 0 : index
    %c0_12 = arith.constant 0 : index
    %61 = vector.load %arg5[%c0_11, %c0_12] : memref<128x1xf32, #tpu.memory_space<vmem>>, vector<128x1xf32>
    %c0_13 = arith.constant 0 : index
    %c0_14 = arith.constant 0 : index
    %62 = vector.load %arg6[%c0_13, %c0_14] : memref<128x1xf32, #tpu.memory_space<vmem>>, vector<128x1xf32>
    %63 = vector.extract_strided_slice %34 {offsets = [0, 0], sizes = [576, 2], strides = [1, 1]} : vector<768x2xbf16> to vector<576x2xbf16>
    %cst = arith.constant dense<0.000000e+00> : vector<128x2xf32>
    %64 = tpu.matmul %60, %63, %cst {dimension_numbers = #tpu.dot_dimension_numbers<[1], [0], [0], [1], [0, 0, 1, 1], [], []>} : vector<128x576xbf16>, vector<576x2xbf16>, vector<128x2xf32> -> vector<128x2xf32>
    %65 = vector.broadcast %61 : vector<128x1xf32> to vector<128x2xf32>
    %66 = arith.mulf %64, %65 : vector<128x2xf32>
    %67 = vector.broadcast %62 : vector<128x1xf32> to vector<128x2xf32>
    %68 = arith.addf %66, %67 : vector<128x2xf32>
    %cst_15 = arith.constant 0.000000e+00 : f32
    %69 = vector.broadcast %cst_15 : f32 to vector<128x2xf32>
    %70 = arith.maximumf %68, %69 : vector<128x2xf32>
    %71 = vector.extract_strided_slice %59 {offsets = [0, 0], sizes = [576, 2], strides = [1, 1]} : vector<768x2xbf16> to vector<576x2xbf16>
    %cst_16 = arith.constant dense<0.000000e+00> : vector<128x2xf32>
    %72 = tpu.matmul %60, %71, %cst_16 {dimension_numbers = #tpu.dot_dimension_numbers<[1], [0], [0], [1], [0, 0, 1, 1], [], []>} : vector<128x576xbf16>, vector<576x2xbf16>, vector<128x2xf32> -> vector<128x2xf32>
    %73 = vector.broadcast %61 : vector<128x1xf32> to vector<128x2xf32>
    %74 = arith.mulf %72, %73 : vector<128x2xf32>
    %75 = vector.broadcast %62 : vector<128x1xf32> to vector<128x2xf32>
    %76 = arith.addf %74, %75 : vector<128x2xf32>
    %cst_17 = arith.constant 0.000000e+00 : f32
    %77 = vector.broadcast %cst_17 : f32 to vector<128x2xf32>
    %78 = arith.maximumf %76, %77 : vector<128x2xf32>
    %79 = arith.maximumf %70, %78 : vector<128x2xf32>
    %80 = vector.extract_strided_slice %34 {offsets = [192, 0], sizes = [576, 2], strides = [1, 1]} : vector<768x2xbf16> to vector<576x2xbf16>
    %cst_18 = arith.constant dense<0.000000e+00> : vector<128x2xf32>
    %81 = tpu.matmul %60, %80, %cst_18 {dimension_numbers = #tpu.dot_dimension_numbers<[1], [0], [0], [1], [0, 0, 1, 1], [], []>} : vector<128x576xbf16>, vector<576x2xbf16>, vector<128x2xf32> -> vector<128x2xf32>
    %82 = vector.broadcast %61 : vector<128x1xf32> to vector<128x2xf32>
    %83 = arith.mulf %81, %82 : vector<128x2xf32>
    %84 = vector.broadcast %62 : vector<128x1xf32> to vector<128x2xf32>
    %85 = arith.addf %83, %84 : vector<128x2xf32>
    %cst_19 = arith.constant 0.000000e+00 : f32
    %86 = vector.broadcast %cst_19 : f32 to vector<128x2xf32>
    %87 = arith.maximumf %85, %86 : vector<128x2xf32>
    %88 = arith.maximumf %79, %87 : vector<128x2xf32>
    %89 = vector.extract_strided_slice %59 {offsets = [192, 0], sizes = [576, 2], strides = [1, 1]} : vector<768x2xbf16> to vector<576x2xbf16>
    %cst_20 = arith.constant dense<0.000000e+00> : vector<128x2xf32>
    %90 = tpu.matmul %60, %89, %cst_20 {dimension_numbers = #tpu.dot_dimension_numbers<[1], [0], [0], [1], [0, 0, 1, 1], [], []>} : vector<128x576xbf16>, vector<576x2xbf16>, vector<128x2xf32> -> vector<128x2xf32>
    %91 = vector.broadcast %61 : vector<128x1xf32> to vector<128x2xf32>
    %92 = arith.mulf %90, %91 : vector<128x2xf32>
    %93 = vector.broadcast %62 : vector<128x1xf32> to vector<128x2xf32>
    %94 = arith.addf %92, %93 : vector<128x2xf32>
    %cst_21 = arith.constant 0.000000e+00 : f32
    %95 = vector.broadcast %cst_21 : f32 to vector<128x2xf32>
    %96 = arith.maximumf %94, %95 : vector<128x2xf32>
    %97 = arith.maximumf %88, %96 : vector<128x2xf32>
    %cst_22 = arith.constant dense<0.000000e+00> : vector<128xf32>
    %98 = vector.multi_reduction <add>, %97, %cst_22 [1] : vector<128x2xf32> to vector<128xf32>
    %99 = vector.shape_cast %98 : vector<128xf32> to vector<1x128xf32>
    %c0_23 = arith.constant 0 : index
    %c0_24 = arith.constant 0 : index
    %c0_25 = arith.constant 0 : index
    %c0_26 = arith.constant 0 : index
    %100 = vector.load %arg7[%c0_23, %c0_24, %c0_25, %c0_26] : memref<1x1x1x128xf32, #tpu.memory_space<vmem>>, vector<1x1x1x128xf32>
    %101 = vector.shape_cast %100 : vector<1x1x1x128xf32> to vector<1x128xf32>
    %102 = vector.shape_cast %99 : vector<1x128xf32> to vector<1x1x1x128xf32>
    tpu.vector_store %arg7[%c0_23, %c0_24, %c0_25, %c0_26], %102 {strides = array<i32>} : memref<1x1x1x128xf32, #tpu.memory_space<vmem>>, vector<1x1x1x128xf32>,
    return
  }
  func.func @transform_0(%arg0: i32, %arg1: i32) -> (i32, i32, i32, i32, i32) {
    %c0_i32 = arith.constant 0 : i32
    %c0_i32_0 = arith.constant 0 : i32
    %c0_i32_1 = arith.constant 0 : i32
    %c0_i32_2 = arith.constant 0 : i32
    return %arg0, %arg1, %c0_i32, %c0_i32_0, %c0_i32_1 : i32, i32, i32, i32, i32
  }
  func.func @transform_1(%arg0: i32, %arg1: i32) -> (i32, i32, i32, i32, i32) {
    %c1_i32 = arith.constant 1 : i32
    %0 = arith.addi %arg1, %c1_i32 : i32
    %c0_i32 = arith.constant 0 : i32
    %c0_i32_0 = arith.constant 0 : i32
    %c0_i32_1 = arith.constant 0 : i32
    %c0_i32_2 = arith.constant 0 : i32
    return %arg0, %0, %c0_i32, %c0_i32_0, %c0_i32_1 : i32, i32, i32, i32, i32
  }
  func.func @transform_2(%arg0: i32, %arg1: i32) -> (i32, i32) {
    %c0_i32 = arith.constant 0 : i32
    %c0_i32_0 = arith.constant 0 : i32
    %c0_i32_1 = arith.constant 0 : i32
    return %c0_i32, %c0_i32_0 : i32, i32
  }
  func.func @transform_3(%arg0: i32, %arg1: i32) -> (i32, i32) {
    %c0_i32 = arith.constant 0 : i32
    %c0_i32_0 = arith.constant 0 : i32
    %c0_i32_1 = arith.constant 0 : i32
    return %c0_i32, %c0_i32_0 : i32, i32
  }
  func.func @transform_4(%arg0: i32, %arg1: i32) -> (i32, i32) {
    %c0_i32 = arith.constant 0 : i32
    %c0_i32_0 = arith.constant 0 : i32
    %c0_i32_1 = arith.constant 0 : i32
    return %c0_i32, %c0_i32_0 : i32, i32
  }
  func.func @transform_5(%arg0: i32, %arg1: i32) -> (i32, i32, i32, i32) {
    %c0_i32 = arith.constant 0 : i32
    %c0_i32_0 = arith.constant 0 : i32
    %c0_i32_1 = arith.constant 0 : i32
    return %arg0, %arg1, %c0_i32, %c0_i32_0 : i32, i32, i32, i32
  }
}

module attributes {stable_mosaic.version = 11 : i64} {
  func.func @_c2_kernel(%arg0: i32, %arg1: i32, %arg2: memref<1x2x4x2xbf16, #tpu.memory_space<vmem>>, %arg3: memref<1x2x4x2xbf16, #tpu.memory_space<vmem>>, %arg4: memref<64x9xbf16, #tpu.memory_space<vmem>>, %arg5: memref<64x1xf32, #tpu.memory_space<vmem>>, %arg6: memref<64x1xf32, #tpu.memory_space<vmem>>, %arg7: memref<1x1x2x64x3xbf16, #tpu.memory_space<vmem>>) attributes {dimension_semantics = [#tpu.dimension_semantics<parallel>, #tpu.dimension_semantics<parallel>], iteration_bounds = array<i64: 2, 18>, scalar_prefetch = 0 : i64, scratch_operands = 0 : i64, tpu.core_type = #tpu.core_type<tc>, window_params = [{transform_indices = @transform_0, window_bounds = array<i64: 1, 2, 4, 2>}, {transform_indices = @transform_1, window_bounds = array<i64: 1, 2, 4, 2>}, {pipeline_mode = #tpu.pipeline_mode<synchronous>, transform_indices = @transform_2, window_bounds = array<i64: 64, 9>}, {pipeline_mode = #tpu.pipeline_mode<synchronous>, transform_indices = @transform_3, window_bounds = array<i64: 64, 1>}, {pipeline_mode = #tpu.pipeline_mode<synchronous>, transform_indices = @transform_4, window_bounds = array<i64: 64, 1>}, {transform_indices = @transform_5, window_bounds = array<i64: 1, 1, 2, 64, 3>}]} {
    %c0 = arith.constant 0 : index
    %c0_0 = arith.constant 0 : index
    %c0_1 = arith.constant 0 : index
    %c0_2 = arith.constant 0 : index
    %0 = vector.load %arg2[%c0, %c0_0, %c0_1, %c0_2] : memref<1x2x4x2xbf16, #tpu.memory_space<vmem>>, vector<1x2x4x2xbf16>
    %c0_3 = arith.constant 0 : index
    %c0_4 = arith.constant 0 : index
    %c0_5 = arith.constant 0 : index
    %c0_6 = arith.constant 0 : index
    %1 = vector.load %arg3[%c0_3, %c0_4, %c0_5, %c0_6] : memref<1x2x4x2xbf16, #tpu.memory_space<vmem>>, vector<1x2x4x2xbf16>
    %2 = vector.extract_strided_slice %0 {offsets = [0, 0, 0, 0], sizes = [1, 1, 4, 2], strides = [1, 1, 1, 1]} : vector<1x2x4x2xbf16> to vector<1x1x4x2xbf16>
    %3 = vector.shape_cast %2 : vector<1x1x4x2xbf16> to vector<4x2xbf16>
    %4 = vector.extract_strided_slice %0 {offsets = [0, 1, 0, 0], sizes = [1, 1, 4, 2], strides = [1, 1, 1, 1]} : vector<1x2x4x2xbf16> to vector<1x1x4x2xbf16>
    %5 = vector.shape_cast %4 : vector<1x1x4x2xbf16> to vector<4x2xbf16>
    %6 = vector.extract_strided_slice %1 {offsets = [0, 0, 0, 0], sizes = [1, 1, 4, 2], strides = [1, 1, 1, 1]} : vector<1x2x4x2xbf16> to vector<1x1x4x2xbf16>
    %7 = vector.shape_cast %6 : vector<1x1x4x2xbf16> to vector<4x2xbf16>
    %8 = vector.extract_strided_slice %1 {offsets = [0, 1, 0, 0], sizes = [1, 1, 4, 2], strides = [1, 1, 1, 1]} : vector<1x2x4x2xbf16> to vector<1x1x4x2xbf16>
    %9 = vector.shape_cast %8 : vector<1x1x4x2xbf16> to vector<4x2xbf16>
    %cst = arith.constant 0.000000e+00 : bf16
    %10 = vector.broadcast %cst : bf16 to vector<1x1xbf16>
    %c0_7 = arith.constant 0 : index
    %c0_8 = arith.constant 0 : index
    %11 = vector.load %arg4[%c0_7, %c0_8] : memref<64x9xbf16, #tpu.memory_space<vmem>>, vector<64x9xbf16>
    %c0_9 = arith.constant 0 : index
    %c0_10 = arith.constant 0 : index
    %12 = vector.load %arg5[%c0_9, %c0_10] : memref<64x1xf32, #tpu.memory_space<vmem>>, vector<64x1xf32>
    %c0_11 = arith.constant 0 : index
    %c0_12 = arith.constant 0 : index
    %13 = vector.load %arg6[%c0_11, %c0_12] : memref<64x1xf32, #tpu.memory_space<vmem>>, vector<64x1xf32>
    %14 = vector.extract_strided_slice %3 {offsets = [3, 0], sizes = [1, 2], strides = [1, 1]} : vector<4x2xbf16> to vector<1x2xbf16>
    %15 = vector.extract_strided_slice %14 {offsets = [0, 0], sizes = [1, 1], strides = [1, 1]} : vector<1x2xbf16> to vector<1x1xbf16>
    %16 = tpu.concatenate %10, %15 in 1 : vector<1x1xbf16>, vector<1x1xbf16> -> vector<1x2xbf16>
    %17 = vector.extract_strided_slice %3 {offsets = [0, 0], sizes = [1, 2], strides = [1, 1]} : vector<4x2xbf16> to vector<1x2xbf16>
    %18 = vector.extract_strided_slice %3 {offsets = [1, 0], sizes = [1, 2], strides = [1, 1]} : vector<4x2xbf16> to vector<1x2xbf16>
    %19 = vector.extract_strided_slice %5 {offsets = [3, 0], sizes = [1, 2], strides = [1, 1]} : vector<4x2xbf16> to vector<1x2xbf16>
    %20 = vector.extract_strided_slice %19 {offsets = [0, 0], sizes = [1, 1], strides = [1, 1]} : vector<1x2xbf16> to vector<1x1xbf16>
    %21 = tpu.concatenate %10, %20 in 1 : vector<1x1xbf16>, vector<1x1xbf16> -> vector<1x2xbf16>
    %22 = vector.extract_strided_slice %5 {offsets = [0, 0], sizes = [1, 2], strides = [1, 1]} : vector<4x2xbf16> to vector<1x2xbf16>
    %23 = vector.extract_strided_slice %5 {offsets = [1, 0], sizes = [1, 2], strides = [1, 1]} : vector<4x2xbf16> to vector<1x2xbf16>
    %24 = vector.extract_strided_slice %7 {offsets = [3, 0], sizes = [1, 2], strides = [1, 1]} : vector<4x2xbf16> to vector<1x2xbf16>
    %25 = vector.extract_strided_slice %24 {offsets = [0, 0], sizes = [1, 1], strides = [1, 1]} : vector<1x2xbf16> to vector<1x1xbf16>
    %26 = tpu.concatenate %10, %25 in 1 : vector<1x1xbf16>, vector<1x1xbf16> -> vector<1x2xbf16>
    %27 = vector.extract_strided_slice %7 {offsets = [0, 0], sizes = [1, 2], strides = [1, 1]} : vector<4x2xbf16> to vector<1x2xbf16>
    %28 = vector.extract_strided_slice %7 {offsets = [1, 0], sizes = [1, 2], strides = [1, 1]} : vector<4x2xbf16> to vector<1x2xbf16>
    %29 = tpu.concatenate %16, %17, %18, %21, %22, %23, %26, %27, %28 in 0 : vector<1x2xbf16>, vector<1x2xbf16>, vector<1x2xbf16>, vector<1x2xbf16>, vector<1x2xbf16>, vector<1x2xbf16>, vector<1x2xbf16>, vector<1x2xbf16>, vector<1x2xbf16> -> vector<9x2xbf16>
    %cst_13 = arith.constant dense<0.000000e+00> : vector<64x2xf32>
    %30 = tpu.matmul %11, %29, %cst_13 {dimension_numbers = #tpu.dot_dimension_numbers<[1], [0], [0], [1], [0, 0, 1, 1], [], []>} : vector<64x9xbf16>, vector<9x2xbf16>, vector<64x2xf32> -> vector<64x2xf32>
    %31 = vector.broadcast %12 : vector<64x1xf32> to vector<64x2xf32>
    %32 = arith.mulf %30, %31 : vector<64x2xf32>
    %33 = vector.broadcast %13 : vector<64x1xf32> to vector<64x2xf32>
    %34 = arith.addf %32, %33 : vector<64x2xf32>
    %cst_14 = arith.constant 0.000000e+00 : f32
    %35 = vector.broadcast %cst_14 : f32 to vector<64x2xf32>
    %36 = arith.maximumf %34, %35 : vector<64x2xf32>
    %37 = vector.extract_strided_slice %3 {offsets = [0, 0], sizes = [1, 2], strides = [1, 1]} : vector<4x2xbf16> to vector<1x2xbf16>
    %38 = vector.extract_strided_slice %3 {offsets = [1, 0], sizes = [1, 2], strides = [1, 1]} : vector<4x2xbf16> to vector<1x2xbf16>
    %39 = vector.extract_strided_slice %3 {offsets = [2, 0], sizes = [1, 2], strides = [1, 1]} : vector<4x2xbf16> to vector<1x2xbf16>
    %40 = vector.extract_strided_slice %5 {offsets = [0, 0], sizes = [1, 2], strides = [1, 1]} : vector<4x2xbf16> to vector<1x2xbf16>
    %41 = vector.extract_strided_slice %5 {offsets = [1, 0], sizes = [1, 2], strides = [1, 1]} : vector<4x2xbf16> to vector<1x2xbf16>
    %42 = vector.extract_strided_slice %5 {offsets = [2, 0], sizes = [1, 2], strides = [1, 1]} : vector<4x2xbf16> to vector<1x2xbf16>
    %43 = vector.extract_strided_slice %7 {offsets = [0, 0], sizes = [1, 2], strides = [1, 1]} : vector<4x2xbf16> to vector<1x2xbf16>
    %44 = vector.extract_strided_slice %7 {offsets = [1, 0], sizes = [1, 2], strides = [1, 1]} : vector<4x2xbf16> to vector<1x2xbf16>
    %45 = vector.extract_strided_slice %7 {offsets = [2, 0], sizes = [1, 2], strides = [1, 1]} : vector<4x2xbf16> to vector<1x2xbf16>
    %46 = tpu.concatenate %37, %38, %39, %40, %41, %42, %43, %44, %45 in 0 : vector<1x2xbf16>, vector<1x2xbf16>, vector<1x2xbf16>, vector<1x2xbf16>, vector<1x2xbf16>, vector<1x2xbf16>, vector<1x2xbf16>, vector<1x2xbf16>, vector<1x2xbf16> -> vector<9x2xbf16>
    %cst_15 = arith.constant dense<0.000000e+00> : vector<64x2xf32>
    %47 = tpu.matmul %11, %46, %cst_15 {dimension_numbers = #tpu.dot_dimension_numbers<[1], [0], [0], [1], [0, 0, 1, 1], [], []>} : vector<64x9xbf16>, vector<9x2xbf16>, vector<64x2xf32> -> vector<64x2xf32>
    %48 = vector.broadcast %12 : vector<64x1xf32> to vector<64x2xf32>
    %49 = arith.mulf %47, %48 : vector<64x2xf32>
    %50 = vector.broadcast %13 : vector<64x1xf32> to vector<64x2xf32>
    %51 = arith.addf %49, %50 : vector<64x2xf32>
    %cst_16 = arith.constant 0.000000e+00 : f32
    %52 = vector.broadcast %cst_16 : f32 to vector<64x2xf32>
    %53 = arith.maximumf %51, %52 : vector<64x2xf32>
    %54 = arith.maximumf %36, %53 : vector<64x2xf32>
    %55 = vector.extract_strided_slice %5 {offsets = [3, 0], sizes = [1, 2], strides = [1, 1]} : vector<4x2xbf16> to vector<1x2xbf16>
    %56 = vector.extract_strided_slice %55 {offsets = [0, 0], sizes = [1, 1], strides = [1, 1]} : vector<1x2xbf16> to vector<1x1xbf16>
    %57 = tpu.concatenate %10, %56 in 1 : vector<1x1xbf16>, vector<1x1xbf16> -> vector<1x2xbf16>
    %58 = vector.extract_strided_slice %5 {offsets = [0, 0], sizes = [1, 2], strides = [1, 1]} : vector<4x2xbf16> to vector<1x2xbf16>
    %59 = vector.extract_strided_slice %5 {offsets = [1, 0], sizes = [1, 2], strides = [1, 1]} : vector<4x2xbf16> to vector<1x2xbf16>
    %60 = vector.extract_strided_slice %7 {offsets = [3, 0], sizes = [1, 2], strides = [1, 1]} : vector<4x2xbf16> to vector<1x2xbf16>
    %61 = vector.extract_strided_slice %60 {offsets = [0, 0], sizes = [1, 1], strides = [1, 1]} : vector<1x2xbf16> to vector<1x1xbf16>
    %62 = tpu.concatenate %10, %61 in 1 : vector<1x1xbf16>, vector<1x1xbf16> -> vector<1x2xbf16>
    %63 = vector.extract_strided_slice %7 {offsets = [0, 0], sizes = [1, 2], strides = [1, 1]} : vector<4x2xbf16> to vector<1x2xbf16>
    %64 = vector.extract_strided_slice %7 {offsets = [1, 0], sizes = [1, 2], strides = [1, 1]} : vector<4x2xbf16> to vector<1x2xbf16>
    %65 = vector.extract_strided_slice %9 {offsets = [3, 0], sizes = [1, 2], strides = [1, 1]} : vector<4x2xbf16> to vector<1x2xbf16>
    %66 = vector.extract_strided_slice %65 {offsets = [0, 0], sizes = [1, 1], strides = [1, 1]} : vector<1x2xbf16> to vector<1x1xbf16>
    %67 = tpu.concatenate %10, %66 in 1 : vector<1x1xbf16>, vector<1x1xbf16> -> vector<1x2xbf16>
    %68 = vector.extract_strided_slice %9 {offsets = [0, 0], sizes = [1, 2], strides = [1, 1]} : vector<4x2xbf16> to vector<1x2xbf16>
    %69 = vector.extract_strided_slice %9 {offsets = [1, 0], sizes = [1, 2], strides = [1, 1]} : vector<4x2xbf16> to vector<1x2xbf16>
    %70 = tpu.concatenate %57, %58, %59, %62, %63, %64, %67, %68, %69 in 0 : vector<1x2xbf16>, vector<1x2xbf16>, vector<1x2xbf16>, vector<1x2xbf16>, vector<1x2xbf16>, vector<1x2xbf16>, vector<1x2xbf16>, vector<1x2xbf16>, vector<1x2xbf16> -> vector<9x2xbf16>
    %cst_17 = arith.constant dense<0.000000e+00> : vector<64x2xf32>
    %71 = tpu.matmul %11, %70, %cst_17 {dimension_numbers = #tpu.dot_dimension_numbers<[1], [0], [0], [1], [0, 0, 1, 1], [], []>} : vector<64x9xbf16>, vector<9x2xbf16>, vector<64x2xf32> -> vector<64x2xf32>
    %72 = vector.broadcast %12 : vector<64x1xf32> to vector<64x2xf32>
    %73 = arith.mulf %71, %72 : vector<64x2xf32>
    %74 = vector.broadcast %13 : vector<64x1xf32> to vector<64x2xf32>
    %75 = arith.addf %73, %74 : vector<64x2xf32>
    %cst_18 = arith.constant 0.000000e+00 : f32
    %76 = vector.broadcast %cst_18 : f32 to vector<64x2xf32>
    %77 = arith.maximumf %75, %76 : vector<64x2xf32>
    %78 = arith.maximumf %54, %77 : vector<64x2xf32>
    %79 = vector.extract_strided_slice %5 {offsets = [0, 0], sizes = [1, 2], strides = [1, 1]} : vector<4x2xbf16> to vector<1x2xbf16>
    %80 = vector.extract_strided_slice %5 {offsets = [1, 0], sizes = [1, 2], strides = [1, 1]} : vector<4x2xbf16> to vector<1x2xbf16>
    %81 = vector.extract_strided_slice %5 {offsets = [2, 0], sizes = [1, 2], strides = [1, 1]} : vector<4x2xbf16> to vector<1x2xbf16>
    %82 = vector.extract_strided_slice %7 {offsets = [0, 0], sizes = [1, 2], strides = [1, 1]} : vector<4x2xbf16> to vector<1x2xbf16>
    %83 = vector.extract_strided_slice %7 {offsets = [1, 0], sizes = [1, 2], strides = [1, 1]} : vector<4x2xbf16> to vector<1x2xbf16>
    %84 = vector.extract_strided_slice %7 {offsets = [2, 0], sizes = [1, 2], strides = [1, 1]} : vector<4x2xbf16> to vector<1x2xbf16>
    %85 = vector.extract_strided_slice %9 {offsets = [0, 0], sizes = [1, 2], strides = [1, 1]} : vector<4x2xbf16> to vector<1x2xbf16>
    %86 = vector.extract_strided_slice %9 {offsets = [1, 0], sizes = [1, 2], strides = [1, 1]} : vector<4x2xbf16> to vector<1x2xbf16>
    %87 = vector.extract_strided_slice %9 {offsets = [2, 0], sizes = [1, 2], strides = [1, 1]} : vector<4x2xbf16> to vector<1x2xbf16>
    %88 = tpu.concatenate %79, %80, %81, %82, %83, %84, %85, %86, %87 in 0 : vector<1x2xbf16>, vector<1x2xbf16>, vector<1x2xbf16>, vector<1x2xbf16>, vector<1x2xbf16>, vector<1x2xbf16>, vector<1x2xbf16>, vector<1x2xbf16>, vector<1x2xbf16> -> vector<9x2xbf16>
    %cst_19 = arith.constant dense<0.000000e+00> : vector<64x2xf32>
    %89 = tpu.matmul %11, %88, %cst_19 {dimension_numbers = #tpu.dot_dimension_numbers<[1], [0], [0], [1], [0, 0, 1, 1], [], []>} : vector<64x9xbf16>, vector<9x2xbf16>, vector<64x2xf32> -> vector<64x2xf32>
    %90 = vector.broadcast %12 : vector<64x1xf32> to vector<64x2xf32>
    %91 = arith.mulf %89, %90 : vector<64x2xf32>
    %92 = vector.broadcast %13 : vector<64x1xf32> to vector<64x2xf32>
    %93 = arith.addf %91, %92 : vector<64x2xf32>
    %cst_20 = arith.constant 0.000000e+00 : f32
    %94 = vector.broadcast %cst_20 : f32 to vector<64x2xf32>
    %95 = arith.maximumf %93, %94 : vector<64x2xf32>
    %96 = arith.maximumf %78, %95 : vector<64x2xf32>
    %97 = vector.extract_strided_slice %3 {offsets = [1, 0], sizes = [1, 2], strides = [1, 1]} : vector<4x2xbf16> to vector<1x2xbf16>
    %98 = vector.extract_strided_slice %3 {offsets = [2, 0], sizes = [1, 2], strides = [1, 1]} : vector<4x2xbf16> to vector<1x2xbf16>
    %99 = vector.extract_strided_slice %3 {offsets = [3, 0], sizes = [1, 2], strides = [1, 1]} : vector<4x2xbf16> to vector<1x2xbf16>
    %100 = vector.extract_strided_slice %5 {offsets = [1, 0], sizes = [1, 2], strides = [1, 1]} : vector<4x2xbf16> to vector<1x2xbf16>
    %101 = vector.extract_strided_slice %5 {offsets = [2, 0], sizes = [1, 2], strides = [1, 1]} : vector<4x2xbf16> to vector<1x2xbf16>
    %102 = vector.extract_strided_slice %5 {offsets = [3, 0], sizes = [1, 2], strides = [1, 1]} : vector<4x2xbf16> to vector<1x2xbf16>
    %103 = vector.extract_strided_slice %7 {offsets = [1, 0], sizes = [1, 2], strides = [1, 1]} : vector<4x2xbf16> to vector<1x2xbf16>
    %104 = vector.extract_strided_slice %7 {offsets = [2, 0], sizes = [1, 2], strides = [1, 1]} : vector<4x2xbf16> to vector<1x2xbf16>
    %105 = vector.extract_strided_slice %7 {offsets = [3, 0], sizes = [1, 2], strides = [1, 1]} : vector<4x2xbf16> to vector<1x2xbf16>
    %106 = tpu.concatenate %97, %98, %99, %100, %101, %102, %103, %104, %105 in 0 : vector<1x2xbf16>, vector<1x2xbf16>, vector<1x2xbf16>, vector<1x2xbf16>, vector<1x2xbf16>, vector<1x2xbf16>, vector<1x2xbf16>, vector<1x2xbf16>, vector<1x2xbf16> -> vector<9x2xbf16>
    %cst_21 = arith.constant dense<0.000000e+00> : vector<64x2xf32>
    %107 = tpu.matmul %11, %106, %cst_21 {dimension_numbers = #tpu.dot_dimension_numbers<[1], [0], [0], [1], [0, 0, 1, 1], [], []>} : vector<64x9xbf16>, vector<9x2xbf16>, vector<64x2xf32> -> vector<64x2xf32>
    %108 = vector.broadcast %12 : vector<64x1xf32> to vector<64x2xf32>
    %109 = arith.mulf %107, %108 : vector<64x2xf32>
    %110 = vector.broadcast %13 : vector<64x1xf32> to vector<64x2xf32>
    %111 = arith.addf %109, %110 : vector<64x2xf32>
    %cst_22 = arith.constant 0.000000e+00 : f32
    %112 = vector.broadcast %cst_22 : f32 to vector<64x2xf32>
    %113 = arith.maximumf %111, %112 : vector<64x2xf32>
    %114 = vector.extract_strided_slice %3 {offsets = [2, 0], sizes = [1, 2], strides = [1, 1]} : vector<4x2xbf16> to vector<1x2xbf16>
    %115 = vector.extract_strided_slice %3 {offsets = [3, 0], sizes = [1, 2], strides = [1, 1]} : vector<4x2xbf16> to vector<1x2xbf16>
    %116 = vector.extract_strided_slice %3 {offsets = [0, 0], sizes = [1, 2], strides = [1, 1]} : vector<4x2xbf16> to vector<1x2xbf16>
    %117 = vector.extract_strided_slice %116 {offsets = [0, 1], sizes = [1, 1], strides = [1, 1]} : vector<1x2xbf16> to vector<1x1xbf16>
    %118 = tpu.concatenate %117, %10 in 1 : vector<1x1xbf16>, vector<1x1xbf16> -> vector<1x2xbf16>
    %119 = vector.extract_strided_slice %5 {offsets = [2, 0], sizes = [1, 2], strides = [1, 1]} : vector<4x2xbf16> to vector<1x2xbf16>
    %120 = vector.extract_strided_slice %5 {offsets = [3, 0], sizes = [1, 2], strides = [1, 1]} : vector<4x2xbf16> to vector<1x2xbf16>
    %121 = vector.extract_strided_slice %5 {offsets = [0, 0], sizes = [1, 2], strides = [1, 1]} : vector<4x2xbf16> to vector<1x2xbf16>
    %122 = vector.extract_strided_slice %121 {offsets = [0, 1], sizes = [1, 1], strides = [1, 1]} : vector<1x2xbf16> to vector<1x1xbf16>
    %123 = tpu.concatenate %122, %10 in 1 : vector<1x1xbf16>, vector<1x1xbf16> -> vector<1x2xbf16>
    %124 = vector.extract_strided_slice %7 {offsets = [2, 0], sizes = [1, 2], strides = [1, 1]} : vector<4x2xbf16> to vector<1x2xbf16>
    %125 = vector.extract_strided_slice %7 {offsets = [3, 0], sizes = [1, 2], strides = [1, 1]} : vector<4x2xbf16> to vector<1x2xbf16>
    %126 = vector.extract_strided_slice %7 {offsets = [0, 0], sizes = [1, 2], strides = [1, 1]} : vector<4x2xbf16> to vector<1x2xbf16>
    %127 = vector.extract_strided_slice %126 {offsets = [0, 1], sizes = [1, 1], strides = [1, 1]} : vector<1x2xbf16> to vector<1x1xbf16>
    %128 = tpu.concatenate %127, %10 in 1 : vector<1x1xbf16>, vector<1x1xbf16> -> vector<1x2xbf16>
    %129 = tpu.concatenate %114, %115, %118, %119, %120, %123, %124, %125, %128 in 0 : vector<1x2xbf16>, vector<1x2xbf16>, vector<1x2xbf16>, vector<1x2xbf16>, vector<1x2xbf16>, vector<1x2xbf16>, vector<1x2xbf16>, vector<1x2xbf16>, vector<1x2xbf16> -> vector<9x2xbf16>
    %cst_23 = arith.constant dense<0.000000e+00> : vector<64x2xf32>
    %130 = tpu.matmul %11, %129, %cst_23 {dimension_numbers = #tpu.dot_dimension_numbers<[1], [0], [0], [1], [0, 0, 1, 1], [], []>} : vector<64x9xbf16>, vector<9x2xbf16>, vector<64x2xf32> -> vector<64x2xf32>
    %131 = vector.broadcast %12 : vector<64x1xf32> to vector<64x2xf32>
    %132 = arith.mulf %130, %131 : vector<64x2xf32>
    %133 = vector.broadcast %13 : vector<64x1xf32> to vector<64x2xf32>
    %134 = arith.addf %132, %133 : vector<64x2xf32>
    %cst_24 = arith.constant 0.000000e+00 : f32
    %135 = vector.broadcast %cst_24 : f32 to vector<64x2xf32>
    %136 = arith.maximumf %134, %135 : vector<64x2xf32>
    %137 = arith.maximumf %113, %136 : vector<64x2xf32>
    %138 = vector.extract_strided_slice %5 {offsets = [1, 0], sizes = [1, 2], strides = [1, 1]} : vector<4x2xbf16> to vector<1x2xbf16>
    %139 = vector.extract_strided_slice %5 {offsets = [2, 0], sizes = [1, 2], strides = [1, 1]} : vector<4x2xbf16> to vector<1x2xbf16>
    %140 = vector.extract_strided_slice %5 {offsets = [3, 0], sizes = [1, 2], strides = [1, 1]} : vector<4x2xbf16> to vector<1x2xbf16>
    %141 = vector.extract_strided_slice %7 {offsets = [1, 0], sizes = [1, 2], strides = [1, 1]} : vector<4x2xbf16> to vector<1x2xbf16>
    %142 = vector.extract_strided_slice %7 {offsets = [2, 0], sizes = [1, 2], strides = [1, 1]} : vector<4x2xbf16> to vector<1x2xbf16>
    %143 = vector.extract_strided_slice %7 {offsets = [3, 0], sizes = [1, 2], strides = [1, 1]} : vector<4x2xbf16> to vector<1x2xbf16>
    %144 = vector.extract_strided_slice %9 {offsets = [1, 0], sizes = [1, 2], strides = [1, 1]} : vector<4x2xbf16> to vector<1x2xbf16>
    %145 = vector.extract_strided_slice %9 {offsets = [2, 0], sizes = [1, 2], strides = [1, 1]} : vector<4x2xbf16> to vector<1x2xbf16>
    %146 = vector.extract_strided_slice %9 {offsets = [3, 0], sizes = [1, 2], strides = [1, 1]} : vector<4x2xbf16> to vector<1x2xbf16>
    %147 = tpu.concatenate %138, %139, %140, %141, %142, %143, %144, %145, %146 in 0 : vector<1x2xbf16>, vector<1x2xbf16>, vector<1x2xbf16>, vector<1x2xbf16>, vector<1x2xbf16>, vector<1x2xbf16>, vector<1x2xbf16>, vector<1x2xbf16>, vector<1x2xbf16> -> vector<9x2xbf16>
    %cst_25 = arith.constant dense<0.000000e+00> : vector<64x2xf32>
    %148 = tpu.matmul %11, %147, %cst_25 {dimension_numbers = #tpu.dot_dimension_numbers<[1], [0], [0], [1], [0, 0, 1, 1], [], []>} : vector<64x9xbf16>, vector<9x2xbf16>, vector<64x2xf32> -> vector<64x2xf32>
    %149 = vector.broadcast %12 : vector<64x1xf32> to vector<64x2xf32>
    %150 = arith.mulf %148, %149 : vector<64x2xf32>
    %151 = vector.broadcast %13 : vector<64x1xf32> to vector<64x2xf32>
    %152 = arith.addf %150, %151 : vector<64x2xf32>
    %cst_26 = arith.constant 0.000000e+00 : f32
    %153 = vector.broadcast %cst_26 : f32 to vector<64x2xf32>
    %154 = arith.maximumf %152, %153 : vector<64x2xf32>
    %155 = arith.maximumf %137, %154 : vector<64x2xf32>
    %156 = vector.extract_strided_slice %5 {offsets = [2, 0], sizes = [1, 2], strides = [1, 1]} : vector<4x2xbf16> to vector<1x2xbf16>
    %157 = vector.extract_strided_slice %5 {offsets = [3, 0], sizes = [1, 2], strides = [1, 1]} : vector<4x2xbf16> to vector<1x2xbf16>
    %158 = vector.extract_strided_slice %5 {offsets = [0, 0], sizes = [1, 2], strides = [1, 1]} : vector<4x2xbf16> to vector<1x2xbf16>
    %159 = vector.extract_strided_slice %158 {offsets = [0, 1], sizes = [1, 1], strides = [1, 1]} : vector<1x2xbf16> to vector<1x1xbf16>
    %160 = tpu.concatenate %159, %10 in 1 : vector<1x1xbf16>, vector<1x1xbf16> -> vector<1x2xbf16>
    %161 = vector.extract_strided_slice %7 {offsets = [2, 0], sizes = [1, 2], strides = [1, 1]} : vector<4x2xbf16> to vector<1x2xbf16>
    %162 = vector.extract_strided_slice %7 {offsets = [3, 0], sizes = [1, 2], strides = [1, 1]} : vector<4x2xbf16> to vector<1x2xbf16>
    %163 = vector.extract_strided_slice %7 {offsets = [0, 0], sizes = [1, 2], strides = [1, 1]} : vector<4x2xbf16> to vector<1x2xbf16>
    %164 = vector.extract_strided_slice %163 {offsets = [0, 1], sizes = [1, 1], strides = [1, 1]} : vector<1x2xbf16> to vector<1x1xbf16>
    %165 = tpu.concatenate %164, %10 in 1 : vector<1x1xbf16>, vector<1x1xbf16> -> vector<1x2xbf16>
    %166 = vector.extract_strided_slice %9 {offsets = [2, 0], sizes = [1, 2], strides = [1, 1]} : vector<4x2xbf16> to vector<1x2xbf16>
    %167 = vector.extract_strided_slice %9 {offsets = [3, 0], sizes = [1, 2], strides = [1, 1]} : vector<4x2xbf16> to vector<1x2xbf16>
    %168 = vector.extract_strided_slice %9 {offsets = [0, 0], sizes = [1, 2], strides = [1, 1]} : vector<4x2xbf16> to vector<1x2xbf16>
    %169 = vector.extract_strided_slice %168 {offsets = [0, 1], sizes = [1, 1], strides = [1, 1]} : vector<1x2xbf16> to vector<1x1xbf16>
    %170 = tpu.concatenate %169, %10 in 1 : vector<1x1xbf16>, vector<1x1xbf16> -> vector<1x2xbf16>
    %171 = tpu.concatenate %156, %157, %160, %161, %162, %165, %166, %167, %170 in 0 : vector<1x2xbf16>, vector<1x2xbf16>, vector<1x2xbf16>, vector<1x2xbf16>, vector<1x2xbf16>, vector<1x2xbf16>, vector<1x2xbf16>, vector<1x2xbf16>, vector<1x2xbf16> -> vector<9x2xbf16>
    %cst_27 = arith.constant dense<0.000000e+00> : vector<64x2xf32>
    %172 = tpu.matmul %11, %171, %cst_27 {dimension_numbers = #tpu.dot_dimension_numbers<[1], [0], [0], [1], [0, 0, 1, 1], [], []>} : vector<64x9xbf16>, vector<9x2xbf16>, vector<64x2xf32> -> vector<64x2xf32>
    %173 = vector.broadcast %12 : vector<64x1xf32> to vector<64x2xf32>
    %174 = arith.mulf %172, %173 : vector<64x2xf32>
    %175 = vector.broadcast %13 : vector<64x1xf32> to vector<64x2xf32>
    %176 = arith.addf %174, %175 : vector<64x2xf32>
    %cst_28 = arith.constant 0.000000e+00 : f32
    %177 = vector.broadcast %cst_28 : f32 to vector<64x2xf32>
    %178 = arith.maximumf %176, %177 : vector<64x2xf32>
    %179 = arith.maximumf %155, %178 : vector<64x2xf32>
    %cst_29 = arith.constant 0.000000e+00 : f32
    %180 = vector.broadcast %cst_29 : f32 to vector<64x1xf32>
    %181 = tpu.concatenate %180, %179 in 1 : vector<64x1xf32>, vector<64x2xf32> -> vector<64x3xf32>
    %182 = tpu.concatenate %96, %180 in 1 : vector<64x2xf32>, vector<64x1xf32> -> vector<64x3xf32>
    %c0_i32 = arith.constant 0 : i32
    %183 = arith.cmpi sgt, %arg1, %c0_i32 : i32
    %c17_i32 = arith.constant 17 : i32
    %184 = arith.cmpi slt, %arg1, %c17_i32 : i32
    %185 = arith.andi %183, %184 : i1
    %cst_30 = arith.constant 0.000000e+00 : f32
    %186 = vector.broadcast %cst_30 : f32 to vector<64x3xf32>
    %187 = arith.select %185, %181, %186 : vector<64x3xf32>
    %cst_31 = arith.constant 0.000000e+00 : f32
    %188 = vector.broadcast %cst_31 : f32 to vector<64x3xf32>
    %189 = arith.select %185, %182, %188 : vector<64x3xf32>
    %190 = arith.truncf %187 : vector<64x3xf32> to vector<64x3xbf16>
    %c0_32 = arith.constant 0 : index
    %c0_33 = arith.constant 0 : index
    %c0_34 = arith.constant 0 : index
    %c0_35 = arith.constant 0 : index
    %c0_36 = arith.constant 0 : index
    %191 = vector.load %arg7[%c0_32, %c0_33, %c0_34, %c0_35, %c0_36] : memref<1x1x2x64x3xbf16, #tpu.memory_space<vmem>>, vector<1x1x1x64x3xbf16>
    %192 = vector.shape_cast %191 : vector<1x1x1x64x3xbf16> to vector<64x3xbf16>
    %193 = vector.shape_cast %190 : vector<64x3xbf16> to vector<1x1x1x64x3xbf16>
    tpu.vector_store %arg7[%c0_32, %c0_33, %c0_34, %c0_35, %c0_36], %193 {strides = array<i32>} : memref<1x1x2x64x3xbf16, #tpu.memory_space<vmem>>, vector<1x1x1x64x3xbf16>,
    %194 = arith.truncf %189 : vector<64x3xf32> to vector<64x3xbf16>
    %c0_37 = arith.constant 0 : index
    %c0_38 = arith.constant 0 : index
    %c1 = arith.constant 1 : index
    %c0_39 = arith.constant 0 : index
    %c0_40 = arith.constant 0 : index
    %195 = vector.load %arg7[%c0_37, %c0_38, %c1, %c0_39, %c0_40] : memref<1x1x2x64x3xbf16, #tpu.memory_space<vmem>>, vector<1x1x1x64x3xbf16>
    %196 = vector.shape_cast %195 : vector<1x1x1x64x3xbf16> to vector<64x3xbf16>
    %197 = vector.shape_cast %194 : vector<64x3xbf16> to vector<1x1x1x64x3xbf16>
    tpu.vector_store %arg7[%c0_37, %c0_38, %c1, %c0_39, %c0_40], %197 {strides = array<i32>} : memref<1x1x2x64x3xbf16, #tpu.memory_space<vmem>>, vector<1x1x1x64x3xbf16>,
    return
  }
  func.func @transform_0(%arg0: i32, %arg1: i32) -> (i32, i32, i32, i32) {
    %c1_i32 = arith.constant 1 : i32
    %0 = arith.subi %arg1, %c1_i32 : i32
    %c0_i32 = arith.constant 0 : i32
    %1 = arith.maxsi %0, %c0_i32 : i32
    %c0_i32_0 = arith.constant 0 : i32
    %c0_i32_1 = arith.constant 0 : i32
    %c0_i32_2 = arith.constant 0 : i32
    return %arg0, %1, %c0_i32_0, %c0_i32_1 : i32, i32, i32, i32
  }
  func.func @transform_1(%arg0: i32, %arg1: i32) -> (i32, i32, i32, i32) {
    %c16_i32 = arith.constant 16 : i32
    %0 = arith.minsi %arg1, %c16_i32 : i32
    %c0_i32 = arith.constant 0 : i32
    %c0_i32_0 = arith.constant 0 : i32
    %c0_i32_1 = arith.constant 0 : i32
    return %arg0, %0, %c0_i32, %c0_i32_0 : i32, i32, i32, i32
  }
  func.func @transform_2(%arg0: i32, %arg1: i32) -> (i32, i32) {
    %c0_i32 = arith.constant 0 : i32
    %c0_i32_0 = arith.constant 0 : i32
    %c0_i32_1 = arith.constant 0 : i32
    return %c0_i32, %c0_i32_0 : i32, i32
  }
  func.func @transform_3(%arg0: i32, %arg1: i32) -> (i32, i32) {
    %c0_i32 = arith.constant 0 : i32
    %c0_i32_0 = arith.constant 0 : i32
    %c0_i32_1 = arith.constant 0 : i32
    return %c0_i32, %c0_i32_0 : i32, i32
  }
  func.func @transform_4(%arg0: i32, %arg1: i32) -> (i32, i32) {
    %c0_i32 = arith.constant 0 : i32
    %c0_i32_0 = arith.constant 0 : i32
    %c0_i32_1 = arith.constant 0 : i32
    return %c0_i32, %c0_i32_0 : i32, i32
  }
  func.func @transform_5(%arg0: i32, %arg1: i32) -> (i32, i32, i32, i32, i32) {
    %c0_i32 = arith.constant 0 : i32
    %c0_i32_0 = arith.constant 0 : i32
    %c0_i32_1 = arith.constant 0 : i32
    %c0_i32_2 = arith.constant 0 : i32
    return %arg0, %arg1, %c0_i32, %c0_i32_0, %c0_i32_1 : i32, i32, i32, i32, i32
  }
}

module attributes {stable_mosaic.version = 11 : i64} {
  func.func @_head_kernel(%arg0: memref<2x8x128xf32, #tpu.memory_space<vmem>>, %arg1: memref<128x128xf32, #tpu.memory_space<vmem>>, %arg2: memref<1x128xf32, #tpu.memory_space<vmem>>, %arg3: memref<128x128xf32, #tpu.memory_space<vmem>>, %arg4: memref<1x128xf32, #tpu.memory_space<vmem>>, %arg5: memref<2x128xf32, #tpu.memory_space<vmem>>) attributes {dimension_semantics = [], scalar_prefetch = 0 : i64, scratch_operands = 0 : i64, tpu.core_type = #tpu.core_type<tc>} {
    %c0 = arith.constant 0 : index
    %c0_0 = arith.constant 0 : index
    %c0_1 = arith.constant 0 : index
    %0 = vector.load %arg0[%c0, %c0_0, %c0_1] : memref<2x8x128xf32, #tpu.memory_space<vmem>>, vector<2x8x128xf32>
    %cst = arith.constant dense<0.000000e+00> : vector<2x128xf32>
    %1 = vector.multi_reduction <add>, %0, %cst [1] : vector<2x8x128xf32> to vector<2x128xf32>
    %cst_2 = arith.constant 6.250000e-02 : f32
    %2 = vector.broadcast %cst_2 : f32 to vector<2x128xf32>
    %3 = arith.mulf %1, %2 : vector<2x128xf32>
    %c0_3 = arith.constant 0 : index
    %c0_4 = arith.constant 0 : index
    %4 = vector.load %arg1[%c0_3, %c0_4] : memref<128x128xf32, #tpu.memory_space<vmem>>, vector<128x128xf32>
    %cst_5 = arith.constant dense<0.000000e+00> : vector<2x128xf32>
    %5 = tpu.matmul %3, %4, %cst_5 {dimension_numbers = #tpu.dot_dimension_numbers<[1], [0], [0], [1], [0, 0, 1, 1], [], []>} : vector<2x128xf32>, vector<128x128xf32>, vector<2x128xf32> -> vector<2x128xf32>
    %c0_6 = arith.constant 0 : index
    %c0_7 = arith.constant 0 : index
    %6 = vector.load %arg2[%c0_6, %c0_7] : memref<1x128xf32, #tpu.memory_space<vmem>>, vector<1x128xf32>
    %7 = vector.broadcast %6 : vector<1x128xf32> to vector<2x128xf32>
    %8 = arith.addf %5, %7 : vector<2x128xf32>
    %cst_8 = arith.constant 0.000000e+00 : f32
    %9 = vector.broadcast %cst_8 : f32 to vector<2x128xf32>
    %10 = arith.maximumf %8, %9 : vector<2x128xf32>
    %c0_9 = arith.constant 0 : index
    %c0_10 = arith.constant 0 : index
    %11 = vector.load %arg3[%c0_9, %c0_10] : memref<128x128xf32, #tpu.memory_space<vmem>>, vector<128x128xf32>
    %cst_11 = arith.constant dense<0.000000e+00> : vector<2x128xf32>
    %12 = tpu.matmul %10, %11, %cst_11 {dimension_numbers = #tpu.dot_dimension_numbers<[1], [0], [0], [1], [0, 0, 1, 1], [], []>} : vector<2x128xf32>, vector<128x128xf32>, vector<2x128xf32> -> vector<2x128xf32>
    %c0_12 = arith.constant 0 : index
    %c0_13 = arith.constant 0 : index
    %13 = vector.load %arg4[%c0_12, %c0_13] : memref<1x128xf32, #tpu.memory_space<vmem>>, vector<1x128xf32>
    %14 = vector.broadcast %13 : vector<1x128xf32> to vector<2x128xf32>
    %15 = arith.addf %12, %14 : vector<2x128xf32>
    %c0_14 = arith.constant 0 : index
    %c0_15 = arith.constant 0 : index
    %16 = vector.load %arg5[%c0_14, %c0_15] : memref<2x128xf32, #tpu.memory_space<vmem>>, vector<2x128xf32>
    tpu.vector_store %arg5[%c0_14, %c0_15], %15 {strides = array<i32>} : memref<2x128xf32, #tpu.memory_space<vmem>>, vector<2x128xf32>,
    return
  }
}

</mosaic_0001>

<llo_original>
// kernel: forward.4
$region0: #{forward.4}
  #allocation0 [shape = 'u32[]', space=smem, size = 0x4, offset = 0x4, fixed_abs, tag = 'smem constant byte address 0x4 - core index']
  #allocation1 [shape = 'u32[72,128]{1,0:T(1,128)}', space=vmem, size = 0x9000, scoped, tag = 'internal scratch']
  %s0 = inlined_call_operand.vmem [shape: bf16[2,8,12,3], index: 0, kind: input, shape index: {}]
  %s1 = inlined_call_operand.hbm [shape: bf16[32,60], index: 1, kind: input, shape index: {}]
  %s2 = inlined_call_operand.vmem [shape: f32[32,1], index: 2, kind: input, shape index: {}]
  %s3 = inlined_call_operand.vmem [shape: f32[32,1], index: 3, kind: input, shape index: {}]
  %s4 = inlined_call_operand.vmem [shape: bf16[2,34,4,2], index: 4, kind: output, shape index: {}]
  %s5 = sld [smem:[#allocation0]]
  $region53: #{forward.4} parent=0
    _
  %s7 = ssub.s32 1, %s5
  %s8 = scalar_select 0, %s7, %s5
  $region1: #{forward.4} parent=0
    #allocation2 [shape = 'u8[8192]{0}', space=vmem, size = 0x2000, scoped, tag = 'input window, operand 1, single buffered']
    #allocation3 [shape = 's32[2]{0}', space=sflag, size = 0x8, scoped, tag = 'scoped memory for forward.4']
    %9 = vsyncpa [#allocation3], 0
    loop: start=0, step=1, limit=4
    $region2: #{forward.4} parent=1 // loop_pre_header
      _
    $region3: #{forward.4} parent=1 // loop_header
      %s11 = sphi 0, %s15
      %p12 = scmp.ge.s32.totalorder %s11, 4
      %s21 = sphi 0, %s23
      %s24 = sphi 0, %s21
      %s25 = sphi 0, %s24
      %s41 = sphi 0, %s25
      %s45 = sphi 0, %s45
      %s47 = sphi 0, %s45
      %s48 = sphi 0, %s47
      %s62 = sphi 0, %s48
      %s66 = sphi 0, %s66
      %s68 = sphi 0, %s66
      %s69 = sphi 0, %s68
      %s83 = sphi 0, %s69
      %s87 = sphi 0, %s87
      %s89 = sphi 0, %s87
      %s90 = sphi 0, %s89
      %s104 = sphi 0, %s90
      %s110 = sphi 0, %s112
      %s113 = sphi 0, %s110
      %s114 = sphi 0, %s113
      %s130 = sphi 0, %s114
    $region4: #{forward.4} parent=1 // loop_header_branch
      %14 = sbr.rel (%p12) target = $region8
    $region5: #{forward.4} parent=1 // loop_body
      %s16 = ssub.s32 %s11, 1
      %s17 = ssub.s32 %s11, 2
      %s18 = sadd.s32 %s11, 1
      %s19 = ssub.s32 %s11, %s18
      %p20 = scmp.eq.s32.totalorder %s19, 0
      %s22 = sadd.s32 %s21, 1
      %s23 = scalar_select %p20, %s21, %s22
      %p26 = pneg %p20
      %p27 = scmp.eq.s32.totalorder %s11, 1
      %p28 = por %p26, %p27
      %p29 = scmp.ne.s32.totalorder %s21, %s24
      %p30 = scmp.eq.s32.totalorder %s11, 0
      %p31 = por %p29, %p30
      %p32 = scmp.ne.s32.totalorder %s21, %s24
      %p33 = scmp.eq.s32.totalorder %s16, 1
      %p34 = por %p32, %p33
      %p35 = scmp.ne.s32.totalorder %s24, %s25
      %p36 = scmp.eq.s32.totalorder %s16, 0
      %p37 = por %p35, %p36
      %p38 = scmp.ne.s32.totalorder %s24, %s25
      %p39 = scmp.eq.s32.totalorder %s17, 1
      %p40 = por %p38, %p39
      %p42 = scmp.ne.s32.totalorder %s25, %s41
      %p43 = scmp.eq.s32.totalorder %s17, 0
      %p44 = por %p42, %p43
      %s46 = sadd.s32 %s45, 1
      %p49 = scmp.eq.s32.totalorder %s11, 1
      %p50 = scmp.ne.s32.totalorder %s45, %s47
      %p51 = scmp.eq.s32.totalorder %s11, 0
      %p52 = por %p50, %p51
      %p53 = scmp.ne.s32.totalorder %s45, %s47
      %p54 = scmp.eq.s32.totalorder %s16, 1
      %p55 = por %p53, %p54
      %p56 = scmp.ne.s32.totalorder %s47, %s48
      %p57 = scmp.eq.s32.totalorder %s16, 0
      %p58 = por %p56, %p57
      %p59 = scmp.ne.s32.totalorder %s47, %s48
      %p60 = scmp.eq.s32.totalorder %s17, 1
      %p61 = por %p59, %p60
      %p63 = scmp.ne.s32.totalorder %s48, %s62
      %p64 = scmp.eq.s32.totalorder %s17, 0
      %p65 = por %p63, %p64
      %s67 = sadd.s32 %s66, 1
      %p70 = scmp.eq.s32.totalorder %s11, 1
      %p71 = scmp.ne.s32.totalorder %s66, %s68
      %p72 = scmp.eq.s32.totalorder %s11, 0
      %p73 = por %p71, %p72
      %p74 = scmp.ne.s32.totalorder %s66, %s68
      %p75 = scmp.eq.s32.totalorder %s16, 1
      %p76 = por %p74, %p75
      %p77 = scmp.ne.s32.totalorder %s68, %s69
      %p78 = scmp.eq.s32.totalorder %s16, 0
      %p79 = por %p77, %p78
      %p80 = scmp.ne.s32.totalorder %s68, %s69
      %p81 = scmp.eq.s32.totalorder %s17, 1
      %p82 = por %p80, %p81
      %p84 = scmp.ne.s32.totalorder %s69, %s83
      %p85 = scmp.eq.s32.totalorder %s17, 0
      %p86 = por %p84, %p85
      %s88 = sadd.s32 %s87, 1
      %p91 = scmp.eq.s32.totalorder %s11, 1
      %p92 = scmp.ne.s32.totalorder %s87, %s89
      %p93 = scmp.eq.s32.totalorder %s11, 0
      %p94 = por %p92, %p93
      %p95 = scmp.ne.s32.totalorder %s87, %s89
      %p96 = scmp.eq.s32.totalorder %s16, 1
      %p97 = por %p95, %p96
      %p98 = scmp.ne.s32.totalorder %s89, %s90
      %p99 = scmp.eq.s32.totalorder %s16, 0
      %p100 = por %p98, %p99
      %p101 = scmp.ne.s32.totalorder %s89, %s90
      %p102 = scmp.eq.s32.totalorder %s17, 1
      %p103 = por %p101, %p102
      %p105 = scmp.ne.s32.totalorder %s90, %s104
      %p106 = scmp.eq.s32.totalorder %s17, 0
      %p107 = por %p105, %p106
      %s108 = ssub.s32 %s11, %s18
      %p109 = scmp.eq.s32.totalorder %s108, 0
      %s111 = sadd.s32 %s110, 1
      %s112 = scalar_select %p109, %s110, %s111
      %p115 = pneg %p109
      %p116 = scmp.eq.s32.totalorder %s11, 1
      %p117 = por %p115, %p116
      %p118 = scmp.ne.s32.totalorder %s110, %s113
      %p119 = scmp.eq.s32.totalorder %s11, 0
      %p120 = por %p118, %p119
      %p121 = scmp.ne.s32.totalorder %s110, %s113
      %p122 = scmp.eq.s32.totalorder %s16, 1
      %p123 = por %p121, %p122
      %p124 = scmp.ne.s32.totalorder %s113, %s114
      %p125 = scmp.eq.s32.totalorder %s16, 0
      %p126 = por %p124, %p125
      %p127 = scmp.ne.s32.totalorder %s113, %s114
      %p128 = scmp.eq.s32.totalorder %s17, 1
      %p129 = por %p127, %p128
      %p131 = scmp.ne.s32.totalorder %s114, %s130
      %p132 = scmp.eq.s32.totalorder %s17, 0
      %p133 = por %p131, %p132
      %p134 = scmp.le.s32.totalorder 1, %s11
      %p135 = scmp.lt.s32.totalorder %s11, 3
      %p136 = pnand %p134, %p135
      %p137 = pneg %p136
      // Predicated region
      $region9: #{forward.4} parent=5 // pred_check
        _
      $region10: #{forward.4} parent=5 // pred_check_branch
        %139 = sbr.rel (%p136) target = $region12
      $region11: #{forward.4} parent=5 // pred_region
        %s140 = ssub.s32 %s11, 1
        // Predicated region
        $region13: #{forward.4} parent=11 // pred_check
          %p141 = pneg %p58
        $region14: #{forward.4} parent=11 // pred_check_branch
          %143 = sbr.rel (%p141) target = $region16
        $region15: #{forward.4} parent=11 // pred_region
          %145 = vsyncadd [#allocation3], 0
          %s146 = sshll.u32 %s1, 4
          %s147 = int_to_ptr.hbm [resolvable:$true] %s146
          %s148 = sshll.u32 [#allocation2], 4
          %s149 = int_to_ptr.vmem [resolvable:$true] %s148
          %154 = dma.hbm_to_vmem [thread:$0]  %s147, 256, %s149, [#allocation3], 64, 64, 4
        $region16: #{forward.4} parent=11 // pred_fallthru
          _
        // Predicated region
        $region17: #{forward.4} parent=11 // pred_check
          %p155 = pneg %p79
        $region18: #{forward.4} parent=11 // pred_check_branch
          %157 = sbr.rel (%p155) target = $region20
        $region19: #{forward.4} parent=11 // pred_region
          _
        $region20: #{forward.4} parent=11 // pred_fallthru
          _
        // Predicated region
        $region21: #{forward.4} parent=11 // pred_check
          %p158 = pneg %p100
        $region22: #{forward.4} parent=11 // pred_check_branch
          %160 = sbr.rel (%p158) target = $region24
        $region23: #{forward.4} parent=11 // pred_region
          _
        $region24: #{forward.4} parent=11 // pred_fallthru
          _
      $region12: #{forward.4} parent=5 // pred_fallthru
        _
      %p161 = scmp.lt.s32.totalorder %s11, 2
      // Predicated region
      $region25: #{forward.4} parent=5 // pred_check
        %p162 = pneg %p161
      $region26: #{forward.4} parent=5 // pred_check_branch
        %164 = sbr.rel (%p162) target = $region28
      $region27: #{forward.4} parent=5 // pred_region
        // Predicated region
        $region29: #{forward.4} parent=27 // pred_check
          %p165 = pneg %p31
        $region30: #{forward.4} parent=27 // pred_check_branch
          %167 = sbr.rel (%p165) target = $region32
        $region31: #{forward.4} parent=27 // pred_region
          %p168 = scmp.lt.s32.totalorder %s11, 1
          %s169 = scalar_select %p168, %s11, 1
          %s170 = smul.addr %s169, 16
          %s171 = smul.addr %s170, 4
          %s172 = scalar_lea.vmem %s0, %s171
        $region32: #{forward.4} parent=27 // pred_fallthru
          _
      $region28: #{forward.4} parent=5 // pred_fallthru
        _
      %p173 = scmp.le.s32.totalorder 1, %s11
      %p174 = scmp.lt.s32.totalorder %s11, 3
      %p175 = pnand %p173, %p174
      %p176 = pneg %p175
      // Predicated region
      $region33: #{forward.4} parent=5 // pred_check
        _
      $region34: #{forward.4} parent=5 // pred_check_branch
        %178 = sbr.rel (%p175) target = $region36
      $region35: #{forward.4} parent=5 // pred_region
        %s179 = ssub.s32 %s11, 1
        // Predicated region
        $region37: #{forward.4} parent=35 // pred_check
          %p180 = pneg %p58
        $region38: #{forward.4} parent=35 // pred_check_branch
          %182 = sbr.rel (%p180) target = $region40
        $region39: #{forward.4} parent=35 // pred_region
          %184 = dma.done [#allocation3], 256
        $region40: #{forward.4} parent=35 // pred_fallthru
          _
        %p185 = scmp.lt.s32.totalorder %s16, 1
        %s186 = scalar_select %p185, %s16, 1
        %s187 = smul.addr %s186, 16
        %s188 = smul.addr %s187, 4
        %s189 = scalar_lea.vmem %s0, %s188
        %p190 = pneg %p37
        %p191 = pneg %p34
        %p192 = pneg %p58
        %p193 = pneg %p55
        %p194 = pneg %p79
        %p195 = pneg %p76
        %p196 = pneg %p100
        %p197 = pneg %p97
        %p198 = pneg %p126
        %p199 = pneg %p123
        %p200 = scmp.lt.s32.totalorder %s16, 1
        %s201 = scalar_select %p200, %s16, 1
        %s202 = smul.addr %s201, 34
        %s203 = smul.addr %s202, 2
        %s204 = scalar_lea.vmem %s4, %s203
        %p205 = scmp.lt.s32.totalorder %s16, 1
        %s206 = scalar_select %p205, %s16, 1
        %s207 = smul.addr %s206, 16
        %s208 = smul.addr %s207, 4
        %s209 = scalar_lea.vmem %s0, %s208
        %p210 = scmp.lt.s32.totalorder %s16, 1
        %s211 = scalar_select %p210, %s16, 1
        %s212 = smul.addr %s211, 34
        %s213 = smul.addr %s212, 2
        %s214 = scalar_lea.vmem %s4, %s213
        %v216 = vld [vmem:[%s209] sm:$0xf]
        %v217 = vld [vmem:[%s209 + $0x4] sm:$0x3]
        %v218 = vld [vmem:[%s209 + $0x8] sm:$0xf]
        %v219 = vld [vmem:[%s209 + $0xc] sm:$0x3]
        %v220 = vld [vmem:[%s209 + $0x10] sm:$0xf]
        %v221 = vld [vmem:[%s209 + $0x14] sm:$0x3]
        %v222 = vld [vmem:[%s209 + $0x18] sm:$0xf]
        %v223 = vld [vmem:[%s209 + $0x1c] sm:$0x3]
        %v224 = vld [vmem:[%s209 + $0x20] sm:$0xf]
        %v225 = vld [vmem:[%s209 + $0x24] sm:$0x3]
        %v226 = vld [vmem:[%s209 + $0x28] sm:$0xf]
        %v227 = vld [vmem:[%s209 + $0x2c] sm:$0x3]
        %v228 = vld [vmem:[%s209 + $0x30] sm:$0xf]
        %v229 = vld [vmem:[%s209 + $0x34] sm:$0x3]
        %v230 = vld [vmem:[%s209 + $0x38] sm:$0xf]
        %v231 = vld [vmem:[%s209 + $0x3c] sm:$0x3]
        %v232 = vld [vmem:[#allocation2] sm:$0xf]
        %v233 = vld [vmem:[#allocation2 + $0x4] sm:$0xf]
        %v234 = vld [vmem:[#allocation2 + $0x8] sm:$0xf]
        %v235 = vld [vmem:[#allocation2 + $0xc] sm:$0xf]
        %v236 = vld [vmem:[%s2] sm:$0xff]
        %v237 = vld [vmem:[%s2 + $0x8] sm:$0xff]
        %v238 = vld [vmem:[%s2 + $0x10] sm:$0xff]
        %v239 = vld [vmem:[%s2 + $0x18] sm:$0xff]
        %v240 = vld [vmem:[%s3] sm:$0xff]
        %v241 = vld [vmem:[%s3 + $0x8] sm:$0xff]
        %v242 = vld [vmem:[%s3 + $0x10] sm:$0xff]
        %v243 = vld [vmem:[%s3 + $0x18] sm:$0xff]
        %v246 = vunpack.c.l.b16 %v216
        %v247 = vunpack.c.l.b16 %v217
        %v248 = vpack.c.b16 %v247, %v246
        %v251 = vunpack.c.l.b16 %v218
        %v252 = vunpack.c.l.b16 %v219
        %v253 = vpack.c.b16 %v252, %v251
        %v254 = vrot.slane %v253, 2
        %v257 = vunpack.c.l.b16 %v220
        %v258 = vunpack.c.l.b16 %v221
        %v259 = vpack.c.b16 %v257, %v257
        %v260 = vpack.c.b16 %v258, %v258
        %v263 = vunpack.c.l.b16 %v222
        %v264 = vunpack.c.l.b16 %v223
        %v265 = vpack.c.b16 %v264, %v263
        %v266 = vrot.slane %v265, 6
        %v269 = vunpack.c.l.b16 %v224
        %v270 = vunpack.c.l.b16 %v225
        %v271 = vpack.c.b16 %v270, %v269
        %vm272 = vcmask 1045504
        %v275 = vsel %vm272, %v248, %v254
        %vm277 = vcmask 1043456
        %v279 = vsel %vm277, %v254, %v259
        %vm281 = vcmask 1041408
        %v284 = vsel %vm281, %v260, %v266
        %v290 = vunpack.c.l.b16 %v232
        %v291 = vunpack.c.l.b16 %v233
        %v292 = vunpack.c.l.b16 %v234
        %v293 = vunpack.c.l.b16 %v235
        %v294 = vpack.c.b16 %v291, %v290
        %v295 = vpack.c.b16 %v293, %v292
        %vm296 = vcmask 490496
        %v298 = vsel %vm296, %v294, 0
        %v301 = vsel %vm296, %v295, 0
        %v304 = vsel %vm272, %v271, 0
        %306 = vmatpush.bf16.msra.mxu0 0
        %307 = vmatpush.bf16.msra.mxu0 0
        %308 = vmatpush.bf16.msra.mxu0 0
        %309 = vmatpush.bf16.msra.mxu0 0
        %310 = vmatpush.bf16.msra.mxu0 %v304
        %311 = vmatpush.bf16.msra.mxu0 %v284
        %312 = vmatpush.bf16.msra.mxu0 %v279
        %313 = vmatpush.bf16.msra.mxu0 %v275
        %314 = vmatmul.bf16.gmra.mxu0 %v298
        %v315 = vpop.f32.mrf.mxu0
        %v316 = vadd.f32 0.0, %v315
        %v317 = vpop.f32.mrf.mxu0
        %v318 = vadd.f32 0.0, %v317
        %319 = vmatmul.bf16.gmra.mxu0 %v301
        %v320 = vpop.f32.mrf.mxu0
        %v321 = vadd.f32 0.0, %v320
        %v322 = vpop.f32.mrf.mxu0
        %v323 = vadd.f32 0.0, %v322
        %324 = vdwg.mxu0
        %326 = vset.pattern.permute.xlu0 0
        %327 = vperm.xlu0 %326, %v236
        %v328 = vpop.permute.xlu0 %327
        %331 = vset.pattern.permute.xlu0 0
        %332 = vperm.xlu0 %331, %v237
        %v333 = vpop.permute.xlu0 %332
        %336 = vset.pattern.permute.xlu0 0
        %337 = vperm.xlu0 %336, %v238
        %v338 = vpop.permute.xlu0 %337
        %341 = vset.pattern.permute.xlu0 0
        %342 = vperm.xlu0 %341, %v239
        %v343 = vpop.permute.xlu0 %342
        %v345 = vmul.f32 %v316, %v328
        %v346 = vmul.f32 %v318, %v333
        %v347 = vmul.f32 %v321, %v338
        %v348 = vmul.f32 %v323, %v343
        %350 = vset.pattern.permute.xlu0 0
        %351 = vperm.xlu0 %350, %v240
        %v352 = vpop.permute.xlu0 %351
        %355 = vset.pattern.permute.xlu0 0
        %356 = vperm.xlu0 %355, %v241
        %v357 = vpop.permute.xlu0 %356
        %360 = vset.pattern.permute.xlu0 0
        %361 = vperm.xlu0 %360, %v242
        %v362 = vpop.permute.xlu0 %361
        %365 = vset.pattern.permute.xlu0 0
        %366 = vperm.xlu0 %365, %v243
        %v367 = vpop.permute.xlu0 %366
        %v369 = vadd.f32 %v345, %v352
        %v370 = vadd.f32 %v346, %v357
        %v371 = vadd.f32 %v347, %v362
        %v372 = vadd.f32 %v348, %v367
        %v373 = vmax.f32 %v369, 0.0
        %v374 = vmax.f32 %v370, 0.0
        %v375 = vmax.f32 %v371, 0.0
        %v376 = vmax.f32 %v372, 0.0
        %v377 = vpack.c.b16 %v258, %v257
        %v378 = vrot.slane %v377, 2
        %v379 = vpack.c.b16 %v263, %v263
        %v380 = vpack.c.b16 %v264, %v264
        %v381 = vrot.slane %v271, 6
        %v384 = vunpack.c.l.b16 %v226
        %v385 = vunpack.c.l.b16 %v227
        %v386 = vpack.c.b16 %v385, %v384
        %v389 = vsel %vm272, %v253, %v378
        %v392 = vsel %vm277, %v378, %v379
        %v396 = vsel %vm281, %v380, %v381
        %v399 = vsel %vm272, %v386, 0
        %401 = vmatpush.bf16.msra.mxu0 0
        %402 = vmatpush.bf16.msra.mxu0 0
        %403 = vmatpush.bf16.msra.mxu0 0
        %404 = vmatpush.bf16.msra.mxu0 0
        %405 = vmatpush.bf16.msra.mxu0 %v399
        %406 = vmatpush.bf16.msra.mxu0 %v396
        %407 = vmatpush.bf16.msra.mxu0 %v392
        %408 = vmatpush.bf16.msra.mxu0 %v389
        %409 = vmatmul.bf16.gmra.mxu0 %v298
        %v410 = vpop.f32.mrf.mxu0
        %v411 = vadd.f32 0.0, %v410
        %v412 = vpop.f32.mrf.mxu0
        %v413 = vadd.f32 0.0, %v412
        %414 = vmatmul.bf16.gmra.mxu0 %v301
        %v415 = vpop.f32.mrf.mxu0
        %v416 = vadd.f32 0.0, %v415
        %v417 = vpop.f32.mrf.mxu0
        %v418 = vadd.f32 0.0, %v417
        %419 = vdwg.mxu0
        %v420 = vmul.f32 %v411, %v328
        %v421 = vmul.f32 %v413, %v333
        %v422 = vmul.f32 %v416, %v338
        %v423 = vmul.f32 %v418, %v343
        %v424 = vadd.f32 %v420, %v352
        %v425 = vadd.f32 %v421, %v357
        %v426 = vadd.f32 %v422, %v362
        %v427 = vadd.f32 %v423, %v367
        %v428 = vmax.f32 %v424, 0.0
        %v429 = vmax.f32 %v425, 0.0
        %v430 = vmax.f32 %v426, 0.0
        %v431 = vmax.f32 %v427, 0.0
        %v432 = vrot.slane %v265, 2
        %v433 = vpack.c.b16 %v269, %v269
        %v434 = vpack.c.b16 %v270, %v270
        %v435 = vrot.slane %v386, 6
        %v438 = vunpack.c.l.b16 %v228
        %v439 = vunpack.c.l.b16 %v229
        %v440 = vpack.c.b16 %v439, %v438
        %v443 = vsel %vm272, %v377, %v432
        %v446 = vsel %vm277, %v432, %v433
        %v450 = vsel %vm281, %v434, %v435
        %v453 = vsel %vm272, %v440, 0
        %455 = vmatpush.bf16.msra.mxu0 0
        %456 = vmatpush.bf16.msra.mxu0 0
        %457 = vmatpush.bf16.msra.mxu0 0
        %458 = vmatpush.bf16.msra.mxu0 0
        %459 = vmatpush.bf16.msra.mxu0 %v453
        %460 = vmatpush.bf16.msra.mxu0 %v450
        %461 = vmatpush.bf16.msra.mxu0 %v446
        %462 = vmatpush.bf16.msra.mxu0 %v443
        %463 = vmatmul.bf16.gmra.mxu0 %v298
        %v464 = vpop.f32.mrf.mxu0
        %v465 = vadd.f32 0.0, %v464
        %v466 = vpop.f32.mrf.mxu0
        %v467 = vadd.f32 0.0, %v466
        %468 = vmatmul.bf16.gmra.mxu0 %v301
        %v469 = vpop.f32.mrf.mxu0
        %v470 = vadd.f32 0.0, %v469
        %v471 = vpop.f32.mrf.mxu0
        %v472 = vadd.f32 0.0, %v471
        %473 = vdwg.mxu0
        %v474 = vmul.f32 %v465, %v328
        %v475 = vmul.f32 %v467, %v333
        %v476 = vmul.f32 %v470, %v338
        %v477 = vmul.f32 %v472, %v343
        %v478 = vadd.f32 %v474, %v352
        %v479 = vadd.f32 %v475, %v357
        %v480 = vadd.f32 %v476, %v362
        %v481 = vadd.f32 %v477, %v367
        %v482 = vmax.f32 %v478, 0.0
        %v483 = vmax.f32 %v479, 0.0
        %v484 = vmax.f32 %v480, 0.0
        %v485 = vmax.f32 %v481, 0.0
        %v486 = vrot.slane %v271, 2
        %v487 = vpack.c.b16 %v384, %v384
        %v488 = vpack.c.b16 %v385, %v385
        %v489 = vrot.slane %v440, 6
        %v492 = vunpack.c.l.b16 %v230
        %v493 = vunpack.c.l.b16 %v231
        %v494 = vpack.c.b16 %v493, %v492
        %v497 = vsel %vm272, %v265, %v486
        %v500 = vsel %vm277, %v486, %v487
        %v504 = vsel %vm281, %v488, %v489
        %v507 = vsel %vm272, %v494, 0
        %509 = vmatpush.bf16.msra.mxu0 0
        %510 = vmatpush.bf16.msra.mxu0 0
        %511 = vmatpush.bf16.msra.mxu0 0
        %512 = vmatpush.bf16.msra.mxu0 0
        %513 = vmatpush.bf16.msra.mxu0 %v507
        %514 = vmatpush.bf16.msra.mxu0 %v504
        %515 = vmatpush.bf16.msra.mxu0 %v500
        %516 = vmatpush.bf16.msra.mxu0 %v497
        %517 = vmatmul.bf16.gmra.mxu0 %v298
        %v518 = vpop.f32.mrf.mxu0
        %v519 = vadd.f32 0.0, %v518
        %v520 = vpop.f32.mrf.mxu0
        %v521 = vadd.f32 0.0, %v520
        %522 = vmatmul.bf16.gmra.mxu0 %v301
        %v523 = vpop.f32.mrf.mxu0
        %v524 = vadd.f32 0.0, %v523
        %v525 = vpop.f32.mrf.mxu0
        %v526 = vadd.f32 0.0, %v525
        %527 = vdwg.mxu0
        %v528 = vmul.f32 %v519, %v328
        %v529 = vmul.f32 %v521, %v333
        %v530 = vmul.f32 %v524, %v338
        %v531 = vmul.f32 %v526, %v343
        %v532 = vadd.f32 %v528, %v352
        %v533 = vadd.f32 %v529, %v357
        %v534 = vadd.f32 %v530, %v362
        %v535 = vadd.f32 %v531, %v367
        %v536 = vmax.f32 %v532, 0.0
        %v537 = vmax.f32 %v533, 0.0
        %v538 = vmax.f32 %v534, 0.0
        %v539 = vmax.f32 %v535, 0.0
        %v540 = vrot.slane %v386, 2
        %v541 = vpack.c.b16 %v438, %v438
        %v542 = vpack.c.b16 %v439, %v439
        %v543 = vrot.slane %v494, 6
        %544 = vrot.lane.b32.xlu0 %v248, 127
        %v545 = vpop.permute.xlu0 %544
        %v547 = vsel %vm272, %v271, %v540
        %v550 = vsel %vm277, %v540, %v541
        %v554 = vsel %vm281, %v542, %v543
        %v557 = vsel %vm272, %v545, 0
        %559 = vmatpush.bf16.msra.mxu0 0
        %560 = vmatpush.bf16.msra.mxu0 0
        %561 = vmatpush.bf16.msra.mxu0 0
        %562 = vmatpush.bf16.msra.mxu0 0
        %563 = vmatpush.bf16.msra.mxu0 %v557
        %564 = vmatpush.bf16.msra.mxu0 %v554
        %565 = vmatpush.bf16.msra.mxu0 %v550
        %566 = vmatpush.bf16.msra.mxu0 %v547
        %567 = vmatmul.bf16.gmra.mxu0 %v298
        %v568 = vpop.f32.mrf.mxu0
        %v569 = vadd.f32 0.0, %v568
        %v570 = vpop.f32.mrf.mxu0
        %v571 = vadd.f32 0.0, %v570
        %572 = vmatmul.bf16.gmra.mxu0 %v301
        %v573 = vpop.f32.mrf.mxu0
        %v574 = vadd.f32 0.0, %v573
        %v575 = vpop.f32.mrf.mxu0
        %v576 = vadd.f32 0.0, %v575
        %577 = vdwg.mxu0
        %v578 = vmul.f32 %v569, %v328
        %v579 = vmul.f32 %v571, %v333
        %v580 = vmul.f32 %v574, %v338
        %v581 = vmul.f32 %v576, %v343
        %v582 = vadd.f32 %v578, %v352
        %v583 = vadd.f32 %v579, %v357
        %v584 = vadd.f32 %v580, %v362
        %v585 = vadd.f32 %v581, %v367
        %v586 = vmax.f32 %v582, 0.0
        %v587 = vmax.f32 %v583, 0.0
        %v588 = vmax.f32 %v584, 0.0
        %v589 = vmax.f32 %v585, 0.0
        %v590 = vrot.slane %v440, 2
        %v591 = vpack.c.b16 %v492, %v492
        %v592 = vpack.c.b16 %v493, %v493
        %v593 = vrot.slane %v248, 6
        %594 = vrot.lane.b32.xlu0 %v593, 127
        %v595 = vpop.permute.xlu0 %594
        %596 = vrot.lane.b32.xlu0 %v253, 127
        %v597 = vpop.permute.xlu0 %596
        %v599 = vsel %vm272, %v386, %v590
        %v602 = vsel %vm277, %v590, %v591
        %v606 = vsel %vm281, %v592, %v595
        %v609 = vsel %vm272, %v597, 0
        %611 = vmatpush.bf16.msra.mxu0 0
        %612 = vmatpush.bf16.msra.mxu0 0
        %613 = vmatpush.bf16.msra.mxu0 0
        %614 = vmatpush.bf16.msra.mxu0 0
        %615 = vmatpush.bf16.msra.mxu0 %v609
        %616 = vmatpush.bf16.msra.mxu0 %v606
        %617 = vmatpush.bf16.msra.mxu0 %v602
        %618 = vmatpush.bf16.msra.mxu0 %v599
        %619 = vmatmul.bf16.gmra.mxu0 %v298
        %v620 = vpop.f32.mrf.mxu0
        %v621 = vadd.f32 0.0, %v620
        %v622 = vpop.f32.mrf.mxu0
        %v623 = vadd.f32 0.0, %v622
        %624 = vmatmul.bf16.gmra.mxu0 %v301
        %v625 = vpop.f32.mrf.mxu0
        %v626 = vadd.f32 0.0, %v625
        %v627 = vpop.f32.mrf.mxu0
        %v628 = vadd.f32 0.0, %v627
        %629 = vdwg.mxu0
        %v630 = vmul.f32 %v621, %v328
        %v631 = vmul.f32 %v623, %v333
        %v632 = vmul.f32 %v626, %v338
        %v633 = vmul.f32 %v628, %v343
        %v634 = vadd.f32 %v630, %v352
        %v635 = vadd.f32 %v631, %v357
        %v636 = vadd.f32 %v632, %v362
        %v637 = vadd.f32 %v633, %v367
        %v638 = vmax.f32 %v634, 0.0
        %v639 = vmax.f32 %v635, 0.0
        %v640 = vmax.f32 %v636, 0.0
        %v641 = vmax.f32 %v637, 0.0
        %v642 = vrot.slane %v494, 2
        %v643 = vpack.c.b16 %v246, %v246
        %v644 = vpack.c.b16 %v247, %v247
        %645 = vrot.lane.b32.xlu0 %v643, 127
        %v646 = vpop.permute.xlu0 %645
        %647 = vrot.lane.b32.xlu0 %v644, 127
        %v648 = vpop.permute.xlu0 %647
        %v649 = vrot.slane %v253, 6
        %650 = vrot.lane.b32.xlu0 %v649, 127
        %v651 = vpop.permute.xlu0 %650
        %652 = vrot.lane.b32.xlu0 %v377, 127
        %v653 = vpop.permute.xlu0 %652
        %v655 = vsel %vm272, %v440, %v642
        %v658 = vsel %vm277, %v642, %v646
        %v662 = vsel %vm281, %v648, %v651
        %v665 = vsel %vm272, %v653, 0
        %667 = vmatpush.bf16.msra.mxu0 0
        %668 = vmatpush.bf16.msra.mxu0 0
        %669 = vmatpush.bf16.msra.mxu0 0
        %670 = vmatpush.bf16.msra.mxu0 0
        %671 = vmatpush.bf16.msra.mxu0 %v665
        %672 = vmatpush.bf16.msra.mxu0 %v662
        %673 = vmatpush.bf16.msra.mxu0 %v658
        %674 = vmatpush.bf16.msra.mxu0 %v655
        %675 = vmatmul.bf16.gmra.mxu0 %v298
        %v676 = vpop.f32.mrf.mxu0
        %v677 = vadd.f32 0.0, %v676
        %v678 = vpop.f32.mrf.mxu0
        %v679 = vadd.f32 0.0, %v678
        %680 = vmatmul.bf16.gmra.mxu0 %v301
        %v681 = vpop.f32.mrf.mxu0
        %v682 = vadd.f32 0.0, %v681
        %v683 = vpop.f32.mrf.mxu0
        %v684 = vadd.f32 0.0, %v683
        %685 = vdwg.mxu0
        %v686 = vmul.f32 %v677, %v328
        %v687 = vmul.f32 %v679, %v333
        %v688 = vmul.f32 %v682, %v338
        %v689 = vmul.f32 %v684, %v343
        %v690 = vadd.f32 %v686, %v352
        %v691 = vadd.f32 %v687, %v357
        %v692 = vadd.f32 %v688, %v362
        %v693 = vadd.f32 %v689, %v367
        %v694 = vmax.f32 %v690, 0.0
        %v695 = vmax.f32 %v691, 0.0
        %v696 = vmax.f32 %v692, 0.0
        %v697 = vmax.f32 %v693, 0.0
        %v698 = vrot.slane %v248, 2
        %699 = vrot.lane.b32.xlu0 %v698, 127
        %v700 = vpop.permute.xlu0 %699
        %v701 = vpack.c.b16 %v251, %v251
        %v702 = vpack.c.b16 %v252, %v252
        %703 = vrot.lane.b32.xlu0 %v701, 127
        %v704 = vpop.permute.xlu0 %703
        %705 = vrot.lane.b32.xlu0 %v702, 127
        %v706 = vpop.permute.xlu0 %705
        %v707 = vrot.slane %v377, 6
        %708 = vrot.lane.b32.xlu0 %v707, 127
        %v709 = vpop.permute.xlu0 %708
        %710 = vrot.lane.b32.xlu0 %v265, 127
        %v711 = vpop.permute.xlu0 %710
        %v713 = vsel %vm272, %v494, %v700
        %v716 = vsel %vm277, %v700, %v704
        %v720 = vsel %vm281, %v706, %v709
        %v723 = vsel %vm272, %v711, 0
        %725 = vmatpush.bf16.msra.mxu0 0
        %726 = vmatpush.bf16.msra.mxu0 0
        %727 = vmatpush.bf16.msra.mxu0 0
        %728 = vmatpush.bf16.msra.mxu0 0
        %729 = vmatpush.bf16.msra.mxu0 %v723
        %730 = vmatpush.bf16.msra.mxu0 %v720
        %731 = vmatpush.bf16.msra.mxu0 %v716
        %732 = vmatpush.bf16.msra.mxu0 %v713
        %733 = vmatmul.bf16.gmra.mxu0 %v298
        %v734 = vpop.f32.mrf.mxu0
        %v735 = vadd.f32 0.0, %v734
        %v736 = vpop.f32.mrf.mxu0
        %v737 = vadd.f32 0.0, %v736
        %738 = vmatmul.bf16.gmra.mxu0 %v301
        %v739 = vpop.f32.mrf.mxu0
        %v740 = vadd.f32 0.0, %v739
        %v741 = vpop.f32.mrf.mxu0
        %v742 = vadd.f32 0.0, %v741
        %743 = vdwg.mxu0
        %v744 = vmul.f32 %v735, %v328
        %v745 = vmul.f32 %v737, %v333
        %v746 = vmul.f32 %v740, %v338
        %v747 = vmul.f32 %v742, %v343
        %v748 = vadd.f32 %v744, %v352
        %v749 = vadd.f32 %v745, %v357
        %v750 = vadd.f32 %v746, %v362
        %v751 = vadd.f32 %v747, %v367
        %v752 = vmax.f32 %v748, 0.0
        %v753 = vmax.f32 %v749, 0.0
        %v754 = vmax.f32 %v750, 0.0
        %v755 = vmax.f32 %v751, 0.0
        %v756 = vmax.f32 %v373, %v428
        %v757 = vmax.f32 %v374, %v429
        %v758 = vmax.f32 %v375, %v430
        %v759 = vmax.f32 %v376, %v431
        %v760 = vmax.f32 %v482, %v536
        %v761 = vmax.f32 %v483, %v537
        %v762 = vmax.f32 %v484, %v538
        %v763 = vmax.f32 %v485, %v539
        %v764 = vmax.f32 %v586, %v638
        %v765 = vmax.f32 %v587, %v639
        %v766 = vmax.f32 %v588, %v640
        %v767 = vmax.f32 %v589, %v641
        %v768 = vmax.f32 %v694, %v752
        %v769 = vmax.f32 %v695, %v753
        %v770 = vmax.f32 %v696, %v754
        %v771 = vmax.f32 %v697, %v755
        %v776 = vrot.slane %v756, 1
        %v777 = vrot.slane %v756, 2
        %v778 = vrot.slane %v756, 3
        %v779 = vrot.slane %v756, 4
        %v780 = vrot.slane %v756, 5
        %v781 = vrot.slane %v756, 6
        %v782 = vrot.slane %v756, 7
        %v783 = vrot.slane %v757, 1
        %v784 = vrot.slane %v757, 2
        %v785 = vrot.slane %v757, 3
        %v786 = vrot.slane %v757, 4
        %v787 = vrot.slane %v757, 5
        %v788 = vrot.slane %v757, 6
        %v789 = vrot.slane %v757, 7
        %v790 = vrot.slane %v758, 1
        %v791 = vrot.slane %v758, 2
        %v792 = vrot.slane %v758, 3
        %v793 = vrot.slane %v758, 4
        %v794 = vrot.slane %v758, 5
        %v795 = vrot.slane %v758, 6
        %v796 = vrot.slane %v758, 7
        %v797 = vrot.slane %v759, 1
        %v798 = vrot.slane %v759, 2
        %v799 = vrot.slane %v759, 3
        %v800 = vrot.slane %v759, 4
        %v801 = vrot.slane %v759, 5
        %v802 = vrot.slane %v759, 6
        %v803 = vrot.slane %v759, 7
        %v836 = vrot.slane %v760, 1
        %v837 = vrot.slane %v760, 2
        %v838 = vrot.slane %v760, 3
        %v839 = vrot.slane %v760, 4
        %v840 = vrot.slane %v760, 5
        %v841 = vrot.slane %v760, 6
        %v842 = vrot.slane %v760, 7
        %v843 = vrot.slane %v761, 1
        %v844 = vrot.slane %v761, 2
        %v845 = vrot.slane %v761, 3
        %v846 = vrot.slane %v761, 4
        %v847 = vrot.slane %v761, 5
        %v848 = vrot.slane %v761, 6
        %v849 = vrot.slane %v761, 7
        %v850 = vrot.slane %v762, 1
        %v851 = vrot.slane %v762, 2
        %v852 = vrot.slane %v762, 3
        %v853 = vrot.slane %v762, 4
        %v854 = vrot.slane %v762, 5
        %v855 = vrot.slane %v762, 6
        %v856 = vrot.slane %v762, 7
        %v857 = vrot.slane %v763, 1
        %v858 = vrot.slane %v763, 2
        %v859 = vrot.slane %v763, 3
        %v860 = vrot.slane %v763, 4
        %v861 = vrot.slane %v763, 5
        %v862 = vrot.slane %v763, 6
        %v863 = vrot.slane %v763, 7
        %v868 = vrot.slane %v764, 1
        %v869 = vrot.slane %v764, 2
        %v870 = vrot.slane %v764, 3
        %v871 = vrot.slane %v764, 4
        %v872 = vrot.slane %v764, 5
        %v873 = vrot.slane %v764, 6
        %v874 = vrot.slane %v764, 7
        %v875 = vrot.slane %v765, 1
        %v876 = vrot.slane %v765, 2
        %v877 = vrot.slane %v765, 3
        %v878 = vrot.slane %v765, 4
        %v879 = vrot.slane %v765, 5
        %v880 = vrot.slane %v765, 6
        %v881 = vrot.slane %v765, 7
        %v882 = vrot.slane %v766, 1
        %v883 = vrot.slane %v766, 2
        %v884 = vrot.slane %v766, 3
        %v885 = vrot.slane %v766, 4
        %v886 = vrot.slane %v766, 5
        %v887 = vrot.slane %v766, 6
        %v888 = vrot.slane %v766, 7
        %v889 = vrot.slane %v767, 1
        %v890 = vrot.slane %v767, 2
        %v891 = vrot.slane %v767, 3
        %v892 = vrot.slane %v767, 4
        %v893 = vrot.slane %v767, 5
        %v894 = vrot.slane %v767, 6
        %v895 = vrot.slane %v767, 7
        %v900 = vrot.slane %v768, 1
        %v901 = vrot.slane %v768, 2
        %v902 = vrot.slane %v768, 3
        %v903 = vrot.slane %v768, 4
        %v904 = vrot.slane %v768, 5
        %v905 = vrot.slane %v768, 6
        %v906 = vrot.slane %v768, 7
        %v907 = vrot.slane %v769, 1
        %v908 = vrot.slane %v769, 2
        %v909 = vrot.slane %v769, 3
        %v910 = vrot.slane %v769, 4
        %v911 = vrot.slane %v769, 5
        %v912 = vrot.slane %v769, 6
        %v913 = vrot.slane %v769, 7
        %v914 = vrot.slane %v770, 1
        %v915 = vrot.slane %v770, 2
        %v916 = vrot.slane %v770, 3
        %v917 = vrot.slane %v770, 4
        %v918 = vrot.slane %v770, 5
        %v919 = vrot.slane %v770, 6
        %v920 = vrot.slane %v770, 7
        %v921 = vrot.slane %v771, 1
        %v922 = vrot.slane %v771, 2
        %v923 = vrot.slane %v771, 3
        %v924 = vrot.slane %v771, 4
        %v925 = vrot.slane %v771, 5
        %v926 = vrot.slane %v771, 6
        %v927 = vrot.slane %v771, 7
        %v928 = vperm.slane %v760, 0
        %v929 = vperm.slane %v836, 0
        %v930 = vperm.slane %v837, 0
        %v931 = vperm.slane %v838, 0
        %v932 = vperm.slane %v839, 0
        %v933 = vperm.slane %v840, 0
        %v934 = vperm.slane %v841, 0
        %v935 = vperm.slane %v842, 0
        %v936 = vperm.slane %v761, 0
        %v937 = vperm.slane %v843, 0
        %v938 = vperm.slane %v844, 0
        %v939 = vperm.slane %v845, 0
        %v940 = vperm.slane %v846, 0
        %v941 = vperm.slane %v847, 0
        %v942 = vperm.slane %v848, 0
        %v943 = vperm.slane %v849, 0
        %v944 = vperm.slane %v762, 0
        %v945 = vperm.slane %v850, 0
        %v946 = vperm.slane %v851, 0
        %v947 = vperm.slane %v852, 0
        %v948 = vperm.slane %v853, 0
        %v949 = vperm.slane %v854, 0
        %v950 = vperm.slane %v855, 0
        %v951 = vperm.slane %v856, 0
        %v952 = vperm.slane %v763, 0
        %v953 = vperm.slane %v857, 0
        %v954 = vperm.slane %v858, 0
        %v955 = vperm.slane %v859, 0
        %v956 = vperm.slane %v860, 0
        %v957 = vperm.slane %v861, 0
        %v958 = vperm.slane %v862, 0
        %v959 = vperm.slane %v863, 0
        %v992 = vperm.slane %v764, 0
        %v993 = vperm.slane %v868, 0
        %v994 = vperm.slane %v869, 0
        %v995 = vperm.slane %v870, 0
        %v996 = vperm.slane %v871, 0
        %v997 = vperm.slane %v872, 0
        %v998 = vperm.slane %v873, 0
        %v999 = vperm.slane %v874, 0
        %v1000 = vperm.slane %v765, 0
        %v1001 = vperm.slane %v875, 0
        %v1002 = vperm.slane %v876, 0
        %v1003 = vperm.slane %v877, 0
        %v1004 = vperm.slane %v878, 0
        %v1005 = vperm.slane %v879, 0
        %v1006 = vperm.slane %v880, 0
        %v1007 = vperm.slane %v881, 0
        %v1008 = vperm.slane %v766, 0
        %v1009 = vperm.slane %v882, 0
        %v1010 = vperm.slane %v883, 0
        %v1011 = vperm.slane %v884, 0
        %v1012 = vperm.slane %v885, 0
        %v1013 = vperm.slane %v886, 0
        %v1014 = vperm.slane %v887, 0
        %v1015 = vperm.slane %v888, 0
        %v1016 = vperm.slane %v767, 0
        %v1017 = vperm.slane %v889, 0
        %v1018 = vperm.slane %v890, 0
        %v1019 = vperm.slane %v891, 0
        %v1020 = vperm.slane %v892, 0
        %v1021 = vperm.slane %v893, 0
        %v1022 = vperm.slane %v894, 0
        %v1023 = vperm.slane %v895, 0
        %v1056 = vperm.slane %v768, 0
        %v1057 = vperm.slane %v900, 0
        %v1058 = vperm.slane %v901, 0
        %v1059 = vperm.slane %v902, 0
        %v1060 = vperm.slane %v903, 0
        %v1061 = vperm.slane %v904, 0
        %v1062 = vperm.slane %v905, 0
        %v1063 = vperm.slane %v906, 0
        %v1064 = vperm.slane %v769, 0
        %v1065 = vperm.slane %v907, 0
        %v1066 = vperm.slane %v908, 0
        %v1067 = vperm.slane %v909, 0
        %v1068 = vperm.slane %v910, 0
        %v1069 = vperm.slane %v911, 0
        %v1070 = vperm.slane %v912, 0
        %v1071 = vperm.slane %v913, 0
        %v1072 = vperm.slane %v770, 0
        %v1073 = vperm.slane %v914, 0
        %v1074 = vperm.slane %v915, 0
        %v1075 = vperm.slane %v916, 0
        %v1076 = vperm.slane %v917, 0
        %v1077 = vperm.slane %v918, 0
        %v1078 = vperm.slane %v919, 0
        %v1079 = vperm.slane %v920, 0
        %v1080 = vperm.slane %v771, 0
        %v1081 = vperm.slane %v921, 0
        %v1082 = vperm.slane %v922, 0
        %v1083 = vperm.slane %v923, 0
        %v1084 = vperm.slane %v924, 0
        %v1085 = vperm.slane %v925, 0
        %v1086 = vperm.slane %v926, 0
        %v1087 = vperm.slane %v927, 0
        %vm1120 = vcmask 1040384
        %v1121 = vsel %vm1120, %v756, %v928
        %v1122 = vsel %vm1120, %v776, %v929
        %v1123 = vsel %vm1120, %v777, %v930
        %v1124 = vsel %vm1120, %v778, %v931
        %v1125 = vsel %vm1120, %v779, %v932
        %v1126 = vsel %vm1120, %v780, %v933
        %v1127 = vsel %vm1120, %v781, %v934
        %v1128 = vsel %vm1120, %v782, %v935
        %v1129 = vsel %vm1120, %v757, %v936
        %v1130 = vsel %vm1120, %v783, %v937
        %v1131 = vsel %vm1120, %v784, %v938
        %v1132 = vsel %vm1120, %v785, %v939
        %v1133 = vsel %vm1120, %v786, %v940
        %v1134 = vsel %vm1120, %v787, %v941
        %v1135 = vsel %vm1120, %v788, %v942
        %v1136 = vsel %vm1120, %v789, %v943
        %v1137 = vsel %vm1120, %v758, %v944
        %v1138 = vsel %vm1120, %v790, %v945
        %v1139 = vsel %vm1120, %v791, %v946
        %v1140 = vsel %vm1120, %v792, %v947
        %v1141 = vsel %vm1120, %v793, %v948
        %v1142 = vsel %vm1120, %v794, %v949
        %v1143 = vsel %vm1120, %v795, %v950
        %v1144 = vsel %vm1120, %v796, %v951
        %v1145 = vsel %vm1120, %v759, %v952
        %v1146 = vsel %vm1120, %v797, %v953
        %v1147 = vsel %vm1120, %v798, %v954
        %v1148 = vsel %vm1120, %v799, %v955
        %v1149 = vsel %vm1120, %v800, %v956
        %v1150 = vsel %vm1120, %v801, %v957
        %v1151 = vsel %vm1120, %v802, %v958
        %v1152 = vsel %vm1120, %v803, %v959
        %v1153 = vsel %vm281, %v1121, %v992
        %v1154 = vsel %vm281, %v1122, %v993
        %v1155 = vsel %vm281, %v1123, %v994
        %v1156 = vsel %vm281, %v1124, %v995
        %v1157 = vsel %vm281, %v1125, %v996
        %v1158 = vsel %vm281, %v1126, %v997
        %v1159 = vsel %vm281, %v1127, %v998
        %v1160 = vsel %vm281, %v1128, %v999
        %v1161 = vsel %vm281, %v1129, %v1000
        %v1162 = vsel %vm281, %v1130, %v1001
        %v1163 = vsel %vm281, %v1131, %v1002
        %v1164 = vsel %vm281, %v1132, %v1003
        %v1165 = vsel %vm281, %v1133, %v1004
        %v1166 = vsel %vm281, %v1134, %v1005
        %v1167 = vsel %vm281, %v1135, %v1006
        %v1168 = vsel %vm281, %v1136, %v1007
        %v1169 = vsel %vm281, %v1137, %v1008
        %v1170 = vsel %vm281, %v1138, %v1009
        %v1171 = vsel %vm281, %v1139, %v1010
        %v1172 = vsel %vm281, %v1140, %v1011
        %v1173 = vsel %vm281, %v1141, %v1012
        %v1174 = vsel %vm281, %v1142, %v1013
        %v1175 = vsel %vm281, %v1143, %v1014
        %v1176 = vsel %vm281, %v1144, %v1015
        %v1177 = vsel %vm281, %v1145, %v1016
        %v1178 = vsel %vm281, %v1146, %v1017
        %v1179 = vsel %vm281, %v1147, %v1018
        %v1180 = vsel %vm281, %v1148, %v1019
        %v1181 = vsel %vm281, %v1149, %v1020
        %v1182 = vsel %vm281, %v1150, %v1021
        %v1183 = vsel %vm281, %v1151, %v1022
        %v1184 = vsel %vm281, %v1152, %v1023
        %vm1185 = vcmask 1042432
        %v1186 = vsel %vm1185, %v1153, %v1056
        %v1187 = vsel %vm1185, %v1154, %v1057
        %v1188 = vsel %vm1185, %v1155, %v1058
        %v1189 = vsel %vm1185, %v1156, %v1059
        %v1190 = vsel %vm1185, %v1157, %v1060
        %v1191 = vsel %vm1185, %v1158, %v1061
        %v1192 = vsel %vm1185, %v1159, %v1062
        %v1193 = vsel %vm1185, %v1160, %v1063
        %v1194 = vsel %vm1185, %v1161, %v1064
        %v1195 = vsel %vm1185, %v1162, %v1065
        %v1196 = vsel %vm1185, %v1163, %v1066
        %v1197 = vsel %vm1185, %v1164, %v1067
        %v1198 = vsel %vm1185, %v1165, %v1068
        %v1199 = vsel %vm1185, %v1166, %v1069
        %v1200 = vsel %vm1185, %v1167, %v1070
        %v1201 = vsel %vm1185, %v1168, %v1071
        %v1202 = vsel %vm1185, %v1169, %v1072
        %v1203 = vsel %vm1185, %v1170, %v1073
        %v1204 = vsel %vm1185, %v1171, %v1074
        %v1205 = vsel %vm1185, %v1172, %v1075
        %v1206 = vsel %vm1185, %v1173, %v1076
        %v1207 = vsel %vm1185, %v1174, %v1077
        %v1208 = vsel %vm1185, %v1175, %v1078
        %v1209 = vsel %vm1185, %v1176, %v1079
        %v1210 = vsel %vm1185, %v1177, %v1080
        %v1211 = vsel %vm1185, %v1178, %v1081
        %v1212 = vsel %vm1185, %v1179, %v1082
        %v1213 = vsel %vm1185, %v1180, %v1083
        %v1214 = vsel %vm1185, %v1181, %v1084
        %v1215 = vsel %vm1185, %v1182, %v1085
        %v1216 = vsel %vm1185, %v1183, %v1086
        %v1217 = vsel %vm1185, %v1184, %v1087
        %v1218 = vpack.c.bf16 %v1186, %v1186
        %v1219 = vpack.c.bf16 %v1187, %v1187
        %v1220 = vpack.c.bf16 %v1188, %v1188
        %v1221 = vpack.c.bf16 %v1189, %v1189
        %v1222 = vpack.c.bf16 %v1190, %v1190
        %v1223 = vpack.c.bf16 %v1191, %v1191
        %v1224 = vpack.c.bf16 %v1192, %v1192
        %v1225 = vpack.c.bf16 %v1193, %v1193
        %v1226 = vpack.c.bf16 %v1194, %v1194
        %v1227 = vpack.c.bf16 %v1195, %v1195
        %v1228 = vpack.c.bf16 %v1196, %v1196
        %v1229 = vpack.c.bf16 %v1197, %v1197
        %v1230 = vpack.c.bf16 %v1198, %v1198
        %v1231 = vpack.c.bf16 %v1199, %v1199
        %v1232 = vpack.c.bf16 %v1200, %v1200
        %v1233 = vpack.c.bf16 %v1201, %v1201
        %v1234 = vpack.c.bf16 %v1202, %v1202
        %v1235 = vpack.c.bf16 %v1203, %v1203
        %v1236 = vpack.c.bf16 %v1204, %v1204
        %v1237 = vpack.c.bf16 %v1205, %v1205
        %v1238 = vpack.c.bf16 %v1206, %v1206
        %v1239 = vpack.c.bf16 %v1207, %v1207
        %v1240 = vpack.c.bf16 %v1208, %v1208
        %v1241 = vpack.c.bf16 %v1209, %v1209
        %v1242 = vpack.c.bf16 %v1210, %v1210
        %v1243 = vpack.c.bf16 %v1211, %v1211
        %v1244 = vpack.c.bf16 %v1212, %v1212
        %v1245 = vpack.c.bf16 %v1213, %v1213
        %v1246 = vpack.c.bf16 %v1214, %v1214
        %v1247 = vpack.c.bf16 %v1215, %v1215
        %v1248 = vpack.c.bf16 %v1216, %v1216
        %v1249 = vpack.c.bf16 %v1217, %v1217
        %vm1250 = vcmask 9216
        %1251 = vst.msk [vmem:[%s214] sm:$0x3] %vm1250, 0
        %1252 = vst.msk [vmem:[%s214 + $0x2] sm:$0x3] %vm1250, %v1218
        %1253 = vst.msk [vmem:[%s214 + $0x4] sm:$0x3] %vm1250, %v1219
        %1254 = vst.msk [vmem:[%s214 + $0x6] sm:$0x3] %vm1250, %v1220
        %1255 = vst.msk [vmem:[%s214 + $0x8] sm:$0x3] %vm1250, %v1221
        %1256 = vst.msk [vmem:[%s214 + $0xa] sm:$0x3] %vm1250, %v1222
        %1257 = vst.msk [vmem:[%s214 + $0xc] sm:$0x3] %vm1250, %v1223
        %1258 = vst.msk [vmem:[%s214 + $0xe] sm:$0x3] %vm1250, %v1224
        %1259 = vst.msk [vmem:[%s214 + $0x10] sm:$0x3] %vm1250, %v1225
        %1260 = vst.msk [vmem:[%s214 + $0x12] sm:$0x3] %vm1250, %v1226
        %1261 = vst.msk [vmem:[%s214 + $0x14] sm:$0x3] %vm1250, %v1227
        %1262 = vst.msk [vmem:[%s214 + $0x16] sm:$0x3] %vm1250, %v1228
        %1263 = vst.msk [vmem:[%s214 + $0x18] sm:$0x3] %vm1250, %v1229
        %1264 = vst.msk [vmem:[%s214 + $0x1a] sm:$0x3] %vm1250, %v1230
        %1265 = vst.msk [vmem:[%s214 + $0x1c] sm:$0x3] %vm1250, %v1231
        %1266 = vst.msk [vmem:[%s214 + $0x1e] sm:$0x3] %vm1250, %v1232
        %1267 = vst.msk [vmem:[%s214 + $0x20] sm:$0x3] %vm1250, %v1233
        %1268 = vst.msk [vmem:[%s214 + $0x22] sm:$0x3] %vm1250, %v1234
        %1269 = vst.msk [vmem:[%s214 + $0x24] sm:$0x3] %vm1250, %v1235
        %1270 = vst.msk [vmem:[%s214 + $0x26] sm:$0x3] %vm1250, %v1236
        %1271 = vst.msk [vmem:[%s214 + $0x28] sm:$0x3] %vm1250, %v1237
        %1272 = vst.msk [vmem:[%s214 + $0x2a] sm:$0x3] %vm1250, %v1238
        %1273 = vst.msk [vmem:[%s214 + $0x2c] sm:$0x3] %vm1250, %v1239
        %1274 = vst.msk [vmem:[%s214 + $0x2e] sm:$0x3] %vm1250, %v1240
        %1275 = vst.msk [vmem:[%s214 + $0x30] sm:$0x3] %vm1250, %v1241
        %1276 = vst.msk [vmem:[%s214 + $0x32] sm:$0x3] %vm1250, %v1242
        %1277 = vst.msk [vmem:[%s214 + $0x34] sm:$0x3] %vm1250, %v1243
        %1278 = vst.msk [vmem:[%s214 + $0x36] sm:$0x3] %vm1250, %v1244
        %1279 = vst.msk [vmem:[%s214 + $0x38] sm:$0x3] %vm1250, %v1245
        %1280 = vst.msk [vmem:[%s214 + $0x3a] sm:$0x3] %vm1250, %v1246
        %1281 = vst.msk [vmem:[%s214 + $0x3c] sm:$0x3] %vm1250, %v1247
        %1282 = vst.msk [vmem:[%s214 + $0x3e] sm:$0x3] %vm1250, %v1248
        %1283 = vst.msk [vmem:[%s214 + $0x40] sm:$0x3] %vm1250, %v1249
        %1284 = vst.msk [vmem:[%s214 + $0x42] sm:$0x3] %vm1250, 0
        %p1285 = scmp.lt.s32.totalorder %s16, 1
        %s1286 = scalar_select %p1285, %s16, 1
        %s1287 = smul.addr %s1286, 34
        %s1288 = smul.addr %s1287, 2
        %s1289 = scalar_lea.vmem %s4, %s1288
        // Predicated region
        $region41: #{forward.4} parent=35 // pred_check
          %p1290 = pneg %p123
        $region42: #{forward.4} parent=35 // pred_check_branch
          %1292 = sbr.rel (%p1290) target = $region44
        $region43: #{forward.4} parent=35 // pred_region
          _
        $region44: #{forward.4} parent=35 // pred_fallthru
          _
      $region36: #{forward.4} parent=5 // pred_fallthru
        _
      %p1293 = scmp.le.s32.totalorder 2, %s11
      // Predicated region
      $region45: #{forward.4} parent=5 // pred_check
        %p1294 = pneg %p1293
      $region46: #{forward.4} parent=5 // pred_check_branch
        %1296 = sbr.rel (%p1294) target = $region48
      $region47: #{forward.4} parent=5 // pred_region
        %s1297 = ssub.s32 %s11, 2
        // Predicated region
        $region49: #{forward.4} parent=47 // pred_check
          %p1298 = pneg %p129
        $region50: #{forward.4} parent=47 // pred_check_branch
          %1300 = sbr.rel (%p1298) target = $region52
        $region51: #{forward.4} parent=47 // pred_region
          %p1301 = scmp.lt.s32.totalorder %s17, 1
          %s1302 = scalar_select %p1301, %s17, 1
          %s1303 = smul.addr %s1302, 34
          %s1304 = smul.addr %s1303, 2
          %s1305 = scalar_lea.vmem %s4, %s1304
        $region52: #{forward.4} parent=47 // pred_fallthru
          _
      $region48: #{forward.4} parent=5 // pred_fallthru
        _
    $region6: #{forward.4} parent=1 // loop_footer
      %s15 = sadd.s32 1, %s11
    $region7: #{forward.4} parent=1 // loop_footer_branch
      %10 = sbr.rel target = $region3
    $region8: #{forward.4} parent=1 // loop_exit
      _
    %1306 = vsyncpa [#allocation3], 1
    %s1307 = scalar_lea.sflag [#allocation3], 1
    %1308 = vsyncpa %s1307, 1

// kernel: forward.7
$region0: #{forward.7}
  #allocation0 [shape = 'u32[]', space=smem, size = 0x4, offset = 0x4, fixed_abs, tag = 'smem constant byte address 0x4 - core index']
  #allocation1 [shape = 'u32[72,128]{1,0:T(1,128)}', space=vmem, size = 0x9000, scoped, tag = 'internal scratch']
  %s0 = inlined_call_operand.vmem [shape: f32[2,8,128], index: 0, kind: input, shape index: {}]
  %s1 = inlined_call_operand.hbm [shape: f32[128,128], index: 1, kind: input, shape index: {}]
  %s2 = inlined_call_operand.hbm [shape: f32[1,128], index: 2, kind: input, shape index: {}]
  %s3 = inlined_call_operand.hbm [shape: f32[128,128], index: 3, kind: input, shape index: {}]
  %s4 = inlined_call_operand.hbm [shape: f32[1,128], index: 4, kind: input, shape index: {}]
  %s5 = inlined_call_operand.hbm [shape: f32[2,128], index: 5, kind: output, shape index: {}]
  %s6 = sld [smem:[#allocation0]]
  $region46: #{forward.7} parent=0
    _
  %s8 = ssub.s32 1, %s6
  %s9 = scalar_select 0, %s8, %s6
  $region1: #{forward.7} parent=0
    #allocation2 [shape = 'u8[65536]{0}', space=vmem, size = 0x10000, scoped, tag = 'input window, operand 1, single buffered']
    #allocation3 [shape = 's32[1]{0}', space=sflag, size = 0x4, scoped, tag = 'scoped memory for forward.7']
    #allocation4 [shape = 's32[1]{0}', space=sflag, size = 0x4, scoped, tag = 'scoped memory for forward.7']
    #allocation5 [shape = 'u8[512]{0}', space=vmem, size = 0x400, scoped, tag = 'input window, operand 2, single buffered']
    #allocation6 [shape = 's32[1]{0}', space=sflag, size = 0x4, scoped, tag = 'scoped memory for forward.7']
    #allocation7 [shape = 'u8[65536]{0}', space=vmem, size = 0x10000, scoped, tag = 'input window, operand 3, single buffered']
    #allocation8 [shape = 'u8[512]{0}', space=vmem, size = 0x400, scoped, tag = 'input window, operand 4, single buffered']
    #allocation9 [shape = 's32[1]{0}', space=sflag, size = 0x4, scoped, tag = 'scoped memory for forward.7']
    #allocation10 [shape = 'u8[1024]{0}', space=vmem, size = 0x400, scoped, tag = 'output window, operand 0, single buffered']
    %10 = vsyncpa [#allocation3], 0
    %11 = vsyncpa [#allocation6], 0
    %12 = vsyncpa [#allocation9], 0
    %13 = vsyncpa [#allocation4], 0
    // Predicated region
    $region2: #{forward.7} parent=1 // pred_check
      _
    $region3: #{forward.7} parent=1 // pred_check_branch
      %15 = sbr.rel (0) target = $region5
    $region4: #{forward.7} parent=1 // pred_region
      _
    $region5: #{forward.7} parent=1 // pred_fallthru
      _
    // Predicated region
    $region6: #{forward.7} parent=1 // pred_check
      _
    $region7: #{forward.7} parent=1 // pred_check_branch
      %17 = sbr.rel (0) target = $region9
    $region8: #{forward.7} parent=1 // pred_region
      %19 = vsyncadd [#allocation3], 0
      %s20 = sshll.u32 %s1, 4
      %s21 = int_to_ptr.hbm [resolvable:$true] %s20
      %s22 = sshll.u32 [#allocation2], 4
      %s23 = int_to_ptr.vmem [resolvable:$true] %s22
      %28 = dma.hbm_to_vmem [thread:$0]  %s21, 2048, %s23, [#allocation3], 128, 128, 8
    $region9: #{forward.7} parent=1 // pred_fallthru
      _
    // Predicated region
    $region10: #{forward.7} parent=1 // pred_check
      _
    $region11: #{forward.7} parent=1 // pred_check_branch
      %30 = sbr.rel (0) target = $region13
    $region12: #{forward.7} parent=1 // pred_region
      %32 = vsyncadd [#allocation6], 0
      %s34 = sshll.u32 %s2, 4
      %s35 = int_to_ptr.hbm [resolvable:$true] %s34
      %s36 = sshll.u32 [#allocation5], 4
      %s37 = int_to_ptr.vmem [resolvable:$true] %s36
      %39 = dma.hbm_to_vmem [thread:$0]  %s35, 16, %s37, [#allocation6]
    $region13: #{forward.7} parent=1 // pred_fallthru
      _
    // Predicated region
    $region14: #{forward.7} parent=1 // pred_check
      _
    $region15: #{forward.7} parent=1 // pred_check_branch
      %41 = sbr.rel (0) target = $region17
    $region16: #{forward.7} parent=1 // pred_region
      %43 = vsyncadd [#allocation6], 0
      %s44 = sshll.u32 %s3, 4
      %s45 = int_to_ptr.hbm [resolvable:$true] %s44
      %s46 = sshll.u32 [#allocation7], 4
      %s47 = int_to_ptr.vmem [resolvable:$true] %s46
      %52 = dma.hbm_to_vmem [thread:$0]  %s45, 2048, %s47, [#allocation6], 128, 128, 8
    $region17: #{forward.7} parent=1 // pred_fallthru
      _
    // Predicated region
    $region18: #{forward.7} parent=1 // pred_check
      _
    $region19: #{forward.7} parent=1 // pred_check_branch
      %54 = sbr.rel (0) target = $region21
    $region20: #{forward.7} parent=1 // pred_region
      %56 = vsyncadd [#allocation9], 0
      %s58 = sshll.u32 %s4, 4
      %s59 = int_to_ptr.hbm [resolvable:$true] %s58
      %s60 = sshll.u32 [#allocation8], 4
      %s61 = int_to_ptr.vmem [resolvable:$true] %s60
      %63 = dma.hbm_to_vmem [thread:$0]  %s59, 16, %s61, [#allocation9]
    $region21: #{forward.7} parent=1 // pred_fallthru
      _
    // Predicated region
    $region22: #{forward.7} parent=1 // pred_check
      _
    $region23: #{forward.7} parent=1 // pred_check_branch
      %65 = sbr.rel (0) target = $region25
    $region24: #{forward.7} parent=1 // pred_region
      %67 = dma.done [#allocation3], 2048
    $region25: #{forward.7} parent=1 // pred_fallthru
      _
    // Predicated region
    $region26: #{forward.7} parent=1 // pred_check
      _
    $region27: #{forward.7} parent=1 // pred_check_branch
      %69 = sbr.rel (0) target = $region29
    $region28: #{forward.7} parent=1 // pred_region
      %71 = dma.done [#allocation6], 16
    $region29: #{forward.7} parent=1 // pred_fallthru
      _
    // Predicated region
    $region30: #{forward.7} parent=1 // pred_check
      _
    $region31: #{forward.7} parent=1 // pred_check_branch
      %73 = sbr.rel (0) target = $region33
    $region32: #{forward.7} parent=1 // pred_region
      %75 = dma.done [#allocation6], 2048
    $region33: #{forward.7} parent=1 // pred_fallthru
      _
    // Predicated region
    $region34: #{forward.7} parent=1 // pred_check
      _
    $region35: #{forward.7} parent=1 // pred_check_branch
      %77 = sbr.rel (0) target = $region37
    $region36: #{forward.7} parent=1 // pred_region
      %79 = dma.done [#allocation9], 16
    $region37: #{forward.7} parent=1 // pred_fallthru
      _
    %v80 = vld [vmem:[%s0] sm:$0xff]
    %v81 = vld [vmem:[%s0 + $0x8] sm:$0xff]
    %v82 = vrot.slane %v80, 4
    %v83 = vadd.f32 %v80, %v82
    %v84 = vrot.slane %v83, 2
    %v85 = vadd.f32 %v83, %v84
    %v86 = vrot.slane %v85, 1
    %v87 = vadd.f32 %v85, %v86
    %v88 = vrot.slane %v81, 4
    %v89 = vadd.f32 %v81, %v88
    %v90 = vrot.slane %v89, 2
    %v91 = vadd.f32 %v89, %v90
    %v92 = vrot.slane %v91, 1
    %v93 = vadd.f32 %v91, %v92
    %v94 = vmul.f32 %v87, 0.0625
    %v95 = vmul.f32 %v93, 0.0625
    %v96 = vld [vmem:[#allocation2] sm:$0xff]
    %v97 = vld [vmem:[#allocation2 + $0x8] sm:$0xff]
    %v98 = vld [vmem:[#allocation2 + $0x10] sm:$0xff]
    %v99 = vld [vmem:[#allocation2 + $0x18] sm:$0xff]
    %v100 = vld [vmem:[#allocation2 + $0x20] sm:$0xff]
    %v101 = vld [vmem:[#allocation2 + $0x28] sm:$0xff]
    %v102 = vld [vmem:[#allocation2 + $0x30] sm:$0xff]
    %v103 = vld [vmem:[#allocation2 + $0x38] sm:$0xff]
    %v104 = vld [vmem:[#allocation2 + $0x40] sm:$0xff]
    %v105 = vld [vmem:[#allocation2 + $0x48] sm:$0xff]
    %v106 = vld [vmem:[#allocation2 + $0x50] sm:$0xff]
    %v107 = vld [vmem:[#allocation2 + $0x58] sm:$0xff]
    %v108 = vld [vmem:[#allocation2 + $0x60] sm:$0xff]
    %v109 = vld [vmem:[#allocation2 + $0x68] sm:$0xff]
    %v110 = vld [vmem:[#allocation2 + $0x70] sm:$0xff]
    %v111 = vld [vmem:[#allocation2 + $0x78] sm:$0xff]
    %v112 = vld [vmem:[#allocation5] sm:$0x1]
    %v114 = vperm.slane %v112, 0
    %vm118 = vcmask 1041409
    %v119 = vsel %vm118, %v95, %v94
    %121 = vmatpush.msra.mxu0 %v111
    %122 = vmatpush.msra.mxu0 %v110
    %123 = vmatpush.msra.mxu0 %v109
    %124 = vmatpush.msra.mxu0 %v108
    %125 = vmatpush.msra.mxu0 %v107
    %126 = vmatpush.msra.mxu0 %v106
    %127 = vmatpush.msra.mxu0 %v105
    %128 = vmatpush.msra.mxu0 %v104
    %129 = vmatpush.msra.mxu0 %v103
    %130 = vmatpush.msra.mxu0 %v102
    %131 = vmatpush.msra.mxu0 %v101
    %132 = vmatpush.msra.mxu0 %v100
    %133 = vmatpush.msra.mxu0 %v99
    %134 = vmatpush.msra.mxu0 %v98
    %135 = vmatpush.msra.mxu0 %v97
    %136 = vmatpush.msra.mxu0 %v96
    %137 = vmatmul.f32.gmra.mxu0 %v119
    %v138 = vpop.f32.mrf.mxu0
    %v139 = vadd.f32 %v114, %v138
    %140 = vdwg.mxu0
    %v141 = vmax.f32 %v139, 0.0
    %v142 = vld [vmem:[#allocation7] sm:$0xff]
    %v143 = vld [vmem:[#allocation7 + $0x8] sm:$0xff]
    %v144 = vld [vmem:[#allocation7 + $0x10] sm:$0xff]
    %v145 = vld [vmem:[#allocation7 + $0x18] sm:$0xff]
    %v146 = vld [vmem:[#allocation7 + $0x20] sm:$0xff]
    %v147 = vld [vmem:[#allocation7 + $0x28] sm:$0xff]
    %v148 = vld [vmem:[#allocation7 + $0x30] sm:$0xff]
    %v149 = vld [vmem:[#allocation7 + $0x38] sm:$0xff]
    %v150 = vld [vmem:[#allocation7 + $0x40] sm:$0xff]
    %v151 = vld [vmem:[#allocation7 + $0x48] sm:$0xff]
    %v152 = vld [vmem:[#allocation7 + $0x50] sm:$0xff]
    %v153 = vld [vmem:[#allocation7 + $0x58] sm:$0xff]
    %v154 = vld [vmem:[#allocation7 + $0x60] sm:$0xff]
    %v155 = vld [vmem:[#allocation7 + $0x68] sm:$0xff]
    %v156 = vld [vmem:[#allocation7 + $0x70] sm:$0xff]
    %v157 = vld [vmem:[#allocation7 + $0x78] sm:$0xff]
    %v158 = vld [vmem:[#allocation8] sm:$0x1]
    %v160 = vperm.slane %v158, 0
    %162 = vmatpush.msra.mxu0 %v157
    %163 = vmatpush.msra.mxu0 %v156
    %164 = vmatpush.msra.mxu0 %v155
    %165 = vmatpush.msra.mxu0 %v154
    %166 = vmatpush.msra.mxu0 %v153
    %167 = vmatpush.msra.mxu0 %v152
    %168 = vmatpush.msra.mxu0 %v151
    %169 = vmatpush.msra.mxu0 %v150
    %170 = vmatpush.msra.mxu0 %v149
    %171 = vmatpush.msra.mxu0 %v148
    %172 = vmatpush.msra.mxu0 %v147
    %173 = vmatpush.msra.mxu0 %v146
    %174 = vmatpush.msra.mxu0 %v145
    %175 = vmatpush.msra.mxu0 %v144
    %176 = vmatpush.msra.mxu0 %v143
    %177 = vmatpush.msra.mxu0 %v142
    %178 = vmatmul.f32.gmra.mxu0 %v141
    %v179 = vpop.f32.mrf.mxu0
    %v180 = vadd.f32 %v160, %v179
    %181 = vdwg.mxu0
    %182 = vst [vmem:[#allocation10] sm:$0x3] %v180
    // Predicated region
    $region38: #{forward.7} parent=1 // pred_check
      _
    $region39: #{forward.7} parent=1 // pred_check_branch
      %184 = sbr.rel (0) target = $region41
    $region40: #{forward.7} parent=1 // pred_region
      %186 = vsyncadd [#allocation4], 0
      %s188 = sshll.u32 [#allocation10], 4
      %s189 = int_to_ptr.vmem [resolvable:$true] %s188
      %s190 = sshll.u32 %s5, 4
      %s191 = int_to_ptr.hbm [resolvable:$true] %s190
      %193 = dma.vmem_to_hbm [thread:$0]  %s189, 32, %s191, [#allocation4]
    $region41: #{forward.7} parent=1 // pred_fallthru
      _
    // Predicated region
    $region42: #{forward.7} parent=1 // pred_check
      _
    $region43: #{forward.7} parent=1 // pred_check_branch
      %195 = sbr.rel (0) target = $region45
    $region44: #{forward.7} parent=1 // pred_region
      %197 = dma.done [#allocation4], 32
    $region45: #{forward.7} parent=1 // pred_fallthru
      _
    %198 = vsyncpa [#allocation3], 1
    %199 = vsyncpa [#allocation6], 1
    %200 = vsyncpa [#allocation9], 1
    %201 = vsyncpa [#allocation4], 1

// kernel: forward.6
$region0: #{forward.6}
  #allocation0 [shape = 'u32[]', space=smem, size = 0x4, offset = 0x4, fixed_abs, tag = 'smem constant byte address 0x4 - core index']
  #allocation1 [shape = 'u32[72,128]{1,0:T(1,128)}', space=vmem, size = 0x9000, scoped, tag = 'internal scratch']
  %s0 = inlined_call_operand.vmem [shape: bf16[2,18,2,64,3], index: 0, kind: input, shape index: {}, may-alias: {0,1}]
  %s1 = inlined_call_operand.vmem [shape: bf16[2,18,2,64,3], index: 1, kind: input, shape index: {}, may-alias: {0,1}]
  %s2 = inlined_call_operand.vmem [shape: bf16[128,576], index: 2, kind: input, shape index: {}]
  %s3 = inlined_call_operand.vmem [shape: f32[128,1], index: 3, kind: input, shape index: {}]
  %s4 = inlined_call_operand.vmem [shape: f32[128,1], index: 4, kind: input, shape index: {}]
  %s5 = inlined_call_operand.vmem [shape: f32[2,8,1,128], index: 5, kind: output, shape index: {}]
  %s6 = sld [smem:[#allocation0]]
  $region53: #{forward.6} parent=0
    _
  %s8 = ssub.s32 1, %s6
  %s9 = scalar_select 0, %s8, %s6
  loop: start=0, step=1, limit=18
  $region2: #{forward.6} parent=0 // loop_pre_header
    _
  $region3: #{forward.6} parent=0 // loop_header
    %s11 = sphi 0, %s15
    %p12 = scmp.ge.s32.totalorder %s11, 18
    %s18 = sphi 0, %s30
    %s19 = sphi 0, %s26
    %s20 = sphi 0, %s18
    %s21 = sphi 0, %s19
    %s22 = sphi 0, %s20
    %s23 = sphi 0, %s21
    %s35 = sphi 0, %s37
    %s38 = sphi 0, %s35
    %s39 = sphi 0, %s38
    %s55 = sphi 0, %s39
    %s65 = sphi 0, %s67
    %s68 = sphi 0, %s65
    %s69 = sphi 0, %s68
    %s85 = sphi 0, %s69
    %s89 = sphi 0, %s89
    %s91 = sphi 0, %s89
    %s92 = sphi 0, %s91
    %s106 = sphi 0, %s92
    %s110 = sphi 0, %s110
    %s112 = sphi 0, %s110
    %s113 = sphi 0, %s112
    %s127 = sphi 0, %s113
    %s131 = sphi 0, %s131
    %s133 = sphi 0, %s131
    %s134 = sphi 0, %s133
    %s148 = sphi 0, %s134
    %s156 = sphi 0, %s158
    %s159 = sphi 0, %s156
    %s160 = sphi 0, %s159
    %s176 = sphi 0, %s160
  $region4: #{forward.6} parent=0 // loop_header_branch
    %14 = sbr.rel (%p12) target = $region8
  $region5: #{forward.6} parent=0 // loop_body
    %s16 = ssub.s32 %s11, 1
    %s17 = ssub.s32 %s11, 2
    %s24 = sadd.s32 1, %s19
    %p25 = scmp.ge.s32.totalorder %s24, 8
    %s26 = scalar_select %p25, 0, %s24
    %s27 = sadd.s32 1, %s18
    %s28 = scalar_select %p25, %s27, %s18
    %p29 = scmp.ge.s32.totalorder %s28, 2
    %s30 = scalar_select %p29, 0, %s28
    %s31 = ssub.s32 %s18, %s30
    %s32 = ssub.s32 %s19, %s26
    %s33 = sor.u32 %s31, %s32
    %p34 = scmp.eq.s32.totalorder %s33, 0
    %s36 = sadd.s32 %s35, 1
    %s37 = scalar_select %p34, %s35, %s36
    %p40 = pneg %p34
    %p41 = scmp.eq.s32.totalorder %s11, 15
    %p42 = por %p40, %p41
    %p43 = scmp.ne.s32.totalorder %s35, %s38
    %p44 = scmp.eq.s32.totalorder %s11, 0
    %p45 = por %p43, %p44
    %p46 = scmp.ne.s32.totalorder %s35, %s38
    %p47 = scmp.eq.s32.totalorder %s16, 15
    %p48 = por %p46, %p47
    %p49 = scmp.ne.s32.totalorder %s38, %s39
    %p50 = scmp.eq.s32.totalorder %s16, 0
    %p51 = por %p49, %p50
    %p52 = scmp.ne.s32.totalorder %s38, %s39
    %p53 = scmp.eq.s32.totalorder %s17, 15
    %p54 = por %p52, %p53
    %p56 = scmp.ne.s32.totalorder %s39, %s55
    %p57 = scmp.eq.s32.totalorder %s17, 0
    %p58 = por %p56, %p57
    %s59 = sadd.s32 %s19, 1
    %s60 = sadd.s32 %s26, 1
    %s61 = ssub.s32 %s18, %s30
    %s62 = ssub.s32 %s59, %s60
    %s63 = sor.u32 %s61, %s62
    %p64 = scmp.eq.s32.totalorder %s63, 0
    %s66 = sadd.s32 %s65, 1
    %s67 = scalar_select %p64, %s65, %s66
    %p70 = pneg %p64
    %p71 = scmp.eq.s32.totalorder %s11, 15
    %p72 = por %p70, %p71
    %p73 = scmp.ne.s32.totalorder %s65, %s68
    %p74 = scmp.eq.s32.totalorder %s11, 0
    %p75 = por %p73, %p74
    %p76 = scmp.ne.s32.totalorder %s65, %s68
    %p77 = scmp.eq.s32.totalorder %s16, 15
    %p78 = por %p76, %p77
    %p79 = scmp.ne.s32.totalorder %s68, %s69
    %p80 = scmp.eq.s32.totalorder %s16, 0
    %p81 = por %p79, %p80
    %p82 = scmp.ne.s32.totalorder %s68, %s69
    %p83 = scmp.eq.s32.totalorder %s17, 15
    %p84 = por %p82, %p83
    %p86 = scmp.ne.s32.totalorder %s69, %s85
    %p87 = scmp.eq.s32.totalorder %s17, 0
    %p88 = por %p86, %p87
    %s90 = sadd.s32 %s89, 1
    %p93 = scmp.eq.s32.totalorder %s11, 15
    %p94 = scmp.ne.s32.totalorder %s89, %s91
    %p95 = scmp.eq.s32.totalorder %s11, 0
    %p96 = por %p94, %p95
    %p97 = scmp.ne.s32.totalorder %s89, %s91
    %p98 = scmp.eq.s32.totalorder %s16, 15
    %p99 = por %p97, %p98
    %p100 = scmp.ne.s32.totalorder %s91, %s92
    %p101 = scmp.eq.s32.totalorder %s16, 0
    %p102 = por %p100, %p101
    %p103 = scmp.ne.s32.totalorder %s91, %s92
    %p104 = scmp.eq.s32.totalorder %s17, 15
    %p105 = por %p103, %p104
    %p107 = scmp.ne.s32.totalorder %s92, %s106
    %p108 = scmp.eq.s32.totalorder %s17, 0
    %p109 = por %p107, %p108
    %s111 = sadd.s32 %s110, 1
    %p114 = scmp.eq.s32.totalorder %s11, 15
    %p115 = scmp.ne.s32.totalorder %s110, %s112
    %p116 = scmp.eq.s32.totalorder %s11, 0
    %p117 = por %p115, %p116
    %p118 = scmp.ne.s32.totalorder %s110, %s112
    %p119 = scmp.eq.s32.totalorder %s16, 15
    %p120 = por %p118, %p119
    %p121 = scmp.ne.s32.totalorder %s112, %s113
    %p122 = scmp.eq.s32.totalorder %s16, 0
    %p123 = por %p121, %p122
    %p124 = scmp.ne.s32.totalorder %s112, %s113
    %p125 = scmp.eq.s32.totalorder %s17, 15
    %p126 = por %p124, %p125
    %p128 = scmp.ne.s32.totalorder %s113, %s127
    %p129 = scmp.eq.s32.totalorder %s17, 0
    %p130 = por %p128, %p129
    %s132 = sadd.s32 %s131, 1
    %p135 = scmp.eq.s32.totalorder %s11, 15
    %p136 = scmp.ne.s32.totalorder %s131, %s133
    %p137 = scmp.eq.s32.totalorder %s11, 0
    %p138 = por %p136, %p137
    %p139 = scmp.ne.s32.totalorder %s131, %s133
    %p140 = scmp.eq.s32.totalorder %s16, 15
    %p141 = por %p139, %p140
    %p142 = scmp.ne.s32.totalorder %s133, %s134
    %p143 = scmp.eq.s32.totalorder %s16, 0
    %p144 = por %p142, %p143
    %p145 = scmp.ne.s32.totalorder %s133, %s134
    %p146 = scmp.eq.s32.totalorder %s17, 15
    %p147 = por %p145, %p146
    %p149 = scmp.ne.s32.totalorder %s134, %s148
    %p150 = scmp.eq.s32.totalorder %s17, 0
    %p151 = por %p149, %p150
    %s152 = ssub.s32 %s18, %s30
    %s153 = ssub.s32 %s19, %s26
    %s154 = sor.u32 %s152, %s153
    %p155 = scmp.eq.s32.totalorder %s154, 0
    %s157 = sadd.s32 %s156, 1
    %s158 = scalar_select %p155, %s156, %s157
    %p161 = pneg %p155
    %p162 = scmp.eq.s32.totalorder %s11, 15
    %p163 = por %p161, %p162
    %p164 = scmp.ne.s32.totalorder %s156, %s159
    %p165 = scmp.eq.s32.totalorder %s11, 0
    %p166 = por %p164, %p165
    %p167 = scmp.ne.s32.totalorder %s156, %s159
    %p168 = scmp.eq.s32.totalorder %s16, 15
    %p169 = por %p167, %p168
    %p170 = scmp.ne.s32.totalorder %s159, %s160
    %p171 = scmp.eq.s32.totalorder %s16, 0
    %p172 = por %p170, %p171
    %p173 = scmp.ne.s32.totalorder %s159, %s160
    %p174 = scmp.eq.s32.totalorder %s17, 15
    %p175 = por %p173, %p174
    %p177 = scmp.ne.s32.totalorder %s160, %s176
    %p178 = scmp.eq.s32.totalorder %s17, 0
    %p179 = por %p177, %p178
    %p180 = scmp.le.s32.totalorder 1, %s11
    %p181 = scmp.lt.s32.totalorder %s11, 17
    %p182 = pnand %p180, %p181
    %p183 = pneg %p182
    // Predicated region
    $region9: #{forward.6} parent=5 // pred_check
      _
    $region10: #{forward.6} parent=5 // pred_check_branch
      %185 = sbr.rel (%p182) target = $region12
    $region11: #{forward.6} parent=5 // pred_region
      %s186 = ssub.s32 %s11, 1
      // Predicated region
      $region13: #{forward.6} parent=11 // pred_check
        %p187 = pneg %p102
      $region14: #{forward.6} parent=11 // pred_check_branch
        %189 = sbr.rel (%p187) target = $region16
      $region15: #{forward.6} parent=11 // pred_region
        _
      $region16: #{forward.6} parent=11 // pred_fallthru
        _
      // Predicated region
      $region17: #{forward.6} parent=11 // pred_check
        %p190 = pneg %p123
      $region18: #{forward.6} parent=11 // pred_check_branch
        %192 = sbr.rel (%p190) target = $region20
      $region19: #{forward.6} parent=11 // pred_region
        _
      $region20: #{forward.6} parent=11 // pred_fallthru
        _
      // Predicated region
      $region21: #{forward.6} parent=11 // pred_check
        %p193 = pneg %p144
      $region22: #{forward.6} parent=11 // pred_check_branch
        %195 = sbr.rel (%p193) target = $region24
      $region23: #{forward.6} parent=11 // pred_region
        _
      $region24: #{forward.6} parent=11 // pred_fallthru
        _
    $region12: #{forward.6} parent=5 // pred_fallthru
      _
    %p196 = scmp.lt.s32.totalorder %s11, 16
    // Predicated region
    $region25: #{forward.6} parent=5 // pred_check
      %p197 = pneg %p196
    $region26: #{forward.6} parent=5 // pred_check_branch
      %199 = sbr.rel (%p197) target = $region28
    $region27: #{forward.6} parent=5 // pred_region
      // Predicated region
      $region29: #{forward.6} parent=27 // pred_check
        %p200 = pneg %p45
      $region30: #{forward.6} parent=27 // pred_check_branch
        %202 = sbr.rel (%p200) target = $region32
      $region31: #{forward.6} parent=27 // pred_region
        %s203 = smul.u32 2, %s19
        %p204 = scmp.lt.s32.totalorder %s18, 1
        %s205 = scalar_select %p204, %s18, 1
        %p206 = scmp.lt.s32.totalorder %s203, 17
        %s207 = scalar_select %p206, %s203, 17
        %s208 = smul.addr %s207, 16
        %s209 = smul.addr %s205, 288
        %s210 = sadd.s32 %s208, %s209
        %s211 = smul.addr %s210, 4
        %s212 = scalar_lea.vmem %s0, %s211
        %s213 = smul.u32 2, %s19
      $region32: #{forward.6} parent=27 // pred_fallthru
        _
      // Predicated region
      $region33: #{forward.6} parent=27 // pred_check
        %p214 = pneg %p75
      $region34: #{forward.6} parent=27 // pred_check_branch
        %216 = sbr.rel (%p214) target = $region36
      $region35: #{forward.6} parent=27 // pred_region
        %s217 = sadd.s32 %s19, 1
        %s218 = smul.u32 2, %s217
        %p219 = scmp.lt.s32.totalorder %s18, 1
        %s220 = scalar_select %p219, %s18, 1
        %p221 = scmp.lt.s32.totalorder %s218, 17
        %s222 = scalar_select %p221, %s218, 17
        %s223 = smul.addr %s222, 16
        %s224 = smul.addr %s220, 288
        %s225 = sadd.s32 %s223, %s224
        %s226 = smul.addr %s225, 4
        %s227 = scalar_lea.vmem %s1, %s226
        %s228 = sadd.s32 %s19, 1
        %s229 = smul.u32 2, %s228
      $region36: #{forward.6} parent=27 // pred_fallthru
        _
    $region28: #{forward.6} parent=5 // pred_fallthru
      _
    %p230 = scmp.le.s32.totalorder 1, %s11
    %p231 = scmp.lt.s32.totalorder %s11, 17
    %p232 = pnand %p230, %p231
    %p233 = pneg %p232
    // Predicated region
    $region37: #{forward.6} parent=5 // pred_check
      _
    $region38: #{forward.6} parent=5 // pred_check_branch
      %235 = sbr.rel (%p232) target = $region40
    $region39: #{forward.6} parent=5 // pred_region
      %s236 = ssub.s32 %s11, 1
      %s237 = smul.u32 2, %s21
      %p238 = scmp.lt.s32.totalorder %s20, 1
      %s239 = scalar_select %p238, %s20, 1
      %p240 = scmp.lt.s32.totalorder %s237, 17
      %s241 = scalar_select %p240, %s237, 17
      %s242 = smul.addr %s241, 16
      %s243 = smul.addr %s239, 288
      %s244 = sadd.s32 %s242, %s243
      %s245 = smul.addr %s244, 4
      %s246 = scalar_lea.vmem %s0, %s245
      %p247 = pneg %p51
      %p248 = pneg %p48
      %s249 = sadd.s32 %s21, 1
      %s250 = smul.u32 2, %s249
      %p251 = scmp.lt.s32.totalorder %s20, 1
      %s252 = scalar_select %p251, %s20, 1
      %p253 = scmp.lt.s32.totalorder %s250, 17
      %s254 = scalar_select %p253, %s250, 17
      %s255 = smul.addr %s254, 16
      %s256 = smul.addr %s252, 288
      %s257 = sadd.s32 %s255, %s256
      %s258 = smul.addr %s257, 4
      %s259 = scalar_lea.vmem %s1, %s258
      %p260 = pneg %p81
      %p261 = pneg %p78
      %p262 = pneg %p102
      %p263 = pneg %p99
      %p264 = pneg %p123
      %p265 = pneg %p120
      %p266 = pneg %p144
      %p267 = pneg %p141
      %p268 = pneg %p172
      %p269 = pneg %p169
      %p270 = scmp.lt.s32.totalorder %s20, 1
      %s271 = scalar_select %p270, %s20, 1
      %p272 = scmp.lt.s32.totalorder %s21, 7
      %s273 = scalar_select %p272, %s21, 7
      %s274 = smul.addr %s271, 8
      %s275 = sadd.s32 %s273, %s274
      %s276 = scalar_lea.vmem %s5, %s275
      %s277 = smul.u32 2, %s21
      %p278 = scmp.lt.s32.totalorder %s20, 1
      %s279 = scalar_select %p278, %s20, 1
      %p280 = scmp.lt.s32.totalorder %s277, 17
      %s281 = scalar_select %p280, %s277, 17
      %s282 = smul.addr %s281, 16
      %s283 = smul.addr %s279, 288
      %s284 = sadd.s32 %s282, %s283
      %s285 = smul.addr %s284, 4
      %s286 = scalar_lea.vmem %s0, %s285
      %s287 = smul.u32 2, %s21
      %s288 = sadd.s32 %s21, 1
      %s289 = smul.u32 2, %s288
      %p290 = scmp.lt.s32.totalorder %s20, 1
      %s291 = scalar_select %p290, %s20, 1
      %p292 = scmp.lt.s32.totalorder %s289, 17
      %s293 = scalar_select %p292, %s289, 17
      %s294 = smul.addr %s293, 16
      %s295 = smul.addr %s291, 288
      %s296 = sadd.s32 %s294, %s295
      %s297 = smul.addr %s296, 4
      %s298 = scalar_lea.vmem %s1, %s297
      %s299 = sadd.s32 %s21, 1
      %s300 = smul.u32 2, %s299
      %p301 = scmp.lt.s32.totalorder %s20, 1
      %s302 = scalar_select %p301, %s20, 1
      %p303 = scmp.lt.s32.totalorder %s21, 7
      %s304 = scalar_select %p303, %s21, 7
      %s305 = smul.addr %s302, 8
      %s306 = sadd.s32 %s304, %s305
      %s307 = scalar_lea.vmem %s5, %s306
      %v309 = vld [vmem:[%s286] sm:$0xf]
      %v310 = vld [vmem:[%s286 + $0x4] sm:$0xf]
      %v311 = vld [vmem:[%s286 + $0x8] sm:$0xf]
      %v312 = vld [vmem:[%s286 + $0xc] sm:$0xf]
      %v313 = vld [vmem:[%s286 + $0x10] sm:$0xf]
      %v314 = vld [vmem:[%s286 + $0x14] sm:$0xf]
      %v315 = vld [vmem:[%s286 + $0x18] sm:$0xf]
      %v316 = vld [vmem:[%s286 + $0x1c] sm:$0xf]
      %v317 = vld [vmem:[%s286 + $0x20] sm:$0xf]
      %v318 = vld [vmem:[%s286 + $0x24] sm:$0xf]
      %v319 = vld [vmem:[%s286 + $0x28] sm:$0xf]
      %v320 = vld [vmem:[%s286 + $0x2c] sm:$0xf]
      %v321 = vld [vmem:[%s286 + $0x30] sm:$0xf]
      %v322 = vld [vmem:[%s286 + $0x34] sm:$0xf]
      %v323 = vld [vmem:[%s286 + $0x38] sm:$0xf]
      %v324 = vld [vmem:[%s286 + $0x3c] sm:$0xf]
      %v325 = vld [vmem:[%s286 + $0x40] sm:$0xf]
      %v326 = vld [vmem:[%s286 + $0x44] sm:$0xf]
      %v327 = vld [vmem:[%s286 + $0x48] sm:$0xf]
      %v328 = vld [vmem:[%s286 + $0x4c] sm:$0xf]
      %v329 = vld [vmem:[%s286 + $0x50] sm:$0xf]
      %v330 = vld [vmem:[%s286 + $0x54] sm:$0xf]
      %v331 = vld [vmem:[%s286 + $0x58] sm:$0xf]
      %v332 = vld [vmem:[%s286 + $0x5c] sm:$0xf]
      %v333 = vld [vmem:[%s286 + $0x60] sm:$0xf]
      %v334 = vld [vmem:[%s286 + $0x64] sm:$0xf]
      %v335 = vld [vmem:[%s286 + $0x68] sm:$0xf]
      %v336 = vld [vmem:[%s286 + $0x6c] sm:$0xf]
      %v337 = vld [vmem:[%s286 + $0x70] sm:$0xf]
      %v338 = vld [vmem:[%s286 + $0x74] sm:$0xf]
      %v339 = vld [vmem:[%s286 + $0x78] sm:$0xf]
      %v340 = vld [vmem:[%s286 + $0x7c] sm:$0xf]
      %v341 = vld [vmem:[%s298] sm:$0xf]
      %v342 = vld [vmem:[%s298 + $0x4] sm:$0xf]
      %v343 = vld [vmem:[%s298 + $0x8] sm:$0xf]
      %v344 = vld [vmem:[%s298 + $0xc] sm:$0xf]
      %v345 = vld [vmem:[%s298 + $0x10] sm:$0xf]
      %v346 = vld [vmem:[%s298 + $0x14] sm:$0xf]
      %v347 = vld [vmem:[%s298 + $0x18] sm:$0xf]
      %v348 = vld [vmem:[%s298 + $0x1c] sm:$0xf]
      %v349 = vld [vmem:[%s298 + $0x20] sm:$0xf]
      %v350 = vld [vmem:[%s298 + $0x24] sm:$0xf]
      %v351 = vld [vmem:[%s298 + $0x28] sm:$0xf]
      %v352 = vld [vmem:[%s298 + $0x2c] sm:$0xf]
      %v353 = vld [vmem:[%s298 + $0x30] sm:$0xf]
      %v354 = vld [vmem:[%s298 + $0x34] sm:$0xf]
      %v355 = vld [vmem:[%s298 + $0x38] sm:$0xf]
      %v356 = vld [vmem:[%s298 + $0x3c] sm:$0xf]
      %v357 = vld [vmem:[%s298 + $0x40] sm:$0xf]
      %v358 = vld [vmem:[%s298 + $0x44] sm:$0xf]
      %v359 = vld [vmem:[%s298 + $0x48] sm:$0xf]
      %v360 = vld [vmem:[%s298 + $0x4c] sm:$0xf]
      %v361 = vld [vmem:[%s298 + $0x50] sm:$0xf]
      %v362 = vld [vmem:[%s298 + $0x54] sm:$0xf]
      %v363 = vld [vmem:[%s298 + $0x58] sm:$0xf]
      %v364 = vld [vmem:[%s298 + $0x5c] sm:$0xf]
      %v365 = vld [vmem:[%s298 + $0x60] sm:$0xf]
      %v366 = vld [vmem:[%s298 + $0x64] sm:$0xf]
      %v367 = vld [vmem:[%s298 + $0x68] sm:$0xf]
      %v368 = vld [vmem:[%s298 + $0x6c] sm:$0xf]
      %v369 = vld [vmem:[%s298 + $0x70] sm:$0xf]
      %v370 = vld [vmem:[%s298 + $0x74] sm:$0xf]
      %v371 = vld [vmem:[%s298 + $0x78] sm:$0xf]
      %v372 = vld [vmem:[%s298 + $0x7c] sm:$0xf]
      %v381 = vunpack.c.l.b16 %v309
      %v382 = vunpack.c.l.b16 %v310
      %v383 = vunpack.c.l.b16 %v311
      %v384 = vunpack.c.l.b16 %v312
      %v385 = vunpack.c.l.b16 %v313
      %v386 = vunpack.c.l.b16 %v314
      %v387 = vunpack.c.l.b16 %v315
      %v388 = vunpack.c.l.b16 %v316
      %v389 = vpack.c.b16 %v382, %v381
      %v390 = vpack.c.b16 %v384, %v383
      %v391 = vpack.c.b16 %v386, %v385
      %v392 = vpack.c.b16 %v388, %v387
      %v405 = vunpack.c.l.b16 %v317
      %v406 = vunpack.c.l.b16 %v318
      %v407 = vunpack.c.l.b16 %v319
      %v408 = vunpack.c.l.b16 %v320
      %v409 = vunpack.c.l.b16 %v321
      %v410 = vunpack.c.l.b16 %v322
      %v411 = vunpack.c.l.b16 %v323
      %v412 = vunpack.c.l.b16 %v324
      %v413 = vpack.c.b16 %v406, %v405
      %v414 = vpack.c.b16 %v408, %v407
      %v415 = vpack.c.b16 %v410, %v409
      %v416 = vpack.c.b16 %v412, %v411
      %421 = vrot.lane.b32.xlu0 %v389, 127
      %v422 = vpop.permute.xlu0 %421
      %423 = vrot.lane.b32.xlu0 %v390, 127
      %v424 = vpop.permute.xlu0 %423
      %425 = vrot.lane.b32.xlu0 %v391, 127
      %v426 = vpop.permute.xlu0 %425
      %427 = vrot.lane.b32.xlu0 %v392, 127
      %v428 = vpop.permute.xlu0 %427
      %v441 = vunpack.c.l.b16 %v325
      %v442 = vunpack.c.l.b16 %v326
      %v443 = vunpack.c.l.b16 %v327
      %v444 = vunpack.c.l.b16 %v328
      %v445 = vunpack.c.l.b16 %v329
      %v446 = vunpack.c.l.b16 %v330
      %v447 = vunpack.c.l.b16 %v331
      %v448 = vunpack.c.l.b16 %v332
      %v449 = vpack.c.b16 %v442, %v441
      %v450 = vpack.c.b16 %v444, %v443
      %v451 = vpack.c.b16 %v446, %v445
      %v452 = vpack.c.b16 %v448, %v447
      %v465 = vunpack.c.l.b16 %v333
      %v466 = vunpack.c.l.b16 %v334
      %v467 = vunpack.c.l.b16 %v335
      %v468 = vunpack.c.l.b16 %v336
      %v469 = vunpack.c.l.b16 %v337
      %v470 = vunpack.c.l.b16 %v338
      %v471 = vunpack.c.l.b16 %v339
      %v472 = vunpack.c.l.b16 %v340
      %v473 = vpack.c.b16 %v466, %v465
      %v474 = vpack.c.b16 %v468, %v467
      %v475 = vpack.c.b16 %v470, %v469
      %v476 = vpack.c.b16 %v472, %v471
      %481 = vrot.lane.b32.xlu0 %v449, 127
      %v482 = vpop.permute.xlu0 %481
      %483 = vrot.lane.b32.xlu0 %v450, 127
      %v484 = vpop.permute.xlu0 %483
      %485 = vrot.lane.b32.xlu0 %v451, 127
      %v486 = vpop.permute.xlu0 %485
      %487 = vrot.lane.b32.xlu0 %v452, 127
      %v488 = vpop.permute.xlu0 %487
      %v501 = vunpack.c.l.b16 %v341
      %v502 = vunpack.c.l.b16 %v342
      %v503 = vunpack.c.l.b16 %v343
      %v504 = vunpack.c.l.b16 %v344
      %v505 = vunpack.c.l.b16 %v345
      %v506 = vunpack.c.l.b16 %v346
      %v507 = vunpack.c.l.b16 %v347
      %v508 = vunpack.c.l.b16 %v348
      %v509 = vpack.c.b16 %v502, %v501
      %v510 = vpack.c.b16 %v504, %v503
      %v511 = vpack.c.b16 %v506, %v505
      %v512 = vpack.c.b16 %v508, %v507
      %v525 = vunpack.c.l.b16 %v349
      %v526 = vunpack.c.l.b16 %v350
      %v527 = vunpack.c.l.b16 %v351
      %v528 = vunpack.c.l.b16 %v352
      %v529 = vunpack.c.l.b16 %v353
      %v530 = vunpack.c.l.b16 %v354
      %v531 = vunpack.c.l.b16 %v355
      %v532 = vunpack.c.l.b16 %v356
      %v533 = vpack.c.b16 %v526, %v525
      %v534 = vpack.c.b16 %v528, %v527
      %v535 = vpack.c.b16 %v530, %v529
      %v536 = vpack.c.b16 %v532, %v531
      %541 = vrot.lane.b32.xlu0 %v509, 127
      %v542 = vpop.permute.xlu0 %541
      %543 = vrot.lane.b32.xlu0 %v510, 127
      %v544 = vpop.permute.xlu0 %543
      %545 = vrot.lane.b32.xlu0 %v511, 127
      %v546 = vpop.permute.xlu0 %545
      %547 = vrot.lane.b32.xlu0 %v512, 127
      %v548 = vpop.permute.xlu0 %547
      %v561 = vunpack.c.l.b16 %v357
      %v562 = vunpack.c.l.b16 %v358
      %v563 = vunpack.c.l.b16 %v359
      %v564 = vunpack.c.l.b16 %v360
      %v565 = vunpack.c.l.b16 %v361
      %v566 = vunpack.c.l.b16 %v362
      %v567 = vunpack.c.l.b16 %v363
      %v568 = vunpack.c.l.b16 %v364
      %v569 = vpack.c.b16 %v562, %v561
      %v570 = vpack.c.b16 %v564, %v563
      %v571 = vpack.c.b16 %v566, %v565
      %v572 = vpack.c.b16 %v568, %v567
      %v585 = vunpack.c.l.b16 %v365
      %v586 = vunpack.c.l.b16 %v366
      %v587 = vunpack.c.l.b16 %v367
      %v588 = vunpack.c.l.b16 %v368
      %v589 = vunpack.c.l.b16 %v369
      %v590 = vunpack.c.l.b16 %v370
      %v591 = vunpack.c.l.b16 %v371
      %v592 = vunpack.c.l.b16 %v372
      %v593 = vpack.c.b16 %v586, %v585
      %v594 = vpack.c.b16 %v588, %v587
      %v595 = vpack.c.b16 %v590, %v589
      %v596 = vpack.c.b16 %v592, %v591
      %601 = vrot.lane.b32.xlu0 %v569, 127
      %v602 = vpop.permute.xlu0 %601
      %603 = vrot.lane.b32.xlu0 %v570, 127
      %v604 = vpop.permute.xlu0 %603
      %605 = vrot.lane.b32.xlu0 %v571, 127
      %v606 = vpop.permute.xlu0 %605
      %607 = vrot.lane.b32.xlu0 %v572, 127
      %v608 = vpop.permute.xlu0 %607
      %613 = vrot.lane.b32.xlu0 %v413, 127
      %v614 = vpop.permute.xlu0 %613
      %615 = vrot.lane.b32.xlu0 %v414, 127
      %v616 = vpop.permute.xlu0 %615
      %617 = vrot.lane.b32.xlu0 %v415, 127
      %v618 = vpop.permute.xlu0 %617
      %619 = vrot.lane.b32.xlu0 %v416, 127
      %v620 = vpop.permute.xlu0 %619
      %625 = vrot.lane.b32.xlu0 %v473, 127
      %v626 = vpop.permute.xlu0 %625
      %627 = vrot.lane.b32.xlu0 %v474, 127
      %v628 = vpop.permute.xlu0 %627
      %629 = vrot.lane.b32.xlu0 %v475, 127
      %v630 = vpop.permute.xlu0 %629
      %631 = vrot.lane.b32.xlu0 %v476, 127
      %v632 = vpop.permute.xlu0 %631
      %637 = vrot.lane.b32.xlu0 %v533, 127
      %v638 = vpop.permute.xlu0 %637
      %639 = vrot.lane.b32.xlu0 %v534, 127
      %v640 = vpop.permute.xlu0 %639
      %641 = vrot.lane.b32.xlu0 %v535, 127
      %v642 = vpop.permute.xlu0 %641
      %643 = vrot.lane.b32.xlu0 %v536, 127
      %v644 = vpop.permute.xlu0 %643
      %649 = vrot.lane.b32.xlu0 %v593, 127
      %v650 = vpop.permute.xlu0 %649
      %651 = vrot.lane.b32.xlu0 %v594, 127
      %v652 = vpop.permute.xlu0 %651
      %653 = vrot.lane.b32.xlu0 %v595, 127
      %v654 = vpop.permute.xlu0 %653
      %655 = vrot.lane.b32.xlu0 %v596, 127
      %v656 = vpop.permute.xlu0 %655
      %v661 = vld [vmem:[%s2] sm:$0xff]
      %v662 = vld [vmem:[%s2 + $0x8] sm:$0xff]
      %v663 = vld [vmem:[%s2 + $0x10] sm:$0xf]
      %v664 = vld [vmem:[%s2 + $0x14] sm:$0xff]
      %v665 = vld [vmem:[%s2 + $0x1c] sm:$0xff]
      %v666 = vld [vmem:[%s2 + $0x24] sm:$0xf]
      %v667 = vld [vmem:[%s2 + $0x28] sm:$0xff]
      %v668 = vld [vmem:[%s2 + $0x30] sm:$0xff]
      %v669 = vld [vmem:[%s2 + $0x38] sm:$0xf]
      %v670 = vld [vmem:[%s2 + $0x3c] sm:$0xff]
      %v671 = vld [vmem:[%s2 + $0x44] sm:$0xff]
      %v672 = vld [vmem:[%s2 + $0x4c] sm:$0xf]
      %v673 = vld [vmem:[%s2 + $0x50] sm:$0xff]
      %v674 = vld [vmem:[%s2 + $0x58] sm:$0xff]
      %v675 = vld [vmem:[%s2 + $0x60] sm:$0xf]
      %v676 = vld [vmem:[%s2 + $0x64] sm:$0xff]
      %v677 = vld [vmem:[%s2 + $0x6c] sm:$0xff]
      %v678 = vld [vmem:[%s2 + $0x74] sm:$0xf]
      %v679 = vld [vmem:[%s2 + $0x78] sm:$0xff]
      %v680 = vld [vmem:[%s2 + $0x80] sm:$0xff]
      %v681 = vld [vmem:[%s2 + $0x88] sm:$0xf]
      %v682 = vld [vmem:[%s2 + $0x8c] sm:$0xff]
      %v683 = vld [vmem:[%s2 + $0x94] sm:$0xff]
      %v684 = vld [vmem:[%s2 + $0x9c] sm:$0xf]
      %v685 = vld [vmem:[%s2 + $0xa0] sm:$0xff]
      %v686 = vld [vmem:[%s2 + $0xa8] sm:$0xff]
      %v687 = vld [vmem:[%s2 + $0xb0] sm:$0xf]
      %v688 = vld [vmem:[%s2 + $0xb4] sm:$0xff]
      %v689 = vld [vmem:[%s2 + $0xbc] sm:$0xff]
      %v690 = vld [vmem:[%s2 + $0xc4] sm:$0xf]
      %v691 = vld [vmem:[%s2 + $0xc8] sm:$0xff]
      %v692 = vld [vmem:[%s2 + $0xd0] sm:$0xff]
      %v693 = vld [vmem:[%s2 + $0xd8] sm:$0xf]
      %v694 = vld [vmem:[%s2 + $0xdc] sm:$0xff]
      %v695 = vld [vmem:[%s2 + $0xe4] sm:$0xff]
      %v696 = vld [vmem:[%s2 + $0xec] sm:$0xf]
      %v697 = vld [vmem:[%s2 + $0xf0] sm:$0xff]
      %v698 = vld [vmem:[%s2 + $0xf8] sm:$0xff]
      %v699 = vld [vmem:[%s2 + $0x100] sm:$0xf]
      %v700 = vld [vmem:[%s2 + $0x104] sm:$0xff]
      %v701 = vld [vmem:[%s2 + $0x10c] sm:$0xff]
      %v702 = vld [vmem:[%s2 + $0x114] sm:$0xf]
      %v703 = vld [vmem:[%s2 + $0x118] sm:$0xff]
      %v704 = vld [vmem:[%s2 + $0x120] sm:$0xff]
      %v705 = vld [vmem:[%s2 + $0x128] sm:$0xf]
      %v706 = vld [vmem:[%s2 + $0x12c] sm:$0xff]
      %v707 = vld [vmem:[%s2 + $0x134] sm:$0xff]
      %v708 = vld [vmem:[%s2 + $0x13c] sm:$0xf]
      %v709 = vld [vmem:[%s3] sm:$0xff]
      %v710 = vld [vmem:[%s3 + $0x8] sm:$0xff]
      %v711 = vld [vmem:[%s3 + $0x10] sm:$0xff]
      %v712 = vld [vmem:[%s3 + $0x18] sm:$0xff]
      %v713 = vld [vmem:[%s3 + $0x20] sm:$0xff]
      %v714 = vld [vmem:[%s3 + $0x28] sm:$0xff]
      %v715 = vld [vmem:[%s3 + $0x30] sm:$0xff]
      %v716 = vld [vmem:[%s3 + $0x38] sm:$0xff]
      %v717 = vld [vmem:[%s3 + $0x40] sm:$0xff]
      %v718 = vld [vmem:[%s3 + $0x48] sm:$0xff]
      %v719 = vld [vmem:[%s3 + $0x50] sm:$0xff]
      %v720 = vld [vmem:[%s3 + $0x58] sm:$0xff]
      %v721 = vld [vmem:[%s3 + $0x60] sm:$0xff]
      %v722 = vld [vmem:[%s3 + $0x68] sm:$0xff]
      %v723 = vld [vmem:[%s3 + $0x70] sm:$0xff]
      %v724 = vld [vmem:[%s3 + $0x78] sm:$0xff]
      %v725 = vld [vmem:[%s4] sm:$0xff]
      %v726 = vld [vmem:[%s4 + $0x8] sm:$0xff]
      %v727 = vld [vmem:[%s4 + $0x10] sm:$0xff]
      %v728 = vld [vmem:[%s4 + $0x18] sm:$0xff]
      %v729 = vld [vmem:[%s4 + $0x20] sm:$0xff]
      %v730 = vld [vmem:[%s4 + $0x28] sm:$0xff]
      %v731 = vld [vmem:[%s4 + $0x30] sm:$0xff]
      %v732 = vld [vmem:[%s4 + $0x38] sm:$0xff]
      %v733 = vld [vmem:[%s4 + $0x40] sm:$0xff]
      %v734 = vld [vmem:[%s4 + $0x48] sm:$0xff]
      %v735 = vld [vmem:[%s4 + $0x50] sm:$0xff]
      %v736 = vld [vmem:[%s4 + $0x58] sm:$0xff]
      %v737 = vld [vmem:[%s4 + $0x60] sm:$0xff]
      %v738 = vld [vmem:[%s4 + $0x68] sm:$0xff]
      %v739 = vld [vmem:[%s4 + $0x70] sm:$0xff]
      %v740 = vld [vmem:[%s4 + $0x78] sm:$0xff]
      %v789 = vunpack.c.l.b16 %v661
      %v790 = vunpack.c.h.b16 %v661
      %v791 = vunpack.c.l.b16 %v662
      %v792 = vunpack.c.h.b16 %v662
      %v793 = vunpack.c.l.b16 %v663
      %v794 = vunpack.c.l.b16 %v664
      %v795 = vunpack.c.h.b16 %v664
      %v796 = vunpack.c.l.b16 %v665
      %v797 = vunpack.c.h.b16 %v665
      %v798 = vunpack.c.l.b16 %v666
      %v799 = vunpack.c.l.b16 %v667
      %v800 = vunpack.c.h.b16 %v667
      %v801 = vunpack.c.l.b16 %v668
      %v802 = vunpack.c.h.b16 %v668
      %v803 = vunpack.c.l.b16 %v669
      %v804 = vunpack.c.l.b16 %v670
      %v805 = vunpack.c.h.b16 %v670
      %v806 = vunpack.c.l.b16 %v671
      %v807 = vunpack.c.h.b16 %v671
      %v808 = vunpack.c.l.b16 %v672
      %v809 = vunpack.c.l.b16 %v673
      %v810 = vunpack.c.h.b16 %v673
      %v811 = vunpack.c.l.b16 %v674
      %v812 = vunpack.c.h.b16 %v674
      %v813 = vunpack.c.l.b16 %v675
      %v814 = vunpack.c.l.b16 %v676
      %v815 = vunpack.c.h.b16 %v676
      %v816 = vunpack.c.l.b16 %v677
      %v817 = vunpack.c.h.b16 %v677
      %v818 = vunpack.c.l.b16 %v678
      %v819 = vunpack.c.l.b16 %v679
      %v820 = vunpack.c.h.b16 %v679
      %v821 = vunpack.c.l.b16 %v680
      %v822 = vunpack.c.h.b16 %v680
      %v823 = vunpack.c.l.b16 %v681
      %v824 = vunpack.c.l.b16 %v682
      %v825 = vunpack.c.h.b16 %v682
      %v826 = vunpack.c.l.b16 %v683
      %v827 = vunpack.c.h.b16 %v683
      %v828 = vunpack.c.l.b16 %v684
      %v829 = vunpack.c.l.b16 %v685
      %v830 = vunpack.c.h.b16 %v685
      %v831 = vunpack.c.l.b16 %v686
      %v832 = vunpack.c.h.b16 %v686
      %v833 = vunpack.c.l.b16 %v687
      %v834 = vunpack.c.l.b16 %v688
      %v835 = vunpack.c.h.b16 %v688
      %v836 = vunpack.c.l.b16 %v689
      %v837 = vunpack.c.h.b16 %v689
      %v838 = vunpack.c.l.b16 %v690
      %v839 = vunpack.c.l.b16 %v691
      %v840 = vunpack.c.h.b16 %v691
      %v841 = vunpack.c.l.b16 %v692
      %v842 = vunpack.c.h.b16 %v692
      %v843 = vunpack.c.l.b16 %v693
      %v844 = vunpack.c.l.b16 %v694
      %v845 = vunpack.c.h.b16 %v694
      %v846 = vunpack.c.l.b16 %v695
      %v847 = vunpack.c.h.b16 %v695
      %v848 = vunpack.c.l.b16 %v696
      %v849 = vunpack.c.l.b16 %v697
      %v850 = vunpack.c.h.b16 %v697
      %v851 = vunpack.c.l.b16 %v698
      %v852 = vunpack.c.h.b16 %v698
      %v853 = vunpack.c.l.b16 %v699
      %v854 = vunpack.c.l.b16 %v700
      %v855 = vunpack.c.h.b16 %v700
      %v856 = vunpack.c.l.b16 %v701
      %v857 = vunpack.c.h.b16 %v701
      %v858 = vunpack.c.l.b16 %v702
      %v859 = vunpack.c.l.b16 %v703
      %v860 = vunpack.c.h.b16 %v703
      %v861 = vunpack.c.l.b16 %v704
      %v862 = vunpack.c.h.b16 %v704
      %v863 = vunpack.c.l.b16 %v705
      %v864 = vunpack.c.l.b16 %v706
      %v865 = vunpack.c.h.b16 %v706
      %v866 = vunpack.c.l.b16 %v707
      %v867 = vunpack.c.h.b16 %v707
      %v868 = vunpack.c.l.b16 %v708
      %v869 = vpack.c.b16 %v794, %v789
      %v870 = vpack.c.b16 %v795, %v790
      %v871 = vpack.c.b16 %v796, %v791
      %v872 = vpack.c.b16 %v797, %v792
      %v873 = vpack.c.b16 %v798, %v793
      %v874 = vpack.c.b16 %v804, %v799
      %v875 = vpack.c.b16 %v805, %v800
      %v876 = vpack.c.b16 %v806, %v801
      %v877 = vpack.c.b16 %v807, %v802
      %v878 = vpack.c.b16 %v808, %v803
      %v879 = vpack.c.b16 %v814, %v809
      %v880 = vpack.c.b16 %v815, %v810
      %v881 = vpack.c.b16 %v816, %v811
      %v882 = vpack.c.b16 %v817, %v812
      %v883 = vpack.c.b16 %v818, %v813
      %v884 = vpack.c.b16 %v824, %v819
      %v885 = vpack.c.b16 %v825, %v820
      %v886 = vpack.c.b16 %v826, %v821
      %v887 = vpack.c.b16 %v827, %v822
      %v888 = vpack.c.b16 %v828, %v823
      %v889 = vpack.c.b16 %v834, %v829
      %v890 = vpack.c.b16 %v835, %v830
      %v891 = vpack.c.b16 %v836, %v831
      %v892 = vpack.c.b16 %v837, %v832
      %v893 = vpack.c.b16 %v838, %v833
      %v894 = vpack.c.b16 %v844, %v839
      %v895 = vpack.c.b16 %v845, %v840
      %v896 = vpack.c.b16 %v846, %v841
      %v897 = vpack.c.b16 %v847, %v842
      %v898 = vpack.c.b16 %v848, %v843
      %v899 = vpack.c.b16 %v854, %v849
      %v900 = vpack.c.b16 %v855, %v850
      %v901 = vpack.c.b16 %v856, %v851
      %v902 = vpack.c.b16 %v857, %v852
      %v903 = vpack.c.b16 %v858, %v853
      %v904 = vpack.c.b16 %v864, %v859
      %v905 = vpack.c.b16 %v865, %v860
      %v906 = vpack.c.b16 %v866, %v861
      %v907 = vpack.c.b16 %v867, %v862
      %v908 = vpack.c.b16 %v868, %v863
      %vm941 = vcmask 523264
      %v943 = vsel %vm941, %v873, 0
      %v946 = vsel %vm941, %v878, 0
      %v949 = vsel %vm941, %v883, 0
      %v952 = vsel %vm941, %v888, 0
      %v955 = vsel %vm941, %v893, 0
      %v958 = vsel %vm941, %v898, 0
      %v961 = vsel %vm941, %v903, 0
      %v964 = vsel %vm941, %v908, 0
      %966 = vmatpush.bf16.msra.mxu0 %v416
      %967 = vmatpush.bf16.msra.mxu0 %v415
      %968 = vmatpush.bf16.msra.mxu0 %v414
      %969 = vmatpush.bf16.msra.mxu0 %v413
      %970 = vmatpush.bf16.msra.mxu0 %v392
      %971 = vmatpush.bf16.msra.mxu0 %v391
      %972 = vmatpush.bf16.msra.mxu0 %v390
      %973 = vmatpush.bf16.msra.mxu0 %v389
      %974 = vmatmul.bf16.gmra.mxu0 %v869
      %v975 = vpop.f32.mrf.mxu0
      %v976 = vadd.f32 0.0, %v975
      %v977 = vpop.f32.mrf.mxu0
      %v978 = vadd.f32 0.0, %v977
      %979 = vmatmul.bf16.gmra.mxu0 %v874
      %v980 = vpop.f32.mrf.mxu0
      %v981 = vadd.f32 0.0, %v980
      %v982 = vpop.f32.mrf.mxu0
      %v983 = vadd.f32 0.0, %v982
      %984 = vmatmul.bf16.gmra.mxu0 %v879
      %v985 = vpop.f32.mrf.mxu0
      %v986 = vadd.f32 0.0, %v985
      %v987 = vpop.f32.mrf.mxu0
      %v988 = vadd.f32 0.0, %v987
      %989 = vmatmul.bf16.gmra.mxu0 %v884
      %v990 = vpop.f32.mrf.mxu0
      %v991 = vadd.f32 0.0, %v990
      %v992 = vpop.f32.mrf.mxu0
      %v993 = vadd.f32 0.0, %v992
      %994 = vmatmul.bf16.gmra.mxu0 %v889
      %v995 = vpop.f32.mrf.mxu0
      %v996 = vadd.f32 0.0, %v995
      %v997 = vpop.f32.mrf.mxu0
      %v998 = vadd.f32 0.0, %v997
      %999 = vmatmul.bf16.gmra.mxu0 %v894
      %v1000 = vpop.f32.mrf.mxu0
      %v1001 = vadd.f32 0.0, %v1000
      %v1002 = vpop.f32.mrf.mxu0
      %v1003 = vadd.f32 0.0, %v1002
      %1004 = vmatmul.bf16.gmra.mxu0 %v899
      %v1005 = vpop.f32.mrf.mxu0
      %v1006 = vadd.f32 0.0, %v1005
      %v1007 = vpop.f32.mrf.mxu0
      %v1008 = vadd.f32 0.0, %v1007
      %1009 = vmatmul.bf16.gmra.mxu0 %v904
      %v1010 = vpop.f32.mrf.mxu0
      %v1011 = vadd.f32 0.0, %v1010
      %v1012 = vpop.f32.mrf.mxu0
      %v1013 = vadd.f32 0.0, %v1012
      %1014 = vdwg.mxu0
      %1015 = vmatpush.bf16.msra.mxu0 %v452
      %1016 = vmatpush.bf16.msra.mxu0 %v451
      %1017 = vmatpush.bf16.msra.mxu0 %v450
      %1018 = vmatpush.bf16.msra.mxu0 %v449
      %1019 = vmatpush.bf16.msra.mxu0 %v428
      %1020 = vmatpush.bf16.msra.mxu0 %v426
      %1021 = vmatpush.bf16.msra.mxu0 %v424
      %1022 = vmatpush.bf16.msra.mxu0 %v422
      %1023 = vmatmul.bf16.gmra.mxu0 %v870
      %v1024 = vpop.f32.mrf.mxu0
      %v1025 = vadd.f32 %v976, %v1024
      %v1026 = vpop.f32.mrf.mxu0
      %v1027 = vadd.f32 %v978, %v1026
      %1028 = vmatmul.bf16.gmra.mxu0 %v875
      %v1029 = vpop.f32.mrf.mxu0
      %v1030 = vadd.f32 %v981, %v1029
      %v1031 = vpop.f32.mrf.mxu0
      %v1032 = vadd.f32 %v983, %v1031
      %1033 = vmatmul.bf16.gmra.mxu0 %v880
      %v1034 = vpop.f32.mrf.mxu0
      %v1035 = vadd.f32 %v986, %v1034
      %v1036 = vpop.f32.mrf.mxu0
      %v1037 = vadd.f32 %v988, %v1036
      %1038 = vmatmul.bf16.gmra.mxu0 %v885
      %v1039 = vpop.f32.mrf.mxu0
      %v1040 = vadd.f32 %v991, %v1039
      %v1041 = vpop.f32.mrf.mxu0
      %v1042 = vadd.f32 %v993, %v1041
      %1043 = vmatmul.bf16.gmra.mxu0 %v890
      %v1044 = vpop.f32.mrf.mxu0
      %v1045 = vadd.f32 %v996, %v1044
      %v1046 = vpop.f32.mrf.mxu0
      %v1047 = vadd.f32 %v998, %v1046
      %1048 = vmatmul.bf16.gmra.mxu0 %v895
      %v1049 = vpop.f32.mrf.mxu0
      %v1050 = vadd.f32 %v1001, %v1049
      %v1051 = vpop.f32.mrf.mxu0
      %v1052 = vadd.f32 %v1003, %v1051
      %1053 = vmatmul.bf16.gmra.mxu0 %v900
      %v1054 = vpop.f32.mrf.mxu0
      %v1055 = vadd.f32 %v1006, %v1054
      %v1056 = vpop.f32.mrf.mxu0
      %v1057 = vadd.f32 %v1008, %v1056
      %1058 = vmatmul.bf16.gmra.mxu0 %v905
      %v1059 = vpop.f32.mrf.mxu0
      %v1060 = vadd.f32 %v1011, %v1059
      %v1061 = vpop.f32.mrf.mxu0
      %v1062 = vadd.f32 %v1013, %v1061
      %1063 = vdwg.mxu0
      %1064 = vmatpush.bf16.msra.mxu0 %v488
      %1065 = vmatpush.bf16.msra.mxu0 %v486
      %1066 = vmatpush.bf16.msra.mxu0 %v484
      %1067 = vmatpush.bf16.msra.mxu0 %v482
      %1068 = vmatpush.bf16.msra.mxu0 %v476
      %1069 = vmatpush.bf16.msra.mxu0 %v475
      %1070 = vmatpush.bf16.msra.mxu0 %v474
      %1071 = vmatpush.bf16.msra.mxu0 %v473
      %1072 = vmatmul.bf16.gmra.mxu0 %v871
      %v1073 = vpop.f32.mrf.mxu0
      %v1074 = vadd.f32 %v1025, %v1073
      %v1075 = vpop.f32.mrf.mxu0
      %v1076 = vadd.f32 %v1027, %v1075
      %1077 = vmatmul.bf16.gmra.mxu0 %v876
      %v1078 = vpop.f32.mrf.mxu0
      %v1079 = vadd.f32 %v1030, %v1078
      %v1080 = vpop.f32.mrf.mxu0
      %v1081 = vadd.f32 %v1032, %v1080
      %1082 = vmatmul.bf16.gmra.mxu0 %v881
      %v1083 = vpop.f32.mrf.mxu0
      %v1084 = vadd.f32 %v1035, %v1083
      %v1085 = vpop.f32.mrf.mxu0
      %v1086 = vadd.f32 %v1037, %v1085
      %1087 = vmatmul.bf16.gmra.mxu0 %v886
      %v1088 = vpop.f32.mrf.mxu0
      %v1089 = vadd.f32 %v1040, %v1088
      %v1090 = vpop.f32.mrf.mxu0
      %v1091 = vadd.f32 %v1042, %v1090
      %1092 = vmatmul.bf16.gmra.mxu0 %v891
      %v1093 = vpop.f32.mrf.mxu0
      %v1094 = vadd.f32 %v1045, %v1093
      %v1095 = vpop.f32.mrf.mxu0
      %v1096 = vadd.f32 %v1047, %v1095
      %1097 = vmatmul.bf16.gmra.mxu0 %v896
      %v1098 = vpop.f32.mrf.mxu0
      %v1099 = vadd.f32 %v1050, %v1098
      %v1100 = vpop.f32.mrf.mxu0
      %v1101 = vadd.f32 %v1052, %v1100
      %1102 = vmatmul.bf16.gmra.mxu0 %v901
      %v1103 = vpop.f32.mrf.mxu0
      %v1104 = vadd.f32 %v1055, %v1103
      %v1105 = vpop.f32.mrf.mxu0
      %v1106 = vadd.f32 %v1057, %v1105
      %1107 = vmatmul.bf16.gmra.mxu0 %v906
      %v1108 = vpop.f32.mrf.mxu0
      %v1109 = vadd.f32 %v1060, %v1108
      %v1110 = vpop.f32.mrf.mxu0
      %v1111 = vadd.f32 %v1062, %v1110
      %1112 = vdwg.mxu0
      %1113 = vmatpush.bf16.msra.mxu0 %v536
      %1114 = vmatpush.bf16.msra.mxu0 %v535
      %1115 = vmatpush.bf16.msra.mxu0 %v534
      %1116 = vmatpush.bf16.msra.mxu0 %v533
      %1117 = vmatpush.bf16.msra.mxu0 %v512
      %1118 = vmatpush.bf16.msra.mxu0 %v511
      %1119 = vmatpush.bf16.msra.mxu0 %v510
      %1120 = vmatpush.bf16.msra.mxu0 %v509
      %1121 = vmatmul.bf16.gmra.mxu0 %v872
      %v1122 = vpop.f32.mrf.mxu0
      %v1123 = vadd.f32 %v1074, %v1122
      %v1124 = vpop.f32.mrf.mxu0
      %v1125 = vadd.f32 %v1076, %v1124
      %1126 = vmatmul.bf16.gmra.mxu0 %v877
      %v1127 = vpop.f32.mrf.mxu0
      %v1128 = vadd.f32 %v1079, %v1127
      %v1129 = vpop.f32.mrf.mxu0
      %v1130 = vadd.f32 %v1081, %v1129
      %1131 = vmatmul.bf16.gmra.mxu0 %v882
      %v1132 = vpop.f32.mrf.mxu0
      %v1133 = vadd.f32 %v1084, %v1132
      %v1134 = vpop.f32.mrf.mxu0
      %v1135 = vadd.f32 %v1086, %v1134
      %1136 = vmatmul.bf16.gmra.mxu0 %v887
      %v1137 = vpop.f32.mrf.mxu0
      %v1138 = vadd.f32 %v1089, %v1137
      %v1139 = vpop.f32.mrf.mxu0
      %v1140 = vadd.f32 %v1091, %v1139
      %1141 = vmatmul.bf16.gmra.mxu0 %v892
      %v1142 = vpop.f32.mrf.mxu0
      %v1143 = vadd.f32 %v1094, %v1142
      %v1144 = vpop.f32.mrf.mxu0
      %v1145 = vadd.f32 %v1096, %v1144
      %1146 = vmatmul.bf16.gmra.mxu0 %v897
      %v1147 = vpop.f32.mrf.mxu0
      %v1148 = vadd.f32 %v1099, %v1147
      %v1149 = vpop.f32.mrf.mxu0
      %v1150 = vadd.f32 %v1101, %v1149
      %1151 = vmatmul.bf16.gmra.mxu0 %v902
      %v1152 = vpop.f32.mrf.mxu0
      %v1153 = vadd.f32 %v1104, %v1152
      %v1154 = vpop.f32.mrf.mxu0
      %v1155 = vadd.f32 %v1106, %v1154
      %1156 = vmatmul.bf16.gmra.mxu0 %v907
      %v1157 = vpop.f32.mrf.mxu0
      %v1158 = vadd.f32 %v1109, %v1157
      %v1159 = vpop.f32.mrf.mxu0
      %v1160 = vadd.f32 %v1111, %v1159
      %1161 = vdwg.mxu0
      %1162 = vmatpush.bf16.msra.mxu0 0
      %1163 = vmatpush.bf16.msra.mxu0 0
      %1164 = vmatpush.bf16.msra.mxu0 0
      %1165 = vmatpush.bf16.msra.mxu0 0
      %1166 = vmatpush.bf16.msra.mxu0 %v548
      %1167 = vmatpush.bf16.msra.mxu0 %v546
      %1168 = vmatpush.bf16.msra.mxu0 %v544
      %1169 = vmatpush.bf16.msra.mxu0 %v542
      %1170 = vmatmul.bf16.gmra.mxu0 %v943
      %v1171 = vpop.f32.mrf.mxu0
      %v1172 = vadd.f32 %v1123, %v1171
      %v1173 = vpop.f32.mrf.mxu0
      %v1174 = vadd.f32 %v1125, %v1173
      %1175 = vmatmul.bf16.gmra.mxu0 %v946
      %v1176 = vpop.f32.mrf.mxu0
      %v1177 = vadd.f32 %v1128, %v1176
      %v1178 = vpop.f32.mrf.mxu0
      %v1179 = vadd.f32 %v1130, %v1178
      %1180 = vmatmul.bf16.gmra.mxu0 %v949
      %v1181 = vpop.f32.mrf.mxu0
      %v1182 = vadd.f32 %v1133, %v1181
      %v1183 = vpop.f32.mrf.mxu0
      %v1184 = vadd.f32 %v1135, %v1183
      %1185 = vmatmul.bf16.gmra.mxu0 %v952
      %v1186 = vpop.f32.mrf.mxu0
      %v1187 = vadd.f32 %v1138, %v1186
      %v1188 = vpop.f32.mrf.mxu0
      %v1189 = vadd.f32 %v1140, %v1188
      %1190 = vmatmul.bf16.gmra.mxu0 %v955
      %v1191 = vpop.f32.mrf.mxu0
      %v1192 = vadd.f32 %v1143, %v1191
      %v1193 = vpop.f32.mrf.mxu0
      %v1194 = vadd.f32 %v1145, %v1193
      %1195 = vmatmul.bf16.gmra.mxu0 %v958
      %v1196 = vpop.f32.mrf.mxu0
      %v1197 = vadd.f32 %v1148, %v1196
      %v1198 = vpop.f32.mrf.mxu0
      %v1199 = vadd.f32 %v1150, %v1198
      %1200 = vmatmul.bf16.gmra.mxu0 %v961
      %v1201 = vpop.f32.mrf.mxu0
      %v1202 = vadd.f32 %v1153, %v1201
      %v1203 = vpop.f32.mrf.mxu0
      %v1204 = vadd.f32 %v1155, %v1203
      %1205 = vmatmul.bf16.gmra.mxu0 %v964
      %v1206 = vpop.f32.mrf.mxu0
      %v1207 = vadd.f32 %v1158, %v1206
      %v1208 = vpop.f32.mrf.mxu0
      %v1209 = vadd.f32 %v1160, %v1208
      %1210 = vdwg.mxu0
      %1212 = vset.pattern.permute.xlu0 0
      %1213 = vperm.xlu0 %1212, %v709
      %v1214 = vpop.permute.xlu0 %1213
      %1217 = vset.pattern.permute.xlu0 0
      %1218 = vperm.xlu0 %1217, %v710
      %v1219 = vpop.permute.xlu0 %1218
      %1222 = vset.pattern.permute.xlu0 0
      %1223 = vperm.xlu0 %1222, %v711
      %v1224 = vpop.permute.xlu0 %1223
      %1227 = vset.pattern.permute.xlu0 0
      %1228 = vperm.xlu0 %1227, %v712
      %v1229 = vpop.permute.xlu0 %1228
      %1232 = vset.pattern.permute.xlu0 0
      %1233 = vperm.xlu0 %1232, %v713
      %v1234 = vpop.permute.xlu0 %1233
      %1237 = vset.pattern.permute.xlu0 0
      %1238 = vperm.xlu0 %1237, %v714
      %v1239 = vpop.permute.xlu0 %1238
      %1242 = vset.pattern.permute.xlu0 0
      %1243 = vperm.xlu0 %1242, %v715
      %v1244 = vpop.permute.xlu0 %1243
      %1247 = vset.pattern.permute.xlu0 0
      %1248 = vperm.xlu0 %1247, %v716
      %v1249 = vpop.permute.xlu0 %1248
      %1252 = vset.pattern.permute.xlu0 0
      %1253 = vperm.xlu0 %1252, %v717
      %v1254 = vpop.permute.xlu0 %1253
      %1257 = vset.pattern.permute.xlu0 0
      %1258 = vperm.xlu0 %1257, %v718
      %v1259 = vpop.permute.xlu0 %1258
      %1262 = vset.pattern.permute.xlu0 0
      %1263 = vperm.xlu0 %1262, %v719
      %v1264 = vpop.permute.xlu0 %1263
      %1267 = vset.pattern.permute.xlu0 0
      %1268 = vperm.xlu0 %1267, %v720
      %v1269 = vpop.permute.xlu0 %1268
      %1272 = vset.pattern.permute.xlu0 0
      %1273 = vperm.xlu0 %1272, %v721
      %v1274 = vpop.permute.xlu0 %1273
      %1277 = vset.pattern.permute.xlu0 0
      %1278 = vperm.xlu0 %1277, %v722
      %v1279 = vpop.permute.xlu0 %1278
      %1282 = vset.pattern.permute.xlu0 0
      %1283 = vperm.xlu0 %1282, %v723
      %v1284 = vpop.permute.xlu0 %1283
      %1287 = vset.pattern.permute.xlu0 0
      %1288 = vperm.xlu0 %1287, %v724
      %v1289 = vpop.permute.xlu0 %1288
      %v1291 = vmul.f32 %v1172, %v1214
      %v1292 = vmul.f32 %v1174, %v1219
      %v1293 = vmul.f32 %v1177, %v1224
      %v1294 = vmul.f32 %v1179, %v1229
      %v1295 = vmul.f32 %v1182, %v1234
      %v1296 = vmul.f32 %v1184, %v1239
      %v1297 = vmul.f32 %v1187, %v1244
      %v1298 = vmul.f32 %v1189, %v1249
      %v1299 = vmul.f32 %v1192, %v1254
      %v1300 = vmul.f32 %v1194, %v1259
      %v1301 = vmul.f32 %v1197, %v1264
      %v1302 = vmul.f32 %v1199, %v1269
      %v1303 = vmul.f32 %v1202, %v1274
      %v1304 = vmul.f32 %v1204, %v1279
      %v1305 = vmul.f32 %v1207, %v1284
      %v1306 = vmul.f32 %v1209, %v1289
      %1308 = vset.pattern.permute.xlu0 0
      %1309 = vperm.xlu0 %1308, %v725
      %v1310 = vpop.permute.xlu0 %1309
      %1313 = vset.pattern.permute.xlu0 0
      %1314 = vperm.xlu0 %1313, %v726
      %v1315 = vpop.permute.xlu0 %1314
      %1318 = vset.pattern.permute.xlu0 0
      %1319 = vperm.xlu0 %1318, %v727
      %v1320 = vpop.permute.xlu0 %1319
      %1323 = vset.pattern.permute.xlu0 0
      %1324 = vperm.xlu0 %1323, %v728
      %v1325 = vpop.permute.xlu0 %1324
      %1328 = vset.pattern.permute.xlu0 0
      %1329 = vperm.xlu0 %1328, %v729
      %v1330 = vpop.permute.xlu0 %1329
      %1333 = vset.pattern.permute.xlu0 0
      %1334 = vperm.xlu0 %1333, %v730
      %v1335 = vpop.permute.xlu0 %1334
      %1338 = vset.pattern.permute.xlu0 0
      %1339 = vperm.xlu0 %1338, %v731
      %v1340 = vpop.permute.xlu0 %1339
      %1343 = vset.pattern.permute.xlu0 0
      %1344 = vperm.xlu0 %1343, %v732
      %v1345 = vpop.permute.xlu0 %1344
      %1348 = vset.pattern.permute.xlu0 0
      %1349 = vperm.xlu0 %1348, %v733
      %v1350 = vpop.permute.xlu0 %1349
      %1353 = vset.pattern.permute.xlu0 0
      %1354 = vperm.xlu0 %1353, %v734
      %v1355 = vpop.permute.xlu0 %1354
      %1358 = vset.pattern.permute.xlu0 0
      %1359 = vperm.xlu0 %1358, %v735
      %v1360 = vpop.permute.xlu0 %1359
      %1363 = vset.pattern.permute.xlu0 0
      %1364 = vperm.xlu0 %1363, %v736
      %v1365 = vpop.permute.xlu0 %1364
      %1368 = vset.pattern.permute.xlu0 0
      %1369 = vperm.xlu0 %1368, %v737
      %v1370 = vpop.permute.xlu0 %1369
      %1373 = vset.pattern.permute.xlu0 0
      %1374 = vperm.xlu0 %1373, %v738
      %v1375 = vpop.permute.xlu0 %1374
      %1378 = vset.pattern.permute.xlu0 0
      %1379 = vperm.xlu0 %1378, %v739
      %v1380 = vpop.permute.xlu0 %1379
      %1383 = vset.pattern.permute.xlu0 0
      %1384 = vperm.xlu0 %1383, %v740
      %v1385 = vpop.permute.xlu0 %1384
      %v1387 = vadd.f32 %v1291, %v1310
      %v1388 = vadd.f32 %v1292, %v1315
      %v1389 = vadd.f32 %v1293, %v1320
      %v1390 = vadd.f32 %v1294, %v1325
      %v1391 = vadd.f32 %v1295, %v1330
      %v1392 = vadd.f32 %v1296, %v1335
      %v1393 = vadd.f32 %v1297, %v1340
      %v1394 = vadd.f32 %v1298, %v1345
      %v1395 = vadd.f32 %v1299, %v1350
      %v1396 = vadd.f32 %v1300, %v1355
      %v1397 = vadd.f32 %v1301, %v1360
      %v1398 = vadd.f32 %v1302, %v1365
      %v1399 = vadd.f32 %v1303, %v1370
      %v1400 = vadd.f32 %v1304, %v1375
      %v1401 = vadd.f32 %v1305, %v1380
      %v1402 = vadd.f32 %v1306, %v1385
      %v1403 = vmax.f32 %v1387, 0.0
      %v1404 = vmax.f32 %v1388, 0.0
      %v1405 = vmax.f32 %v1389, 0.0
      %v1406 = vmax.f32 %v1390, 0.0
      %v1407 = vmax.f32 %v1391, 0.0
      %v1408 = vmax.f32 %v1392, 0.0
      %v1409 = vmax.f32 %v1393, 0.0
      %v1410 = vmax.f32 %v1394, 0.0
      %v1411 = vmax.f32 %v1395, 0.0
      %v1412 = vmax.f32 %v1396, 0.0
      %v1413 = vmax.f32 %v1397, 0.0
      %v1414 = vmax.f32 %v1398, 0.0
      %v1415 = vmax.f32 %v1399, 0.0
      %v1416 = vmax.f32 %v1400, 0.0
      %v1417 = vmax.f32 %v1401, 0.0
      %v1418 = vmax.f32 %v1402, 0.0
      %1419 = vmatpush.bf16.msra.mxu0 %v428
      %1420 = vmatpush.bf16.msra.mxu0 %v426
      %1421 = vmatpush.bf16.msra.mxu0 %v424
      %1422 = vmatpush.bf16.msra.mxu0 %v422
      %1423 = vmatpush.bf16.msra.mxu0 %v416
      %1424 = vmatpush.bf16.msra.mxu0 %v415
      %1425 = vmatpush.bf16.msra.mxu0 %v414
      %1426 = vmatpush.bf16.msra.mxu0 %v413
      %1427 = vmatmul.bf16.gmra.mxu0 %v869
      %v1428 = vpop.f32.mrf.mxu0
      %v1429 = vadd.f32 0.0, %v1428
      %v1430 = vpop.f32.mrf.mxu0
      %v1431 = vadd.f32 0.0, %v1430
      %1432 = vmatmul.bf16.gmra.mxu0 %v874
      %v1433 = vpop.f32.mrf.mxu0
      %v1434 = vadd.f32 0.0, %v1433
      %v1435 = vpop.f32.mrf.mxu0
      %v1436 = vadd.f32 0.0, %v1435
      %1437 = vmatmul.bf16.gmra.mxu0 %v879
      %v1438 = vpop.f32.mrf.mxu0
      %v1439 = vadd.f32 0.0, %v1438
      %v1440 = vpop.f32.mrf.mxu0
      %v1441 = vadd.f32 0.0, %v1440
      %1442 = vmatmul.bf16.gmra.mxu0 %v884
      %v1443 = vpop.f32.mrf.mxu0
      %v1444 = vadd.f32 0.0, %v1443
      %v1445 = vpop.f32.mrf.mxu0
      %v1446 = vadd.f32 0.0, %v1445
      %1447 = vmatmul.bf16.gmra.mxu0 %v889
      %v1448 = vpop.f32.mrf.mxu0
      %v1449 = vadd.f32 0.0, %v1448
      %v1450 = vpop.f32.mrf.mxu0
      %v1451 = vadd.f32 0.0, %v1450
      %1452 = vmatmul.bf16.gmra.mxu0 %v894
      %v1453 = vpop.f32.mrf.mxu0
      %v1454 = vadd.f32 0.0, %v1453
      %v1455 = vpop.f32.mrf.mxu0
      %v1456 = vadd.f32 0.0, %v1455
      %1457 = vmatmul.bf16.gmra.mxu0 %v899
      %v1458 = vpop.f32.mrf.mxu0
      %v1459 = vadd.f32 0.0, %v1458
      %v1460 = vpop.f32.mrf.mxu0
      %v1461 = vadd.f32 0.0, %v1460
      %1462 = vmatmul.bf16.gmra.mxu0 %v904
      %v1463 = vpop.f32.mrf.mxu0
      %v1464 = vadd.f32 0.0, %v1463
      %v1465 = vpop.f32.mrf.mxu0
      %v1466 = vadd.f32 0.0, %v1465
      %1467 = vdwg.mxu0
      %1468 = vmatpush.bf16.msra.mxu0 %v476
      %1469 = vmatpush.bf16.msra.mxu0 %v475
      %1470 = vmatpush.bf16.msra.mxu0 %v474
      %1471 = vmatpush.bf16.msra.mxu0 %v473
      %1472 = vmatpush.bf16.msra.mxu0 %v620
      %1473 = vmatpush.bf16.msra.mxu0 %v618
      %1474 = vmatpush.bf16.msra.mxu0 %v616
      %1475 = vmatpush.bf16.msra.mxu0 %v614
      %1476 = vmatmul.bf16.gmra.mxu0 %v870
      %v1477 = vpop.f32.mrf.mxu0
      %v1478 = vadd.f32 %v1429, %v1477
      %v1479 = vpop.f32.mrf.mxu0
      %v1480 = vadd.f32 %v1431, %v1479
      %1481 = vmatmul.bf16.gmra.mxu0 %v875
      %v1482 = vpop.f32.mrf.mxu0
      %v1483 = vadd.f32 %v1434, %v1482
      %v1484 = vpop.f32.mrf.mxu0
      %v1485 = vadd.f32 %v1436, %v1484
      %1486 = vmatmul.bf16.gmra.mxu0 %v880
      %v1487 = vpop.f32.mrf.mxu0
      %v1488 = vadd.f32 %v1439, %v1487
      %v1489 = vpop.f32.mrf.mxu0
      %v1490 = vadd.f32 %v1441, %v1489
      %1491 = vmatmul.bf16.gmra.mxu0 %v885
      %v1492 = vpop.f32.mrf.mxu0
      %v1493 = vadd.f32 %v1444, %v1492
      %v1494 = vpop.f32.mrf.mxu0
      %v1495 = vadd.f32 %v1446, %v1494
      %1496 = vmatmul.bf16.gmra.mxu0 %v890
      %v1497 = vpop.f32.mrf.mxu0
      %v1498 = vadd.f32 %v1449, %v1497
      %v1499 = vpop.f32.mrf.mxu0
      %v1500 = vadd.f32 %v1451, %v1499
      %1501 = vmatmul.bf16.gmra.mxu0 %v895
      %v1502 = vpop.f32.mrf.mxu0
      %v1503 = vadd.f32 %v1454, %v1502
      %v1504 = vpop.f32.mrf.mxu0
      %v1505 = vadd.f32 %v1456, %v1504
      %1506 = vmatmul.bf16.gmra.mxu0 %v900
      %v1507 = vpop.f32.mrf.mxu0
      %v1508 = vadd.f32 %v1459, %v1507
      %v1509 = vpop.f32.mrf.mxu0
      %v1510 = vadd.f32 %v1461, %v1509
      %1511 = vmatmul.bf16.gmra.mxu0 %v905
      %v1512 = vpop.f32.mrf.mxu0
      %v1513 = vadd.f32 %v1464, %v1512
      %v1514 = vpop.f32.mrf.mxu0
      %v1515 = vadd.f32 %v1466, %v1514
      %1516 = vdwg.mxu0
      %1517 = vmatpush.bf16.msra.mxu0 %v632
      %1518 = vmatpush.bf16.msra.mxu0 %v630
      %1519 = vmatpush.bf16.msra.mxu0 %v628
      %1520 = vmatpush.bf16.msra.mxu0 %v626
      %1521 = vmatpush.bf16.msra.mxu0 %v488
      %1522 = vmatpush.bf16.msra.mxu0 %v486
      %1523 = vmatpush.bf16.msra.mxu0 %v484
      %1524 = vmatpush.bf16.msra.mxu0 %v482
      %1525 = vmatmul.bf16.gmra.mxu0 %v871
      %v1526 = vpop.f32.mrf.mxu0
      %v1527 = vadd.f32 %v1478, %v1526
      %v1528 = vpop.f32.mrf.mxu0
      %v1529 = vadd.f32 %v1480, %v1528
      %1530 = vmatmul.bf16.gmra.mxu0 %v876
      %v1531 = vpop.f32.mrf.mxu0
      %v1532 = vadd.f32 %v1483, %v1531
      %v1533 = vpop.f32.mrf.mxu0
      %v1534 = vadd.f32 %v1485, %v1533
      %1535 = vmatmul.bf16.gmra.mxu0 %v881
      %v1536 = vpop.f32.mrf.mxu0
      %v1537 = vadd.f32 %v1488, %v1536
      %v1538 = vpop.f32.mrf.mxu0
      %v1539 = vadd.f32 %v1490, %v1538
      %1540 = vmatmul.bf16.gmra.mxu0 %v886
      %v1541 = vpop.f32.mrf.mxu0
      %v1542 = vadd.f32 %v1493, %v1541
      %v1543 = vpop.f32.mrf.mxu0
      %v1544 = vadd.f32 %v1495, %v1543
      %1545 = vmatmul.bf16.gmra.mxu0 %v891
      %v1546 = vpop.f32.mrf.mxu0
      %v1547 = vadd.f32 %v1498, %v1546
      %v1548 = vpop.f32.mrf.mxu0
      %v1549 = vadd.f32 %v1500, %v1548
      %1550 = vmatmul.bf16.gmra.mxu0 %v896
      %v1551 = vpop.f32.mrf.mxu0
      %v1552 = vadd.f32 %v1503, %v1551
      %v1553 = vpop.f32.mrf.mxu0
      %v1554 = vadd.f32 %v1505, %v1553
      %1555 = vmatmul.bf16.gmra.mxu0 %v901
      %v1556 = vpop.f32.mrf.mxu0
      %v1557 = vadd.f32 %v1508, %v1556
      %v1558 = vpop.f32.mrf.mxu0
      %v1559 = vadd.f32 %v1510, %v1558
      %1560 = vmatmul.bf16.gmra.mxu0 %v906
      %v1561 = vpop.f32.mrf.mxu0
      %v1562 = vadd.f32 %v1513, %v1561
      %v1563 = vpop.f32.mrf.mxu0
      %v1564 = vadd.f32 %v1515, %v1563
      %1565 = vdwg.mxu0
      %1566 = vmatpush.bf16.msra.mxu0 %v548
      %1567 = vmatpush.bf16.msra.mxu0 %v546
      %1568 = vmatpush.bf16.msra.mxu0 %v544
      %1569 = vmatpush.bf16.msra.mxu0 %v542
      %1570 = vmatpush.bf16.msra.mxu0 %v536
      %1571 = vmatpush.bf16.msra.mxu0 %v535
      %1572 = vmatpush.bf16.msra.mxu0 %v534
      %1573 = vmatpush.bf16.msra.mxu0 %v533
      %1574 = vmatmul.bf16.gmra.mxu0 %v872
      %v1575 = vpop.f32.mrf.mxu0
      %v1576 = vadd.f32 %v1527, %v1575
      %v1577 = vpop.f32.mrf.mxu0
      %v1578 = vadd.f32 %v1529, %v1577
      %1579 = vmatmul.bf16.gmra.mxu0 %v877
      %v1580 = vpop.f32.mrf.mxu0
      %v1581 = vadd.f32 %v1532, %v1580
      %v1582 = vpop.f32.mrf.mxu0
      %v1583 = vadd.f32 %v1534, %v1582
      %1584 = vmatmul.bf16.gmra.mxu0 %v882
      %v1585 = vpop.f32.mrf.mxu0
      %v1586 = vadd.f32 %v1537, %v1585
      %v1587 = vpop.f32.mrf.mxu0
      %v1588 = vadd.f32 %v1539, %v1587
      %1589 = vmatmul.bf16.gmra.mxu0 %v887
      %v1590 = vpop.f32.mrf.mxu0
      %v1591 = vadd.f32 %v1542, %v1590
      %v1592 = vpop.f32.mrf.mxu0
      %v1593 = vadd.f32 %v1544, %v1592
      %1594 = vmatmul.bf16.gmra.mxu0 %v892
      %v1595 = vpop.f32.mrf.mxu0
      %v1596 = vadd.f32 %v1547, %v1595
      %v1597 = vpop.f32.mrf.mxu0
      %v1598 = vadd.f32 %v1549, %v1597
      %1599 = vmatmul.bf16.gmra.mxu0 %v897
      %v1600 = vpop.f32.mrf.mxu0
      %v1601 = vadd.f32 %v1552, %v1600
      %v1602 = vpop.f32.mrf.mxu0
      %v1603 = vadd.f32 %v1554, %v1602
      %1604 = vmatmul.bf16.gmra.mxu0 %v902
      %v1605 = vpop.f32.mrf.mxu0
      %v1606 = vadd.f32 %v1557, %v1605
      %v1607 = vpop.f32.mrf.mxu0
      %v1608 = vadd.f32 %v1559, %v1607
      %1609 = vmatmul.bf16.gmra.mxu0 %v907
      %v1610 = vpop.f32.mrf.mxu0
      %v1611 = vadd.f32 %v1562, %v1610
      %v1612 = vpop.f32.mrf.mxu0
      %v1613 = vadd.f32 %v1564, %v1612
      %1614 = vdwg.mxu0
      %1615 = vmatpush.bf16.msra.mxu0 0
      %1616 = vmatpush.bf16.msra.mxu0 0
      %1617 = vmatpush.bf16.msra.mxu0 0
      %1618 = vmatpush.bf16.msra.mxu0 0
      %1619 = vmatpush.bf16.msra.mxu0 %v644
      %1620 = vmatpush.bf16.msra.mxu0 %v642
      %1621 = vmatpush.bf16.msra.mxu0 %v640
      %1622 = vmatpush.bf16.msra.mxu0 %v638
      %1623 = vmatmul.bf16.gmra.mxu0 %v943
      %v1624 = vpop.f32.mrf.mxu0
      %v1625 = vadd.f32 %v1576, %v1624
      %v1626 = vpop.f32.mrf.mxu0
      %v1627 = vadd.f32 %v1578, %v1626
      %1628 = vmatmul.bf16.gmra.mxu0 %v946
      %v1629 = vpop.f32.mrf.mxu0
      %v1630 = vadd.f32 %v1581, %v1629
      %v1631 = vpop.f32.mrf.mxu0
      %v1632 = vadd.f32 %v1583, %v1631
      %1633 = vmatmul.bf16.gmra.mxu0 %v949
      %v1634 = vpop.f32.mrf.mxu0
      %v1635 = vadd.f32 %v1586, %v1634
      %v1636 = vpop.f32.mrf.mxu0
      %v1637 = vadd.f32 %v1588, %v1636
      %1638 = vmatmul.bf16.gmra.mxu0 %v952
      %v1639 = vpop.f32.mrf.mxu0
      %v1640 = vadd.f32 %v1591, %v1639
      %v1641 = vpop.f32.mrf.mxu0
      %v1642 = vadd.f32 %v1593, %v1641
      %1643 = vmatmul.bf16.gmra.mxu0 %v955
      %v1644 = vpop.f32.mrf.mxu0
      %v1645 = vadd.f32 %v1596, %v1644
      %v1646 = vpop.f32.mrf.mxu0
      %v1647 = vadd.f32 %v1598, %v1646
      %1648 = vmatmul.bf16.gmra.mxu0 %v958
      %v1649 = vpop.f32.mrf.mxu0
      %v1650 = vadd.f32 %v1601, %v1649
      %v1651 = vpop.f32.mrf.mxu0
      %v1652 = vadd.f32 %v1603, %v1651
      %1653 = vmatmul.bf16.gmra.mxu0 %v961
      %v1654 = vpop.f32.mrf.mxu0
      %v1655 = vadd.f32 %v1606, %v1654
      %v1656 = vpop.f32.mrf.mxu0
      %v1657 = vadd.f32 %v1608, %v1656
      %1658 = vmatmul.bf16.gmra.mxu0 %v964
      %v1659 = vpop.f32.mrf.mxu0
      %v1660 = vadd.f32 %v1611, %v1659
      %v1661 = vpop.f32.mrf.mxu0
      %v1662 = vadd.f32 %v1613, %v1661
      %1663 = vdwg.mxu0
      %v1664 = vmul.f32 %v1625, %v1214
      %v1665 = vmul.f32 %v1627, %v1219
      %v1666 = vmul.f32 %v1630, %v1224
      %v1667 = vmul.f32 %v1632, %v1229
      %v1668 = vmul.f32 %v1635, %v1234
      %v1669 = vmul.f32 %v1637, %v1239
      %v1670 = vmul.f32 %v1640, %v1244
      %v1671 = vmul.f32 %v1642, %v1249
      %v1672 = vmul.f32 %v1645, %v1254
      %v1673 = vmul.f32 %v1647, %v1259
      %v1674 = vmul.f32 %v1650, %v1264
      %v1675 = vmul.f32 %v1652, %v1269
      %v1676 = vmul.f32 %v1655, %v1274
      %v1677 = vmul.f32 %v1657, %v1279
      %v1678 = vmul.f32 %v1660, %v1284
      %v1679 = vmul.f32 %v1662, %v1289
      %v1680 = vadd.f32 %v1664, %v1310
      %v1681 = vadd.f32 %v1665, %v1315
      %v1682 = vadd.f32 %v1666, %v1320
      %v1683 = vadd.f32 %v1667, %v1325
      %v1684 = vadd.f32 %v1668, %v1330
      %v1685 = vadd.f32 %v1669, %v1335
      %v1686 = vadd.f32 %v1670, %v1340
      %v1687 = vadd.f32 %v1671, %v1345
      %v1688 = vadd.f32 %v1672, %v1350
      %v1689 = vadd.f32 %v1673, %v1355
      %v1690 = vadd.f32 %v1674, %v1360
      %v1691 = vadd.f32 %v1675, %v1365
      %v1692 = vadd.f32 %v1676, %v1370
      %v1693 = vadd.f32 %v1677, %v1375
      %v1694 = vadd.f32 %v1678, %v1380
      %v1695 = vadd.f32 %v1679, %v1385
      %v1696 = vmax.f32 %v1680, 0.0
      %v1697 = vmax.f32 %v1681, 0.0
      %v1698 = vmax.f32 %v1682, 0.0
      %v1699 = vmax.f32 %v1683, 0.0
      %v1700 = vmax.f32 %v1684, 0.0
      %v1701 = vmax.f32 %v1685, 0.0
      %v1702 = vmax.f32 %v1686, 0.0
      %v1703 = vmax.f32 %v1687, 0.0
      %v1704 = vmax.f32 %v1688, 0.0
      %v1705 = vmax.f32 %v1689, 0.0
      %v1706 = vmax.f32 %v1690, 0.0
      %v1707 = vmax.f32 %v1691, 0.0
      %v1708 = vmax.f32 %v1692, 0.0
      %v1709 = vmax.f32 %v1693, 0.0
      %v1710 = vmax.f32 %v1694, 0.0
      %v1711 = vmax.f32 %v1695, 0.0
      %v1712 = vmax.f32 %v1403, %v1696
      %v1713 = vmax.f32 %v1404, %v1697
      %v1714 = vmax.f32 %v1405, %v1698
      %v1715 = vmax.f32 %v1406, %v1699
      %v1716 = vmax.f32 %v1407, %v1700
      %v1717 = vmax.f32 %v1408, %v1701
      %v1718 = vmax.f32 %v1409, %v1702
      %v1719 = vmax.f32 %v1410, %v1703
      %v1720 = vmax.f32 %v1411, %v1704
      %v1721 = vmax.f32 %v1412, %v1705
      %v1722 = vmax.f32 %v1413, %v1706
      %v1723 = vmax.f32 %v1414, %v1707
      %v1724 = vmax.f32 %v1415, %v1708
      %v1725 = vmax.f32 %v1416, %v1709
      %v1726 = vmax.f32 %v1417, %v1710
      %v1727 = vmax.f32 %v1418, %v1711
      %1728 = vmatpush.bf16.msra.mxu0 %v476
      %1729 = vmatpush.bf16.msra.mxu0 %v475
      %1730 = vmatpush.bf16.msra.mxu0 %v474
      %1731 = vmatpush.bf16.msra.mxu0 %v473
      %1732 = vmatpush.bf16.msra.mxu0 %v452
      %1733 = vmatpush.bf16.msra.mxu0 %v451
      %1734 = vmatpush.bf16.msra.mxu0 %v450
      %1735 = vmatpush.bf16.msra.mxu0 %v449
      %1736 = vmatmul.bf16.gmra.mxu0 %v869
      %v1737 = vpop.f32.mrf.mxu0
      %v1738 = vadd.f32 0.0, %v1737
      %v1739 = vpop.f32.mrf.mxu0
      %v1740 = vadd.f32 0.0, %v1739
      %1741 = vmatmul.bf16.gmra.mxu0 %v874
      %v1742 = vpop.f32.mrf.mxu0
      %v1743 = vadd.f32 0.0, %v1742
      %v1744 = vpop.f32.mrf.mxu0
      %v1745 = vadd.f32 0.0, %v1744
      %1746 = vmatmul.bf16.gmra.mxu0 %v879
      %v1747 = vpop.f32.mrf.mxu0
      %v1748 = vadd.f32 0.0, %v1747
      %v1749 = vpop.f32.mrf.mxu0
      %v1750 = vadd.f32 0.0, %v1749
      %1751 = vmatmul.bf16.gmra.mxu0 %v884
      %v1752 = vpop.f32.mrf.mxu0
      %v1753 = vadd.f32 0.0, %v1752
      %v1754 = vpop.f32.mrf.mxu0
      %v1755 = vadd.f32 0.0, %v1754
      %1756 = vmatmul.bf16.gmra.mxu0 %v889
      %v1757 = vpop.f32.mrf.mxu0
      %v1758 = vadd.f32 0.0, %v1757
      %v1759 = vpop.f32.mrf.mxu0
      %v1760 = vadd.f32 0.0, %v1759
      %1761 = vmatmul.bf16.gmra.mxu0 %v894
      %v1762 = vpop.f32.mrf.mxu0
      %v1763 = vadd.f32 0.0, %v1762
      %v1764 = vpop.f32.mrf.mxu0
      %v1765 = vadd.f32 0.0, %v1764
      %1766 = vmatmul.bf16.gmra.mxu0 %v899
      %v1767 = vpop.f32.mrf.mxu0
      %v1768 = vadd.f32 0.0, %v1767
      %v1769 = vpop.f32.mrf.mxu0
      %v1770 = vadd.f32 0.0, %v1769
      %1771 = vmatmul.bf16.gmra.mxu0 %v904
      %v1772 = vpop.f32.mrf.mxu0
      %v1773 = vadd.f32 0.0, %v1772
      %v1774 = vpop.f32.mrf.mxu0
      %v1775 = vadd.f32 0.0, %v1774
      %1776 = vdwg.mxu0
      %1777 = vmatpush.bf16.msra.mxu0 %v512
      %1778 = vmatpush.bf16.msra.mxu0 %v511
      %1779 = vmatpush.bf16.msra.mxu0 %v510
      %1780 = vmatpush.bf16.msra.mxu0 %v509
      %1781 = vmatpush.bf16.msra.mxu0 %v488
      %1782 = vmatpush.bf16.msra.mxu0 %v486
      %1783 = vmatpush.bf16.msra.mxu0 %v484
      %1784 = vmatpush.bf16.msra.mxu0 %v482
      %1785 = vmatmul.bf16.gmra.mxu0 %v870
      %v1786 = vpop.f32.mrf.mxu0
      %v1787 = vadd.f32 %v1738, %v1786
      %v1788 = vpop.f32.mrf.mxu0
      %v1789 = vadd.f32 %v1740, %v1788
      %1790 = vmatmul.bf16.gmra.mxu0 %v875
      %v1791 = vpop.f32.mrf.mxu0
      %v1792 = vadd.f32 %v1743, %v1791
      %v1793 = vpop.f32.mrf.mxu0
      %v1794 = vadd.f32 %v1745, %v1793
      %1795 = vmatmul.bf16.gmra.mxu0 %v880
      %v1796 = vpop.f32.mrf.mxu0
      %v1797 = vadd.f32 %v1748, %v1796
      %v1798 = vpop.f32.mrf.mxu0
      %v1799 = vadd.f32 %v1750, %v1798
      %1800 = vmatmul.bf16.gmra.mxu0 %v885
      %v1801 = vpop.f32.mrf.mxu0
      %v1802 = vadd.f32 %v1753, %v1801
      %v1803 = vpop.f32.mrf.mxu0
      %v1804 = vadd.f32 %v1755, %v1803
      %1805 = vmatmul.bf16.gmra.mxu0 %v890
      %v1806 = vpop.f32.mrf.mxu0
      %v1807 = vadd.f32 %v1758, %v1806
      %v1808 = vpop.f32.mrf.mxu0
      %v1809 = vadd.f32 %v1760, %v1808
      %1810 = vmatmul.bf16.gmra.mxu0 %v895
      %v1811 = vpop.f32.mrf.mxu0
      %v1812 = vadd.f32 %v1763, %v1811
      %v1813 = vpop.f32.mrf.mxu0
      %v1814 = vadd.f32 %v1765, %v1813
      %1815 = vmatmul.bf16.gmra.mxu0 %v900
      %v1816 = vpop.f32.mrf.mxu0
      %v1817 = vadd.f32 %v1768, %v1816
      %v1818 = vpop.f32.mrf.mxu0
      %v1819 = vadd.f32 %v1770, %v1818
      %1820 = vmatmul.bf16.gmra.mxu0 %v905
      %v1821 = vpop.f32.mrf.mxu0
      %v1822 = vadd.f32 %v1773, %v1821
      %v1823 = vpop.f32.mrf.mxu0
      %v1824 = vadd.f32 %v1775, %v1823
      %1825 = vdwg.mxu0
      %1826 = vmatpush.bf16.msra.mxu0 %v548
      %1827 = vmatpush.bf16.msra.mxu0 %v546
      %1828 = vmatpush.bf16.msra.mxu0 %v544
      %1829 = vmatpush.bf16.msra.mxu0 %v542
      %1830 = vmatpush.bf16.msra.mxu0 %v536
      %1831 = vmatpush.bf16.msra.mxu0 %v535
      %1832 = vmatpush.bf16.msra.mxu0 %v534
      %1833 = vmatpush.bf16.msra.mxu0 %v533
      %1834 = vmatmul.bf16.gmra.mxu0 %v871
      %v1835 = vpop.f32.mrf.mxu0
      %v1836 = vadd.f32 %v1787, %v1835
      %v1837 = vpop.f32.mrf.mxu0
      %v1838 = vadd.f32 %v1789, %v1837
      %1839 = vmatmul.bf16.gmra.mxu0 %v876
      %v1840 = vpop.f32.mrf.mxu0
      %v1841 = vadd.f32 %v1792, %v1840
      %v1842 = vpop.f32.mrf.mxu0
      %v1843 = vadd.f32 %v1794, %v1842
      %1844 = vmatmul.bf16.gmra.mxu0 %v881
      %v1845 = vpop.f32.mrf.mxu0
      %v1846 = vadd.f32 %v1797, %v1845
      %v1847 = vpop.f32.mrf.mxu0
      %v1848 = vadd.f32 %v1799, %v1847
      %1849 = vmatmul.bf16.gmra.mxu0 %v886
      %v1850 = vpop.f32.mrf.mxu0
      %v1851 = vadd.f32 %v1802, %v1850
      %v1852 = vpop.f32.mrf.mxu0
      %v1853 = vadd.f32 %v1804, %v1852
      %1854 = vmatmul.bf16.gmra.mxu0 %v891
      %v1855 = vpop.f32.mrf.mxu0
      %v1856 = vadd.f32 %v1807, %v1855
      %v1857 = vpop.f32.mrf.mxu0
      %v1858 = vadd.f32 %v1809, %v1857
      %1859 = vmatmul.bf16.gmra.mxu0 %v896
      %v1860 = vpop.f32.mrf.mxu0
      %v1861 = vadd.f32 %v1812, %v1860
      %v1862 = vpop.f32.mrf.mxu0
      %v1863 = vadd.f32 %v1814, %v1862
      %1864 = vmatmul.bf16.gmra.mxu0 %v901
      %v1865 = vpop.f32.mrf.mxu0
      %v1866 = vadd.f32 %v1817, %v1865
      %v1867 = vpop.f32.mrf.mxu0
      %v1868 = vadd.f32 %v1819, %v1867
      %1869 = vmatmul.bf16.gmra.mxu0 %v906
      %v1870 = vpop.f32.mrf.mxu0
      %v1871 = vadd.f32 %v1822, %v1870
      %v1872 = vpop.f32.mrf.mxu0
      %v1873 = vadd.f32 %v1824, %v1872
      %1874 = vdwg.mxu0
      %1875 = vmatpush.bf16.msra.mxu0 %v596
      %1876 = vmatpush.bf16.msra.mxu0 %v595
      %1877 = vmatpush.bf16.msra.mxu0 %v594
      %1878 = vmatpush.bf16.msra.mxu0 %v593
      %1879 = vmatpush.bf16.msra.mxu0 %v572
      %1880 = vmatpush.bf16.msra.mxu0 %v571
      %1881 = vmatpush.bf16.msra.mxu0 %v570
      %1882 = vmatpush.bf16.msra.mxu0 %v569
      %1883 = vmatmul.bf16.gmra.mxu0 %v872
      %v1884 = vpop.f32.mrf.mxu0
      %v1885 = vadd.f32 %v1836, %v1884
      %v1886 = vpop.f32.mrf.mxu0
      %v1887 = vadd.f32 %v1838, %v1886
      %1888 = vmatmul.bf16.gmra.mxu0 %v877
      %v1889 = vpop.f32.mrf.mxu0
      %v1890 = vadd.f32 %v1841, %v1889
      %v1891 = vpop.f32.mrf.mxu0
      %v1892 = vadd.f32 %v1843, %v1891
      %1893 = vmatmul.bf16.gmra.mxu0 %v882
      %v1894 = vpop.f32.mrf.mxu0
      %v1895 = vadd.f32 %v1846, %v1894
      %v1896 = vpop.f32.mrf.mxu0
      %v1897 = vadd.f32 %v1848, %v1896
      %1898 = vmatmul.bf16.gmra.mxu0 %v887
      %v1899 = vpop.f32.mrf.mxu0
      %v1900 = vadd.f32 %v1851, %v1899
      %v1901 = vpop.f32.mrf.mxu0
      %v1902 = vadd.f32 %v1853, %v1901
      %1903 = vmatmul.bf16.gmra.mxu0 %v892
      %v1904 = vpop.f32.mrf.mxu0
      %v1905 = vadd.f32 %v1856, %v1904
      %v1906 = vpop.f32.mrf.mxu0
      %v1907 = vadd.f32 %v1858, %v1906
      %1908 = vmatmul.bf16.gmra.mxu0 %v897
      %v1909 = vpop.f32.mrf.mxu0
      %v1910 = vadd.f32 %v1861, %v1909
      %v1911 = vpop.f32.mrf.mxu0
      %v1912 = vadd.f32 %v1863, %v1911
      %1913 = vmatmul.bf16.gmra.mxu0 %v902
      %v1914 = vpop.f32.mrf.mxu0
      %v1915 = vadd.f32 %v1866, %v1914
      %v1916 = vpop.f32.mrf.mxu0
      %v1917 = vadd.f32 %v1868, %v1916
      %1918 = vmatmul.bf16.gmra.mxu0 %v907
      %v1919 = vpop.f32.mrf.mxu0
      %v1920 = vadd.f32 %v1871, %v1919
      %v1921 = vpop.f32.mrf.mxu0
      %v1922 = vadd.f32 %v1873, %v1921
      %1923 = vdwg.mxu0
      %1924 = vmatpush.bf16.msra.mxu0 0
      %1925 = vmatpush.bf16.msra.mxu0 0
      %1926 = vmatpush.bf16.msra.mxu0 0
      %1927 = vmatpush.bf16.msra.mxu0 0
      %1928 = vmatpush.bf16.msra.mxu0 %v608
      %1929 = vmatpush.bf16.msra.mxu0 %v606
      %1930 = vmatpush.bf16.msra.mxu0 %v604
      %1931 = vmatpush.bf16.msra.mxu0 %v602
      %1932 = vmatmul.bf16.gmra.mxu0 %v943
      %v1933 = vpop.f32.mrf.mxu0
      %v1934 = vadd.f32 %v1885, %v1933
      %v1935 = vpop.f32.mrf.mxu0
      %v1936 = vadd.f32 %v1887, %v1935
      %1937 = vmatmul.bf16.gmra.mxu0 %v946
      %v1938 = vpop.f32.mrf.mxu0
      %v1939 = vadd.f32 %v1890, %v1938
      %v1940 = vpop.f32.mrf.mxu0
      %v1941 = vadd.f32 %v1892, %v1940
      %1942 = vmatmul.bf16.gmra.mxu0 %v949
      %v1943 = vpop.f32.mrf.mxu0
      %v1944 = vadd.f32 %v1895, %v1943
      %v1945 = vpop.f32.mrf.mxu0
      %v1946 = vadd.f32 %v1897, %v1945
      %1947 = vmatmul.bf16.gmra.mxu0 %v952
      %v1948 = vpop.f32.mrf.mxu0
      %v1949 = vadd.f32 %v1900, %v1948
      %v1950 = vpop.f32.mrf.mxu0
      %v1951 = vadd.f32 %v1902, %v1950
      %1952 = vmatmul.bf16.gmra.mxu0 %v955
      %v1953 = vpop.f32.mrf.mxu0
      %v1954 = vadd.f32 %v1905, %v1953
      %v1955 = vpop.f32.mrf.mxu0
      %v1956 = vadd.f32 %v1907, %v1955
      %1957 = vmatmul.bf16.gmra.mxu0 %v958
      %v1958 = vpop.f32.mrf.mxu0
      %v1959 = vadd.f32 %v1910, %v1958
      %v1960 = vpop.f32.mrf.mxu0
      %v1961 = vadd.f32 %v1912, %v1960
      %1962 = vmatmul.bf16.gmra.mxu0 %v961
      %v1963 = vpop.f32.mrf.mxu0
      %v1964 = vadd.f32 %v1915, %v1963
      %v1965 = vpop.f32.mrf.mxu0
      %v1966 = vadd.f32 %v1917, %v1965
      %1967 = vmatmul.bf16.gmra.mxu0 %v964
      %v1968 = vpop.f32.mrf.mxu0
      %v1969 = vadd.f32 %v1920, %v1968
      %v1970 = vpop.f32.mrf.mxu0
      %v1971 = vadd.f32 %v1922, %v1970
      %1972 = vdwg.mxu0
      %v1973 = vmul.f32 %v1934, %v1214
      %v1974 = vmul.f32 %v1936, %v1219
      %v1975 = vmul.f32 %v1939, %v1224
      %v1976 = vmul.f32 %v1941, %v1229
      %v1977 = vmul.f32 %v1944, %v1234
      %v1978 = vmul.f32 %v1946, %v1239
      %v1979 = vmul.f32 %v1949, %v1244
      %v1980 = vmul.f32 %v1951, %v1249
      %v1981 = vmul.f32 %v1954, %v1254
      %v1982 = vmul.f32 %v1956, %v1259
      %v1983 = vmul.f32 %v1959, %v1264
      %v1984 = vmul.f32 %v1961, %v1269
      %v1985 = vmul.f32 %v1964, %v1274
      %v1986 = vmul.f32 %v1966, %v1279
      %v1987 = vmul.f32 %v1969, %v1284
      %v1988 = vmul.f32 %v1971, %v1289
      %v1989 = vadd.f32 %v1973, %v1310
      %v1990 = vadd.f32 %v1974, %v1315
      %v1991 = vadd.f32 %v1975, %v1320
      %v1992 = vadd.f32 %v1976, %v1325
      %v1993 = vadd.f32 %v1977, %v1330
      %v1994 = vadd.f32 %v1978, %v1335
      %v1995 = vadd.f32 %v1979, %v1340
      %v1996 = vadd.f32 %v1980, %v1345
      %v1997 = vadd.f32 %v1981, %v1350
      %v1998 = vadd.f32 %v1982, %v1355
      %v1999 = vadd.f32 %v1983, %v1360
      %v2000 = vadd.f32 %v1984, %v1365
      %v2001 = vadd.f32 %v1985, %v1370
      %v2002 = vadd.f32 %v1986, %v1375
      %v2003 = vadd.f32 %v1987, %v1380
      %v2004 = vadd.f32 %v1988, %v1385
      %v2005 = vmax.f32 %v1989, 0.0
      %v2006 = vmax.f32 %v1990, 0.0
      %v2007 = vmax.f32 %v1991, 0.0
      %v2008 = vmax.f32 %v1992, 0.0
      %v2009 = vmax.f32 %v1993, 0.0
      %v2010 = vmax.f32 %v1994, 0.0
      %v2011 = vmax.f32 %v1995, 0.0
      %v2012 = vmax.f32 %v1996, 0.0
      %v2013 = vmax.f32 %v1997, 0.0
      %v2014 = vmax.f32 %v1998, 0.0
      %v2015 = vmax.f32 %v1999, 0.0
      %v2016 = vmax.f32 %v2000, 0.0
      %v2017 = vmax.f32 %v2001, 0.0
      %v2018 = vmax.f32 %v2002, 0.0
      %v2019 = vmax.f32 %v2003, 0.0
      %v2020 = vmax.f32 %v2004, 0.0
      %v2021 = vmax.f32 %v1712, %v2005
      %v2022 = vmax.f32 %v1713, %v2006
      %v2023 = vmax.f32 %v1714, %v2007
      %v2024 = vmax.f32 %v1715, %v2008
      %v2025 = vmax.f32 %v1716, %v2009
      %v2026 = vmax.f32 %v1717, %v2010
      %v2027 = vmax.f32 %v1718, %v2011
      %v2028 = vmax.f32 %v1719, %v2012
      %v2029 = vmax.f32 %v1720, %v2013
      %v2030 = vmax.f32 %v1721, %v2014
      %v2031 = vmax.f32 %v1722, %v2015
      %v2032 = vmax.f32 %v1723, %v2016
      %v2033 = vmax.f32 %v1724, %v2017
      %v2034 = vmax.f32 %v1725, %v2018
      %v2035 = vmax.f32 %v1726, %v2019
      %v2036 = vmax.f32 %v1727, %v2020
      %2037 = vmatpush.bf16.msra.mxu0 %v488
      %2038 = vmatpush.bf16.msra.mxu0 %v486
      %2039 = vmatpush.bf16.msra.mxu0 %v484
      %2040 = vmatpush.bf16.msra.mxu0 %v482
      %2041 = vmatpush.bf16.msra.mxu0 %v476
      %2042 = vmatpush.bf16.msra.mxu0 %v475
      %2043 = vmatpush.bf16.msra.mxu0 %v474
      %2044 = vmatpush.bf16.msra.mxu0 %v473
      %2045 = vmatmul.bf16.gmra.mxu0 %v869
      %v2046 = vpop.f32.mrf.mxu0
      %v2047 = vadd.f32 0.0, %v2046
      %v2048 = vpop.f32.mrf.mxu0
      %v2049 = vadd.f32 0.0, %v2048
      %2050 = vmatmul.bf16.gmra.mxu0 %v874
      %v2051 = vpop.f32.mrf.mxu0
      %v2052 = vadd.f32 0.0, %v2051
      %v2053 = vpop.f32.mrf.mxu0
      %v2054 = vadd.f32 0.0, %v2053
      %2055 = vmatmul.bf16.gmra.mxu0 %v879
      %v2056 = vpop.f32.mrf.mxu0
      %v2057 = vadd.f32 0.0, %v2056
      %v2058 = vpop.f32.mrf.mxu0
      %v2059 = vadd.f32 0.0, %v2058
      %2060 = vmatmul.bf16.gmra.mxu0 %v884
      %v2061 = vpop.f32.mrf.mxu0
      %v2062 = vadd.f32 0.0, %v2061
      %v2063 = vpop.f32.mrf.mxu0
      %v2064 = vadd.f32 0.0, %v2063
      %2065 = vmatmul.bf16.gmra.mxu0 %v889
      %v2066 = vpop.f32.mrf.mxu0
      %v2067 = vadd.f32 0.0, %v2066
      %v2068 = vpop.f32.mrf.mxu0
      %v2069 = vadd.f32 0.0, %v2068
      %2070 = vmatmul.bf16.gmra.mxu0 %v894
      %v2071 = vpop.f32.mrf.mxu0
      %v2072 = vadd.f32 0.0, %v2071
      %v2073 = vpop.f32.mrf.mxu0
      %v2074 = vadd.f32 0.0, %v2073
      %2075 = vmatmul.bf16.gmra.mxu0 %v899
      %v2076 = vpop.f32.mrf.mxu0
      %v2077 = vadd.f32 0.0, %v2076
      %v2078 = vpop.f32.mrf.mxu0
      %v2079 = vadd.f32 0.0, %v2078
      %2080 = vmatmul.bf16.gmra.mxu0 %v904
      %v2081 = vpop.f32.mrf.mxu0
      %v2082 = vadd.f32 0.0, %v2081
      %v2083 = vpop.f32.mrf.mxu0
      %v2084 = vadd.f32 0.0, %v2083
      %2085 = vdwg.mxu0
      %2086 = vmatpush.bf16.msra.mxu0 %v536
      %2087 = vmatpush.bf16.msra.mxu0 %v535
      %2088 = vmatpush.bf16.msra.mxu0 %v534
      %2089 = vmatpush.bf16.msra.mxu0 %v533
      %2090 = vmatpush.bf16.msra.mxu0 %v632
      %2091 = vmatpush.bf16.msra.mxu0 %v630
      %2092 = vmatpush.bf16.msra.mxu0 %v628
      %2093 = vmatpush.bf16.msra.mxu0 %v626
      %2094 = vmatmul.bf16.gmra.mxu0 %v870
      %v2095 = vpop.f32.mrf.mxu0
      %v2096 = vadd.f32 %v2047, %v2095
      %v2097 = vpop.f32.mrf.mxu0
      %v2098 = vadd.f32 %v2049, %v2097
      %2099 = vmatmul.bf16.gmra.mxu0 %v875
      %v2100 = vpop.f32.mrf.mxu0
      %v2101 = vadd.f32 %v2052, %v2100
      %v2102 = vpop.f32.mrf.mxu0
      %v2103 = vadd.f32 %v2054, %v2102
      %2104 = vmatmul.bf16.gmra.mxu0 %v880
      %v2105 = vpop.f32.mrf.mxu0
      %v2106 = vadd.f32 %v2057, %v2105
      %v2107 = vpop.f32.mrf.mxu0
      %v2108 = vadd.f32 %v2059, %v2107
      %2109 = vmatmul.bf16.gmra.mxu0 %v885
      %v2110 = vpop.f32.mrf.mxu0
      %v2111 = vadd.f32 %v2062, %v2110
      %v2112 = vpop.f32.mrf.mxu0
      %v2113 = vadd.f32 %v2064, %v2112
      %2114 = vmatmul.bf16.gmra.mxu0 %v890
      %v2115 = vpop.f32.mrf.mxu0
      %v2116 = vadd.f32 %v2067, %v2115
      %v2117 = vpop.f32.mrf.mxu0
      %v2118 = vadd.f32 %v2069, %v2117
      %2119 = vmatmul.bf16.gmra.mxu0 %v895
      %v2120 = vpop.f32.mrf.mxu0
      %v2121 = vadd.f32 %v2072, %v2120
      %v2122 = vpop.f32.mrf.mxu0
      %v2123 = vadd.f32 %v2074, %v2122
      %2124 = vmatmul.bf16.gmra.mxu0 %v900
      %v2125 = vpop.f32.mrf.mxu0
      %v2126 = vadd.f32 %v2077, %v2125
      %v2127 = vpop.f32.mrf.mxu0
      %v2128 = vadd.f32 %v2079, %v2127
      %2129 = vmatmul.bf16.gmra.mxu0 %v905
      %v2130 = vpop.f32.mrf.mxu0
      %v2131 = vadd.f32 %v2082, %v2130
      %v2132 = vpop.f32.mrf.mxu0
      %v2133 = vadd.f32 %v2084, %v2132
      %2134 = vdwg.mxu0
      %2135 = vmatpush.bf16.msra.mxu0 %v644
      %2136 = vmatpush.bf16.msra.mxu0 %v642
      %2137 = vmatpush.bf16.msra.mxu0 %v640
      %2138 = vmatpush.bf16.msra.mxu0 %v638
      %2139 = vmatpush.bf16.msra.mxu0 %v548
      %2140 = vmatpush.bf16.msra.mxu0 %v546
      %2141 = vmatpush.bf16.msra.mxu0 %v544
      %2142 = vmatpush.bf16.msra.mxu0 %v542
      %2143 = vmatmul.bf16.gmra.mxu0 %v871
      %v2144 = vpop.f32.mrf.mxu0
      %v2145 = vadd.f32 %v2096, %v2144
      %v2146 = vpop.f32.mrf.mxu0
      %v2147 = vadd.f32 %v2098, %v2146
      %2148 = vmatmul.bf16.gmra.mxu0 %v876
      %v2149 = vpop.f32.mrf.mxu0
      %v2150 = vadd.f32 %v2101, %v2149
      %v2151 = vpop.f32.mrf.mxu0
      %v2152 = vadd.f32 %v2103, %v2151
      %2153 = vmatmul.bf16.gmra.mxu0 %v881
      %v2154 = vpop.f32.mrf.mxu0
      %v2155 = vadd.f32 %v2106, %v2154
      %v2156 = vpop.f32.mrf.mxu0
      %v2157 = vadd.f32 %v2108, %v2156
      %2158 = vmatmul.bf16.gmra.mxu0 %v886
      %v2159 = vpop.f32.mrf.mxu0
      %v2160 = vadd.f32 %v2111, %v2159
      %v2161 = vpop.f32.mrf.mxu0
      %v2162 = vadd.f32 %v2113, %v2161
      %2163 = vmatmul.bf16.gmra.mxu0 %v891
      %v2164 = vpop.f32.mrf.mxu0
      %v2165 = vadd.f32 %v2116, %v2164
      %v2166 = vpop.f32.mrf.mxu0
      %v2167 = vadd.f32 %v2118, %v2166
      %2168 = vmatmul.bf16.gmra.mxu0 %v896
      %v2169 = vpop.f32.mrf.mxu0
      %v2170 = vadd.f32 %v2121, %v2169
      %v2171 = vpop.f32.mrf.mxu0
      %v2172 = vadd.f32 %v2123, %v2171
      %2173 = vmatmul.bf16.gmra.mxu0 %v901
      %v2174 = vpop.f32.mrf.mxu0
      %v2175 = vadd.f32 %v2126, %v2174
      %v2176 = vpop.f32.mrf.mxu0
      %v2177 = vadd.f32 %v2128, %v2176
      %2178 = vmatmul.bf16.gmra.mxu0 %v906
      %v2179 = vpop.f32.mrf.mxu0
      %v2180 = vadd.f32 %v2131, %v2179
      %v2181 = vpop.f32.mrf.mxu0
      %v2182 = vadd.f32 %v2133, %v2181
      %2183 = vdwg.mxu0
      %2184 = vmatpush.bf16.msra.mxu0 %v608
      %2185 = vmatpush.bf16.msra.mxu0 %v606
      %2186 = vmatpush.bf16.msra.mxu0 %v604
      %2187 = vmatpush.bf16.msra.mxu0 %v602
      %2188 = vmatpush.bf16.msra.mxu0 %v596
      %2189 = vmatpush.bf16.msra.mxu0 %v595
      %2190 = vmatpush.bf16.msra.mxu0 %v594
      %2191 = vmatpush.bf16.msra.mxu0 %v593
      %2192 = vmatmul.bf16.gmra.mxu0 %v872
      %v2193 = vpop.f32.mrf.mxu0
      %v2194 = vadd.f32 %v2145, %v2193
      %v2195 = vpop.f32.mrf.mxu0
      %v2196 = vadd.f32 %v2147, %v2195
      %2197 = vmatmul.bf16.gmra.mxu0 %v877
      %v2198 = vpop.f32.mrf.mxu0
      %v2199 = vadd.f32 %v2150, %v2198
      %v2200 = vpop.f32.mrf.mxu0
      %v2201 = vadd.f32 %v2152, %v2200
      %2202 = vmatmul.bf16.gmra.mxu0 %v882
      %v2203 = vpop.f32.mrf.mxu0
      %v2204 = vadd.f32 %v2155, %v2203
      %v2205 = vpop.f32.mrf.mxu0
      %v2206 = vadd.f32 %v2157, %v2205
      %2207 = vmatmul.bf16.gmra.mxu0 %v887
      %v2208 = vpop.f32.mrf.mxu0
      %v2209 = vadd.f32 %v2160, %v2208
      %v2210 = vpop.f32.mrf.mxu0
      %v2211 = vadd.f32 %v2162, %v2210
      %2212 = vmatmul.bf16.gmra.mxu0 %v892
      %v2213 = vpop.f32.mrf.mxu0
      %v2214 = vadd.f32 %v2165, %v2213
      %v2215 = vpop.f32.mrf.mxu0
      %v2216 = vadd.f32 %v2167, %v2215
      %2217 = vmatmul.bf16.gmra.mxu0 %v897
      %v2218 = vpop.f32.mrf.mxu0
      %v2219 = vadd.f32 %v2170, %v2218
      %v2220 = vpop.f32.mrf.mxu0
      %v2221 = vadd.f32 %v2172, %v2220
      %2222 = vmatmul.bf16.gmra.mxu0 %v902
      %v2223 = vpop.f32.mrf.mxu0
      %v2224 = vadd.f32 %v2175, %v2223
      %v2225 = vpop.f32.mrf.mxu0
      %v2226 = vadd.f32 %v2177, %v2225
      %2227 = vmatmul.bf16.gmra.mxu0 %v907
      %v2228 = vpop.f32.mrf.mxu0
      %v2229 = vadd.f32 %v2180, %v2228
      %v2230 = vpop.f32.mrf.mxu0
      %v2231 = vadd.f32 %v2182, %v2230
      %2232 = vdwg.mxu0
      %2233 = vmatpush.bf16.msra.mxu0 0
      %2234 = vmatpush.bf16.msra.mxu0 0
      %2235 = vmatpush.bf16.msra.mxu0 0
      %2236 = vmatpush.bf16.msra.mxu0 0
      %2237 = vmatpush.bf16.msra.mxu0 %v656
      %2238 = vmatpush.bf16.msra.mxu0 %v654
      %2239 = vmatpush.bf16.msra.mxu0 %v652
      %2240 = vmatpush.bf16.msra.mxu0 %v650
      %2241 = vmatmul.bf16.gmra.mxu0 %v943
      %v2242 = vpop.f32.mrf.mxu0
      %v2243 = vadd.f32 %v2194, %v2242
      %v2244 = vpop.f32.mrf.mxu0
      %v2245 = vadd.f32 %v2196, %v2244
      %2246 = vmatmul.bf16.gmra.mxu0 %v946
      %v2247 = vpop.f32.mrf.mxu0
      %v2248 = vadd.f32 %v2199, %v2247
      %v2249 = vpop.f32.mrf.mxu0
      %v2250 = vadd.f32 %v2201, %v2249
      %2251 = vmatmul.bf16.gmra.mxu0 %v949
      %v2252 = vpop.f32.mrf.mxu0
      %v2253 = vadd.f32 %v2204, %v2252
      %v2254 = vpop.f32.mrf.mxu0
      %v2255 = vadd.f32 %v2206, %v2254
      %2256 = vmatmul.bf16.gmra.mxu0 %v952
      %v2257 = vpop.f32.mrf.mxu0
      %v2258 = vadd.f32 %v2209, %v2257
      %v2259 = vpop.f32.mrf.mxu0
      %v2260 = vadd.f32 %v2211, %v2259
      %2261 = vmatmul.bf16.gmra.mxu0 %v955
      %v2262 = vpop.f32.mrf.mxu0
      %v2263 = vadd.f32 %v2214, %v2262
      %v2264 = vpop.f32.mrf.mxu0
      %v2265 = vadd.f32 %v2216, %v2264
      %2266 = vmatmul.bf16.gmra.mxu0 %v958
      %v2267 = vpop.f32.mrf.mxu0
      %v2268 = vadd.f32 %v2219, %v2267
      %v2269 = vpop.f32.mrf.mxu0
      %v2270 = vadd.f32 %v2221, %v2269
      %2271 = vmatmul.bf16.gmra.mxu0 %v961
      %v2272 = vpop.f32.mrf.mxu0
      %v2273 = vadd.f32 %v2224, %v2272
      %v2274 = vpop.f32.mrf.mxu0
      %v2275 = vadd.f32 %v2226, %v2274
      %2276 = vmatmul.bf16.gmra.mxu0 %v964
      %v2277 = vpop.f32.mrf.mxu0
      %v2278 = vadd.f32 %v2229, %v2277
      %v2279 = vpop.f32.mrf.mxu0
      %v2280 = vadd.f32 %v2231, %v2279
      %2281 = vdwg.mxu0
      %v2282 = vmul.f32 %v2243, %v1214
      %v2283 = vmul.f32 %v2245, %v1219
      %v2284 = vmul.f32 %v2248, %v1224
      %v2285 = vmul.f32 %v2250, %v1229
      %v2286 = vmul.f32 %v2253, %v1234
      %v2287 = vmul.f32 %v2255, %v1239
      %v2288 = vmul.f32 %v2258, %v1244
      %v2289 = vmul.f32 %v2260, %v1249
      %v2290 = vmul.f32 %v2263, %v1254
      %v2291 = vmul.f32 %v2265, %v1259
      %v2292 = vmul.f32 %v2268, %v1264
      %v2293 = vmul.f32 %v2270, %v1269
      %v2294 = vmul.f32 %v2273, %v1274
      %v2295 = vmul.f32 %v2275, %v1279
      %v2296 = vmul.f32 %v2278, %v1284
      %v2297 = vmul.f32 %v2280, %v1289
      %v2298 = vadd.f32 %v2282, %v1310
      %v2299 = vadd.f32 %v2283, %v1315
      %v2300 = vadd.f32 %v2284, %v1320
      %v2301 = vadd.f32 %v2285, %v1325
      %v2302 = vadd.f32 %v2286, %v1330
      %v2303 = vadd.f32 %v2287, %v1335
      %v2304 = vadd.f32 %v2288, %v1340
      %v2305 = vadd.f32 %v2289, %v1345
      %v2306 = vadd.f32 %v2290, %v1350
      %v2307 = vadd.f32 %v2291, %v1355
      %v2308 = vadd.f32 %v2292, %v1360
      %v2309 = vadd.f32 %v2293, %v1365
      %v2310 = vadd.f32 %v2294, %v1370
      %v2311 = vadd.f32 %v2295, %v1375
      %v2312 = vadd.f32 %v2296, %v1380
      %v2313 = vadd.f32 %v2297, %v1385
      %v2314 = vmax.f32 %v2298, 0.0
      %v2315 = vmax.f32 %v2299, 0.0
      %v2316 = vmax.f32 %v2300, 0.0
      %v2317 = vmax.f32 %v2301, 0.0
      %v2318 = vmax.f32 %v2302, 0.0
      %v2319 = vmax.f32 %v2303, 0.0
      %v2320 = vmax.f32 %v2304, 0.0
      %v2321 = vmax.f32 %v2305, 0.0
      %v2322 = vmax.f32 %v2306, 0.0
      %v2323 = vmax.f32 %v2307, 0.0
      %v2324 = vmax.f32 %v2308, 0.0
      %v2325 = vmax.f32 %v2309, 0.0
      %v2326 = vmax.f32 %v2310, 0.0
      %v2327 = vmax.f32 %v2311, 0.0
      %v2328 = vmax.f32 %v2312, 0.0
      %v2329 = vmax.f32 %v2313, 0.0
      %v2330 = vmax.f32 %v2021, %v2314
      %v2331 = vmax.f32 %v2022, %v2315
      %v2332 = vmax.f32 %v2023, %v2316
      %v2333 = vmax.f32 %v2024, %v2317
      %v2334 = vmax.f32 %v2025, %v2318
      %v2335 = vmax.f32 %v2026, %v2319
      %v2336 = vmax.f32 %v2027, %v2320
      %v2337 = vmax.f32 %v2028, %v2321
      %v2338 = vmax.f32 %v2029, %v2322
      %v2339 = vmax.f32 %v2030, %v2323
      %v2340 = vmax.f32 %v2031, %v2324
      %v2341 = vmax.f32 %v2032, %v2325
      %v2342 = vmax.f32 %v2033, %v2326
      %v2343 = vmax.f32 %v2034, %v2327
      %v2344 = vmax.f32 %v2035, %v2328
      %v2345 = vmax.f32 %v2036, %v2329
      %vm2346 = vcmask 15360
      %v2347 = vsel %vm2346, %v2330, 0.0
      %2348 = vadd.xlane.f32.xlu0 %v2347
      %v2349 = vpop.xlane.xlu0 %2348
      %v2350 = vsel %vm2346, %v2331, 0.0
      %2351 = vadd.xlane.f32.xlu0 %v2350
      %v2352 = vpop.xlane.xlu0 %2351
      %v2353 = vsel %vm2346, %v2332, 0.0
      %2354 = vadd.xlane.f32.xlu0 %v2353
      %v2355 = vpop.xlane.xlu0 %2354
      %v2356 = vsel %vm2346, %v2333, 0.0
      %2357 = vadd.xlane.f32.xlu0 %v2356
      %v2358 = vpop.xlane.xlu0 %2357
      %v2359 = vsel %vm2346, %v2334, 0.0
      %2360 = vadd.xlane.f32.xlu0 %v2359
      %v2361 = vpop.xlane.xlu0 %2360
      %v2362 = vsel %vm2346, %v2335, 0.0
      %2363 = vadd.xlane.f32.xlu0 %v2362
      %v2364 = vpop.xlane.xlu0 %2363
      %v2365 = vsel %vm2346, %v2336, 0.0
      %2366 = vadd.xlane.f32.xlu0 %v2365
      %v2367 = vpop.xlane.xlu0 %2366
      %v2368 = vsel %vm2346, %v2337, 0.0
      %2369 = vadd.xlane.f32.xlu0 %v2368
      %v2370 = vpop.xlane.xlu0 %2369
      %v2371 = vsel %vm2346, %v2338, 0.0
      %2372 = vadd.xlane.f32.xlu0 %v2371
      %v2373 = vpop.xlane.xlu0 %2372
      %v2374 = vsel %vm2346, %v2339, 0.0
      %2375 = vadd.xlane.f32.xlu0 %v2374
      %v2376 = vpop.xlane.xlu0 %2375
      %v2377 = vsel %vm2346, %v2340, 0.0
      %2378 = vadd.xlane.f32.xlu0 %v2377
      %v2379 = vpop.xlane.xlu0 %2378
      %v2380 = vsel %vm2346, %v2341, 0.0
      %2381 = vadd.xlane.f32.xlu0 %v2380
      %v2382 = vpop.xlane.xlu0 %2381
      %v2383 = vsel %vm2346, %v2342, 0.0
      %2384 = vadd.xlane.f32.xlu0 %v2383
      %v2385 = vpop.xlane.xlu0 %2384
      %v2386 = vsel %vm2346, %v2343, 0.0
      %2387 = vadd.xlane.f32.xlu0 %v2386
      %v2388 = vpop.xlane.xlu0 %2387
      %v2389 = vsel %vm2346, %v2344, 0.0
      %2390 = vadd.xlane.f32.xlu0 %v2389
      %v2391 = vpop.xlane.xlu0 %2390
      %v2392 = vsel %vm2346, %v2345, 0.0
      %2393 = vadd.xlane.f32.xlu0 %v2392
      %v2394 = vpop.xlane.xlu0 %2393
      %v2411 = vlaneseq
      %v2412 = vand.u32 %v2411, 127
      %v2413 = vperm.slane %v2349, %v2412
      %v2414 = vadd.s32 %v2412, 4294967288
      %v2415 = vperm.slane %v2352, %v2414
      %vm2416 = vcmask 130112
      %v2417 = vsel %vm2416, %v2415, %v2413
      %v2418 = vadd.s32 %v2412, 4294967280
      %v2419 = vperm.slane %v2355, %v2418
      %vm2420 = vcmask 195712
      %v2421 = vsel %vm2420, %v2419, %v2417
      %v2422 = vadd.s32 %v2412, 4294967272
      %v2423 = vperm.slane %v2358, %v2422
      %vm2424 = vcmask 261312
      %v2425 = vsel %vm2424, %v2423, %v2421
      %v2426 = vadd.s32 %v2412, 4294967264
      %v2427 = vperm.slane %v2361, %v2426
      %vm2428 = vcmask 326912
      %v2429 = vsel %vm2428, %v2427, %v2425
      %v2430 = vadd.s32 %v2412, 4294967256
      %v2431 = vperm.slane %v2364, %v2430
      %vm2432 = vcmask 392512
      %v2433 = vsel %vm2432, %v2431, %v2429
      %v2434 = vadd.s32 %v2412, 4294967248
      %v2435 = vperm.slane %v2367, %v2434
      %vm2436 = vcmask 458112
      %v2437 = vsel %vm2436, %v2435, %v2433
      %v2438 = vadd.s32 %v2412, 4294967240
      %v2439 = vperm.slane %v2370, %v2438
      %vm2440 = vcmask 523712
      %v2441 = vsel %vm2440, %v2439, %v2437
      %v2442 = vadd.s32 %v2412, 4294967232
      %v2443 = vperm.slane %v2373, %v2442
      %vm2444 = vcmask 589312
      %v2445 = vsel %vm2444, %v2443, %v2441
      %v2446 = vadd.s32 %v2412, 4294967224
      %v2447 = vperm.slane %v2376, %v2446
      %vm2448 = vcmask 654912
      %v2449 = vsel %vm2448, %v2447, %v2445
      %v2450 = vadd.s32 %v2412, 4294967216
      %v2451 = vperm.slane %v2379, %v2450
      %vm2452 = vcmask 720512
      %v2453 = vsel %vm2452, %v2451, %v2449
      %v2454 = vadd.s32 %v2412, 4294967208
      %v2455 = vperm.slane %v2382, %v2454
      %vm2456 = vcmask 786112
      %v2457 = vsel %vm2456, %v2455, %v2453
      %v2458 = vadd.s32 %v2412, 4294967200
      %v2459 = vperm.slane %v2385, %v2458
      %vm2460 = vcmask 851712
      %v2461 = vsel %vm2460, %v2459, %v2457
      %v2462 = vadd.s32 %v2412, 4294967192
      %v2463 = vperm.slane %v2388, %v2462
      %vm2464 = vcmask 917312
      %v2465 = vsel %vm2464, %v2463, %v2461
      %v2466 = vadd.s32 %v2412, 4294967184
      %v2467 = vperm.slane %v2391, %v2466
      %vm2468 = vcmask 982912
      %v2469 = vsel %vm2468, %v2467, %v2465
      %v2470 = vadd.s32 %v2412, 4294967176
      %v2471 = vperm.slane %v2394, %v2470
      %vm2472 = vcmask 1048512
      %v2473 = vsel %vm2472, %v2471, %v2469
      %2475 = vst [vmem:[%s307] sm:$0x1] %v2473
      %p2476 = scmp.lt.s32.totalorder %s20, 1
      %s2477 = scalar_select %p2476, %s20, 1
      %p2478 = scmp.lt.s32.totalorder %s21, 7
      %s2479 = scalar_select %p2478, %s21, 7
      %s2480 = smul.addr %s2477, 8
      %s2481 = sadd.s32 %s2479, %s2480
      %s2482 = scalar_lea.vmem %s5, %s2481
      // Predicated region
      $region41: #{forward.6} parent=39 // pred_check
        %p2483 = pneg %p169
      $region42: #{forward.6} parent=39 // pred_check_branch
        %2485 = sbr.rel (%p2483) target = $region44
      $region43: #{forward.6} parent=39 // pred_region
        _
      $region44: #{forward.6} parent=39 // pred_fallthru
        _
    $region40: #{forward.6} parent=5 // pred_fallthru
      _
    %p2486 = scmp.le.s32.totalorder 2, %s11
    // Predicated region
    $region45: #{forward.6} parent=5 // pred_check
      %p2487 = pneg %p2486
    $region46: #{forward.6} parent=5 // pred_check_branch
      %2489 = sbr.rel (%p2487) target = $region48
    $region47: #{forward.6} parent=5 // pred_region
      %s2490 = ssub.s32 %s11, 2
      // Predicated region
      $region49: #{forward.6} parent=47 // pred_check
        %p2491 = pneg %p175
      $region50: #{forward.6} parent=47 // pred_check_branch
        %2493 = sbr.rel (%p2491) target = $region52
      $region51: #{forward.6} parent=47 // pred_region
        %p2494 = scmp.lt.s32.totalorder %s22, 1
        %s2495 = scalar_select %p2494, %s22, 1
        %p2496 = scmp.lt.s32.totalorder %s23, 7
        %s2497 = scalar_select %p2496, %s23, 7
        %s2498 = smul.addr %s2495, 8
        %s2499 = sadd.s32 %s2497, %s2498
        %s2500 = scalar_lea.vmem %s5, %s2499
      $region52: #{forward.6} parent=47 // pred_fallthru
        _
    $region48: #{forward.6} parent=5 // pred_fallthru
      _
  $region6: #{forward.6} parent=0 // loop_footer
    %s15 = sadd.s32 1, %s11
  $region7: #{forward.6} parent=0 // loop_footer_branch
    %10 = sbr.rel target = $region3
  $region8: #{forward.6} parent=0 // loop_exit
    _

// kernel: forward.5
$region0: #{forward.5}
  #allocation0 [shape = 'u32[]', space=smem, size = 0x4, offset = 0x4, fixed_abs, tag = 'smem constant byte address 0x4 - core index']
  #allocation1 [shape = 'u32[72,128]{1,0:T(1,128)}', space=vmem, size = 0x9000, scoped, tag = 'internal scratch']
  %s0 = inlined_call_operand.vmem [shape: bf16[2,34,4,2], index: 0, kind: input, shape index: {}, may-alias: {0,1}]
  %s1 = inlined_call_operand.vmem [shape: bf16[2,34,4,2], index: 1, kind: input, shape index: {}, may-alias: {0,1}]
  %s2 = inlined_call_operand.vmem [shape: bf16[64,9], index: 2, kind: input, shape index: {}]
  %s3 = inlined_call_operand.vmem [shape: f32[64,1], index: 3, kind: input, shape index: {}]
  %s4 = inlined_call_operand.vmem [shape: f32[64,1], index: 4, kind: input, shape index: {}]
  %s5 = inlined_call_operand.vmem [shape: bf16[2,18,2,64,3], index: 5, kind: output, shape index: {}]
  %s6 = sld [smem:[#allocation0]]
  $region53: #{forward.5} parent=0
    _
  %s8 = ssub.s32 1, %s6
  %s9 = scalar_select 0, %s8, %s6
  loop: start=0, step=1, limit=38
  $region2: #{forward.5} parent=0 // loop_pre_header
    _
  $region3: #{forward.5} parent=0 // loop_header
    %s11 = sphi 0, %s15
    %p12 = scmp.ge.s32.totalorder %s11, 38
    %s18 = sphi 0, %s30
    %s19 = sphi 0, %s26
    %s20 = sphi 0, %s18
    %s21 = sphi 0, %s19
    %s22 = sphi 0, %s20
    %s23 = sphi 0, %s21
    %s41 = sphi 0, %s43
    %s44 = sphi 0, %s41
    %s45 = sphi 0, %s44
    %s61 = sphi 0, %s45
    %s73 = sphi 0, %s75
    %s76 = sphi 0, %s73
    %s77 = sphi 0, %s76
    %s93 = sphi 0, %s77
    %s97 = sphi 0, %s97
    %s99 = sphi 0, %s97
    %s100 = sphi 0, %s99
    %s114 = sphi 0, %s100
    %s118 = sphi 0, %s118
    %s120 = sphi 0, %s118
    %s121 = sphi 0, %s120
    %s135 = sphi 0, %s121
    %s139 = sphi 0, %s139
    %s141 = sphi 0, %s139
    %s142 = sphi 0, %s141
    %s156 = sphi 0, %s142
    %s164 = sphi 0, %s166
    %s167 = sphi 0, %s164
    %s168 = sphi 0, %s167
    %s184 = sphi 0, %s168
  $region4: #{forward.5} parent=0 // loop_header_branch
    %14 = sbr.rel (%p12) target = $region8
  $region5: #{forward.5} parent=0 // loop_body
    %s16 = ssub.s32 %s11, 1
    %s17 = ssub.s32 %s11, 2
    %s24 = sadd.s32 1, %s19
    %p25 = scmp.ge.s32.totalorder %s24, 18
    %s26 = scalar_select %p25, 0, %s24
    %s27 = sadd.s32 1, %s18
    %s28 = scalar_select %p25, %s27, %s18
    %p29 = scmp.ge.s32.totalorder %s28, 2
    %s30 = scalar_select %p29, 0, %s28
    %s31 = ssub.s32 %s19, 1
    %p32 = scmp.gt.s32.totalorder %s31, 0
    %s33 = scalar_select %p32, %s31, 0
    %s34 = ssub.s32 %s26, 1
    %p35 = scmp.gt.s32.totalorder %s34, 0
    %s36 = scalar_select %p35, %s34, 0
    %s37 = ssub.s32 %s18, %s30
    %s38 = ssub.s32 %s33, %s36
    %s39 = sor.u32 %s37, %s38
    %p40 = scmp.eq.s32.totalorder %s39, 0
    %s42 = sadd.s32 %s41, 1
    %s43 = scalar_select %p40, %s41, %s42
    %p46 = pneg %p40
    %p47 = scmp.eq.s32.totalorder %s11, 35
    %p48 = por %p46, %p47
    %p49 = scmp.ne.s32.totalorder %s41, %s44
    %p50 = scmp.eq.s32.totalorder %s11, 0
    %p51 = por %p49, %p50
    %p52 = scmp.ne.s32.totalorder %s41, %s44
    %p53 = scmp.eq.s32.totalorder %s16, 35
    %p54 = por %p52, %p53
    %p55 = scmp.ne.s32.totalorder %s44, %s45
    %p56 = scmp.eq.s32.totalorder %s16, 0
    %p57 = por %p55, %p56
    %p58 = scmp.ne.s32.totalorder %s44, %s45
    %p59 = scmp.eq.s32.totalorder %s17, 35
    %p60 = por %p58, %p59
    %p62 = scmp.ne.s32.totalorder %s45, %s61
    %p63 = scmp.eq.s32.totalorder %s17, 0
    %p64 = por %p62, %p63
    %p65 = scmp.lt.s32.totalorder %s19, 16
    %s66 = scalar_select %p65, %s19, 16
    %p67 = scmp.lt.s32.totalorder %s26, 16
    %s68 = scalar_select %p67, %s26, 16
    %s69 = ssub.s32 %s18, %s30
    %s70 = ssub.s32 %s66, %s68
    %s71 = sor.u32 %s69, %s70
    %p72 = scmp.eq.s32.totalorder %s71, 0
    %s74 = sadd.s32 %s73, 1
    %s75 = scalar_select %p72, %s73, %s74
    %p78 = pneg %p72
    %p79 = scmp.eq.s32.totalorder %s11, 35
    %p80 = por %p78, %p79
    %p81 = scmp.ne.s32.totalorder %s73, %s76
    %p82 = scmp.eq.s32.totalorder %s11, 0
    %p83 = por %p81, %p82
    %p84 = scmp.ne.s32.totalorder %s73, %s76
    %p85 = scmp.eq.s32.totalorder %s16, 35
    %p86 = por %p84, %p85
    %p87 = scmp.ne.s32.totalorder %s76, %s77
    %p88 = scmp.eq.s32.totalorder %s16, 0
    %p89 = por %p87, %p88
    %p90 = scmp.ne.s32.totalorder %s76, %s77
    %p91 = scmp.eq.s32.totalorder %s17, 35
    %p92 = por %p90, %p91
    %p94 = scmp.ne.s32.totalorder %s77, %s93
    %p95 = scmp.eq.s32.totalorder %s17, 0
    %p96 = por %p94, %p95
    %s98 = sadd.s32 %s97, 1
    %p101 = scmp.eq.s32.totalorder %s11, 35
    %p102 = scmp.ne.s32.totalorder %s97, %s99
    %p103 = scmp.eq.s32.totalorder %s11, 0
    %p104 = por %p102, %p103
    %p105 = scmp.ne.s32.totalorder %s97, %s99
    %p106 = scmp.eq.s32.totalorder %s16, 35
    %p107 = por %p105, %p106
    %p108 = scmp.ne.s32.totalorder %s99, %s100
    %p109 = scmp.eq.s32.totalorder %s16, 0
    %p110 = por %p108, %p109
    %p111 = scmp.ne.s32.totalorder %s99, %s100
    %p112 = scmp.eq.s32.totalorder %s17, 35
    %p113 = por %p111, %p112
    %p115 = scmp.ne.s32.totalorder %s100, %s114
    %p116 = scmp.eq.s32.totalorder %s17, 0
    %p117 = por %p115, %p116
    %s119 = sadd.s32 %s118, 1
    %p122 = scmp.eq.s32.totalorder %s11, 35
    %p123 = scmp.ne.s32.totalorder %s118, %s120
    %p124 = scmp.eq.s32.totalorder %s11, 0
    %p125 = por %p123, %p124
    %p126 = scmp.ne.s32.totalorder %s118, %s120
    %p127 = scmp.eq.s32.totalorder %s16, 35
    %p128 = por %p126, %p127
    %p129 = scmp.ne.s32.totalorder %s120, %s121
    %p130 = scmp.eq.s32.totalorder %s16, 0
    %p131 = por %p129, %p130
    %p132 = scmp.ne.s32.totalorder %s120, %s121
    %p133 = scmp.eq.s32.totalorder %s17, 35
    %p134 = por %p132, %p133
    %p136 = scmp.ne.s32.totalorder %s121, %s135
    %p137 = scmp.eq.s32.totalorder %s17, 0
    %p138 = por %p136, %p137
    %s140 = sadd.s32 %s139, 1
    %p143 = scmp.eq.s32.totalorder %s11, 35
    %p144 = scmp.ne.s32.totalorder %s139, %s141
    %p145 = scmp.eq.s32.totalorder %s11, 0
    %p146 = por %p144, %p145
    %p147 = scmp.ne.s32.totalorder %s139, %s141
    %p148 = scmp.eq.s32.totalorder %s16, 35
    %p149 = por %p147, %p148
    %p150 = scmp.ne.s32.totalorder %s141, %s142
    %p151 = scmp.eq.s32.totalorder %s16, 0
    %p152 = por %p150, %p151
    %p153 = scmp.ne.s32.totalorder %s141, %s142
    %p154 = scmp.eq.s32.totalorder %s17, 35
    %p155 = por %p153, %p154
    %p157 = scmp.ne.s32.totalorder %s142, %s156
    %p158 = scmp.eq.s32.totalorder %s17, 0
    %p159 = por %p157, %p158
    %s160 = ssub.s32 %s18, %s30
    %s161 = ssub.s32 %s19, %s26
    %s162 = sor.u32 %s160, %s161
    %p163 = scmp.eq.s32.totalorder %s162, 0
    %s165 = sadd.s32 %s164, 1
    %s166 = scalar_select %p163, %s164, %s165
    %p169 = pneg %p163
    %p170 = scmp.eq.s32.totalorder %s11, 35
    %p171 = por %p169, %p170
    %p172 = scmp.ne.s32.totalorder %s164, %s167
    %p173 = scmp.eq.s32.totalorder %s11, 0
    %p174 = por %p172, %p173
    %p175 = scmp.ne.s32.totalorder %s164, %s167
    %p176 = scmp.eq.s32.totalorder %s16, 35
    %p177 = por %p175, %p176
    %p178 = scmp.ne.s32.totalorder %s167, %s168
    %p179 = scmp.eq.s32.totalorder %s16, 0
    %p180 = por %p178, %p179
    %p181 = scmp.ne.s32.totalorder %s167, %s168
    %p182 = scmp.eq.s32.totalorder %s17, 35
    %p183 = por %p181, %p182
    %p185 = scmp.ne.s32.totalorder %s168, %s184
    %p186 = scmp.eq.s32.totalorder %s17, 0
    %p187 = por %p185, %p186
    %p188 = scmp.le.s32.totalorder 1, %s11
    %p189 = scmp.lt.s32.totalorder %s11, 37
    %p190 = pnand %p188, %p189
    %p191 = pneg %p190
    // Predicated region
    $region9: #{forward.5} parent=5 // pred_check
      _
    $region10: #{forward.5} parent=5 // pred_check_branch
      %193 = sbr.rel (%p190) target = $region12
    $region11: #{forward.5} parent=5 // pred_region
      %s194 = ssub.s32 %s11, 1
      // Predicated region
      $region13: #{forward.5} parent=11 // pred_check
        %p195 = pneg %p110
      $region14: #{forward.5} parent=11 // pred_check_branch
        %197 = sbr.rel (%p195) target = $region16
      $region15: #{forward.5} parent=11 // pred_region
        _
      $region16: #{forward.5} parent=11 // pred_fallthru
        _
      // Predicated region
      $region17: #{forward.5} parent=11 // pred_check
        %p198 = pneg %p131
      $region18: #{forward.5} parent=11 // pred_check_branch
        %200 = sbr.rel (%p198) target = $region20
      $region19: #{forward.5} parent=11 // pred_region
        _
      $region20: #{forward.5} parent=11 // pred_fallthru
        _
      // Predicated region
      $region21: #{forward.5} parent=11 // pred_check
        %p201 = pneg %p152
      $region22: #{forward.5} parent=11 // pred_check_branch
        %203 = sbr.rel (%p201) target = $region24
      $region23: #{forward.5} parent=11 // pred_region
        _
      $region24: #{forward.5} parent=11 // pred_fallthru
        _
    $region12: #{forward.5} parent=5 // pred_fallthru
      _
    %p204 = scmp.lt.s32.totalorder %s11, 36
    // Predicated region
    $region25: #{forward.5} parent=5 // pred_check
      %p205 = pneg %p204
    $region26: #{forward.5} parent=5 // pred_check_branch
      %207 = sbr.rel (%p205) target = $region28
    $region27: #{forward.5} parent=5 // pred_region
      // Predicated region
      $region29: #{forward.5} parent=27 // pred_check
        %p208 = pneg %p51
      $region30: #{forward.5} parent=27 // pred_check_branch
        %210 = sbr.rel (%p208) target = $region32
      $region31: #{forward.5} parent=27 // pred_region
        %s211 = ssub.s32 %s19, 1
        %p212 = scmp.gt.s32.totalorder %s211, 0
        %s213 = scalar_select %p212, %s211, 0
        %s214 = smul.u32 2, %s213
        %p215 = scmp.lt.s32.totalorder %s18, 1
        %s216 = scalar_select %p215, %s18, 1
        %p217 = scmp.lt.s32.totalorder %s214, 33
        %s218 = scalar_select %p217, %s214, 33
        %s219 = smul.addr %s216, 34
        %s220 = sadd.s32 %s218, %s219
        %s221 = smul.addr %s220, 2
        %s222 = scalar_lea.vmem %s0, %s221
        %s223 = ssub.s32 %s19, 1
        %p224 = scmp.gt.s32.totalorder %s223, 0
        %s225 = scalar_select %p224, %s223, 0
        %s226 = smul.u32 2, %s225
      $region32: #{forward.5} parent=27 // pred_fallthru
        _
      // Predicated region
      $region33: #{forward.5} parent=27 // pred_check
        %p227 = pneg %p83
      $region34: #{forward.5} parent=27 // pred_check_branch
        %229 = sbr.rel (%p227) target = $region36
      $region35: #{forward.5} parent=27 // pred_region
        %p230 = scmp.lt.s32.totalorder %s19, 16
        %s231 = scalar_select %p230, %s19, 16
        %s232 = smul.u32 2, %s231
        %p233 = scmp.lt.s32.totalorder %s18, 1
        %s234 = scalar_select %p233, %s18, 1
        %p235 = scmp.lt.s32.totalorder %s232, 33
        %s236 = scalar_select %p235, %s232, 33
        %s237 = smul.addr %s234, 34
        %s238 = sadd.s32 %s236, %s237
        %s239 = smul.addr %s238, 2
        %s240 = scalar_lea.vmem %s1, %s239
        %p241 = scmp.lt.s32.totalorder %s19, 16
        %s242 = scalar_select %p241, %s19, 16
        %s243 = smul.u32 2, %s242
      $region36: #{forward.5} parent=27 // pred_fallthru
        _
    $region28: #{forward.5} parent=5 // pred_fallthru
      _
    %p244 = scmp.le.s32.totalorder 1, %s11
    %p245 = scmp.lt.s32.totalorder %s11, 37
    %p246 = pnand %p244, %p245
    %p247 = pneg %p246
    // Predicated region
    $region37: #{forward.5} parent=5 // pred_check
      _
    $region38: #{forward.5} parent=5 // pred_check_branch
      %249 = sbr.rel (%p246) target = $region40
    $region39: #{forward.5} parent=5 // pred_region
      %s250 = ssub.s32 %s11, 1
      %s251 = ssub.s32 %s21, 1
      %p252 = scmp.gt.s32.totalorder %s251, 0
      %s253 = scalar_select %p252, %s251, 0
      %s254 = smul.u32 2, %s253
      %p255 = scmp.lt.s32.totalorder %s20, 1
      %s256 = scalar_select %p255, %s20, 1
      %p257 = scmp.lt.s32.totalorder %s254, 33
      %s258 = scalar_select %p257, %s254, 33
      %s259 = smul.addr %s256, 34
      %s260 = sadd.s32 %s258, %s259
      %s261 = smul.addr %s260, 2
      %s262 = scalar_lea.vmem %s0, %s261
      %p263 = pneg %p57
      %p264 = pneg %p54
      %p265 = scmp.lt.s32.totalorder %s21, 16
      %s266 = scalar_select %p265, %s21, 16
      %s267 = smul.u32 2, %s266
      %p268 = scmp.lt.s32.totalorder %s20, 1
      %s269 = scalar_select %p268, %s20, 1
      %p270 = scmp.lt.s32.totalorder %s267, 33
      %s271 = scalar_select %p270, %s267, 33
      %s272 = smul.addr %s269, 34
      %s273 = sadd.s32 %s271, %s272
      %s274 = smul.addr %s273, 2
      %s275 = scalar_lea.vmem %s1, %s274
      %p276 = pneg %p89
      %p277 = pneg %p86
      %p278 = pneg %p110
      %p279 = pneg %p107
      %p280 = pneg %p131
      %p281 = pneg %p128
      %p282 = pneg %p152
      %p283 = pneg %p149
      %p284 = pneg %p180
      %p285 = pneg %p177
      %p286 = scmp.lt.s32.totalorder %s20, 1
      %s287 = scalar_select %p286, %s20, 1
      %p288 = scmp.lt.s32.totalorder %s21, 17
      %s289 = scalar_select %p288, %s21, 17
      %s290 = smul.addr %s289, 16
      %s291 = smul.addr %s287, 288
      %s292 = sadd.s32 %s290, %s291
      %s293 = smul.addr %s292, 4
      %s294 = scalar_lea.vmem %s5, %s293
      %s295 = ssub.s32 %s21, 1
      %p296 = scmp.gt.s32.totalorder %s295, 0
      %s297 = scalar_select %p296, %s295, 0
      %s298 = smul.u32 2, %s297
      %p299 = scmp.lt.s32.totalorder %s20, 1
      %s300 = scalar_select %p299, %s20, 1
      %p301 = scmp.lt.s32.totalorder %s298, 33
      %s302 = scalar_select %p301, %s298, 33
      %s303 = smul.addr %s300, 34
      %s304 = sadd.s32 %s302, %s303
      %s305 = smul.addr %s304, 2
      %s306 = scalar_lea.vmem %s0, %s305
      %s307 = ssub.s32 %s21, 1
      %p308 = scmp.gt.s32.totalorder %s307, 0
      %s309 = scalar_select %p308, %s307, 0
      %s310 = smul.u32 2, %s309
      %p311 = scmp.lt.s32.totalorder %s21, 16
      %s312 = scalar_select %p311, %s21, 16
      %s313 = smul.u32 2, %s312
      %p314 = scmp.lt.s32.totalorder %s20, 1
      %s315 = scalar_select %p314, %s20, 1
      %p316 = scmp.lt.s32.totalorder %s313, 33
      %s317 = scalar_select %p316, %s313, 33
      %s318 = smul.addr %s315, 34
      %s319 = sadd.s32 %s317, %s318
      %s320 = smul.addr %s319, 2
      %s321 = scalar_lea.vmem %s1, %s320
      %p322 = scmp.lt.s32.totalorder %s21, 16
      %s323 = scalar_select %p322, %s21, 16
      %s324 = smul.u32 2, %s323
      %p325 = scmp.lt.s32.totalorder %s20, 1
      %s326 = scalar_select %p325, %s20, 1
      %p327 = scmp.lt.s32.totalorder %s21, 17
      %s328 = scalar_select %p327, %s21, 17
      %s329 = smul.addr %s328, 16
      %s330 = smul.addr %s326, 288
      %s331 = sadd.s32 %s329, %s330
      %s332 = smul.addr %s331, 4
      %s333 = scalar_lea.vmem %s5, %s332
      %v335 = vld [vmem:[%s306] sm:$0x3]
      %v336 = vld [vmem:[%s306 + $0x2] sm:$0x3]
      %v337 = vld [vmem:[%s321] sm:$0x3]
      %v338 = vld [vmem:[%s321 + $0x2] sm:$0x3]
      %v339 = vld [vmem:[%s2] sm:$0xf]
      %v340 = vld [vmem:[%s2 + $0x4] sm:$0xf]
      %v341 = vld [vmem:[%s2 + $0x8] sm:$0xf]
      %v342 = vld [vmem:[%s2 + $0xc] sm:$0xf]
      %v343 = vld [vmem:[%s2 + $0x10] sm:$0xf]
      %v344 = vld [vmem:[%s2 + $0x14] sm:$0xf]
      %v345 = vld [vmem:[%s2 + $0x18] sm:$0xf]
      %v346 = vld [vmem:[%s2 + $0x1c] sm:$0xf]
      %v347 = vld [vmem:[%s3] sm:$0xff]
      %v348 = vld [vmem:[%s3 + $0x8] sm:$0xff]
      %v349 = vld [vmem:[%s3 + $0x10] sm:$0xff]
      %v350 = vld [vmem:[%s3 + $0x18] sm:$0xff]
      %v351 = vld [vmem:[%s3 + $0x20] sm:$0xff]
      %v352 = vld [vmem:[%s3 + $0x28] sm:$0xff]
      %v353 = vld [vmem:[%s3 + $0x30] sm:$0xff]
      %v354 = vld [vmem:[%s3 + $0x38] sm:$0xff]
      %v355 = vld [vmem:[%s4] sm:$0xff]
      %v356 = vld [vmem:[%s4 + $0x8] sm:$0xff]
      %v357 = vld [vmem:[%s4 + $0x10] sm:$0xff]
      %v358 = vld [vmem:[%s4 + $0x18] sm:$0xff]
      %v359 = vld [vmem:[%s4 + $0x20] sm:$0xff]
      %v360 = vld [vmem:[%s4 + $0x28] sm:$0xff]
      %v361 = vld [vmem:[%s4 + $0x30] sm:$0xff]
      %v362 = vld [vmem:[%s4 + $0x38] sm:$0xff]
      %364 = vst [vmem:[#allocation1] ss:$4 sm:$0xff] %v335
      %v365 = vld.sshfl [vmem:[#allocation1] sm:$0xff pattern:$0x73625140]
      %v366 = vshrl.u32 %v365, 16
      %v368 = vrot.slane %v366, 1
      %369 = vrot.lane.b32.xlu0 %v368, 1
      %v370 = vpop.permute.xlu0 %369
      %vm371 = vcmask 7168
      %v374 = vsel %vm371, 0, %v370
      %377 = vst [vmem:[#allocation1] ss:$4 sm:$0xff] %v336
      %v378 = vld.sshfl [vmem:[#allocation1] sm:$0xff pattern:$0x73625140]
      %v379 = vshrl.u32 %v378, 16
      %v381 = vrot.slane %v379, 1
      %382 = vrot.lane.b32.xlu0 %v381, 1
      %v383 = vpop.permute.xlu0 %382
      %v385 = vsel %vm371, 0, %v383
      %388 = vst [vmem:[#allocation1] ss:$4 sm:$0xff] %v337
      %v389 = vld.sshfl [vmem:[#allocation1] sm:$0xff pattern:$0x73625140]
      %v390 = vshrl.u32 %v389, 16
      %v392 = vrot.slane %v390, 1
      %393 = vrot.lane.b32.xlu0 %v392, 1
      %v394 = vpop.permute.xlu0 %393
      %v396 = vsel %vm371, 0, %v394
      %397 = vst [vmem:[#allocation1] ss:$4 sm:$0xff] %v335
      %v398 = vld.sshfl [vmem:[#allocation1] sm:$0xff pattern:$0x73625140]
      %v399 = vshll.u32 %v398, 16
      %402 = vst [vmem:[#allocation1] ss:$4 sm:$0xff] %v335
      %v403 = vld.sshfl [vmem:[#allocation1] sm:$0xff pattern:$0x73625140]
      %v404 = vshrl.u32 %v403, 16
      %v406 = vrot.slane %v404, 7
      %v407 = vshll.u32 %v385, 16
      %v409 = vrot.slane %v407, 7
      %s411 = scalar_lea.vmem [#allocation1], 1
      %412 = vst [vmem:[%s411] ss:$4 sm:$0xff] %v336
      %v413 = vld.sshfl [vmem:[#allocation1] sm:$0xff pattern:$0x73625140]
      %s414 = scalar_lea.vmem [#allocation1], 1
      %415 = vst [vmem:[%s414] ss:$4 sm:$0xff] %v336
      %v416 = vld.sshfl [vmem:[#allocation1] sm:$0xff pattern:$0x73625140]
      %v419 = vrot.slane %v396, 5
      %420 = vst [vmem:[#allocation1] ss:$4 sm:$0xff] %v337
      %v421 = vld.sshfl [vmem:[#allocation1] sm:$0xff pattern:$0x73625140]
      %v422 = vshll.u32 %v421, 16
      %v424 = vrot.slane %v422, 5
      %426 = vst [vmem:[#allocation1] ss:$4 sm:$0xff] %v337
      %v427 = vld.sshfl [vmem:[#allocation1] sm:$0xff pattern:$0x73625140]
      %v428 = vshrl.u32 %v427, 16
      %v430 = vrot.slane %v428, 4
      %vm431 = vcmask 1040384
      %vm432 = vsmask.f32 256
      %vm433 = vmand %vm431, %vm432
      %v434 = vsel %vm433, %v374, %v399
      %vm435 = vcmask 1040384
      %v438 = vsel %vm435, %v434, %v406
      %vm440 = vcmask 1041408
      %vm441 = vsmask.f32 1280
      %vm442 = vmand %vm440, %vm441
      %v443 = vsel %vm442, %v438, %v409
      %vm444 = vcmask 1041408
      %v446 = vsel %vm444, %v443, %v413
      %vm448 = vcmask 1042432
      %vm449 = vsmask.f32 2304
      %vm450 = vmand %vm448, %vm449
      %v451 = vsel %vm450, %v446, %v416
      %vm452 = vcmask 1042432
      %v455 = vsel %vm452, %v451, %v419
      %vm457 = vcmask 1043456
      %vm458 = vsmask.f32 3328
      %vm459 = vmand %vm457, %vm458
      %v460 = vsel %vm459, %v455, %v424
      %vm461 = vcmask 1043456
      %v464 = vsel %vm461, %v460, %v430
      %v473 = vunpack.c.l.b16 %v339
      %v474 = vunpack.c.l.b16 %v340
      %v475 = vunpack.c.l.b16 %v341
      %v476 = vunpack.c.l.b16 %v342
      %v477 = vunpack.c.l.b16 %v343
      %v478 = vunpack.c.l.b16 %v344
      %v479 = vunpack.c.l.b16 %v345
      %v480 = vunpack.c.l.b16 %v346
      %v481 = vpack.c.b16 %v474, %v473
      %v482 = vpack.c.b16 %v476, %v475
      %v483 = vpack.c.b16 %v478, %v477
      %v484 = vpack.c.b16 %v480, %v479
      %vm485 = vcmask 72704
      %v487 = vsel %vm485, %v481, 0
      %v490 = vsel %vm485, %v482, 0
      %v493 = vsel %vm485, %v483, 0
      %v496 = vsel %vm485, %v484, 0
      %vm498 = vcmask 1044480
      %v499 = vsel %vm461, 4294967295, 65535
      %v500 = vsel %vm498, %v499, 0
      %v501 = vand.u32 %v464, %v500
      %503 = vmatpush.bf16.msra.mxu0 0
      %504 = vmatpush.bf16.msra.mxu0 0
      %505 = vmatpush.bf16.msra.mxu0 0
      %506 = vmatpush.bf16.msra.mxu0 0
      %507 = vmatpush.bf16.msra.mxu0 0
      %508 = vmatpush.bf16.msra.mxu0 0
      %509 = vmatpush.bf16.msra.mxu0 0
      %510 = vmatpush.bf16.msra.mxu0 %v501
      %511 = vmatmul.bf16.gmra.mxu0 %v487
      %v512 = vpop.f32.mrf.mxu0
      %v513 = vadd.f32 0.0, %v512
      %v514 = vpop.f32.mrf.mxu0
      %v515 = vadd.f32 0.0, %v514
      %516 = vmatmul.bf16.gmra.mxu0 %v490
      %v517 = vpop.f32.mrf.mxu0
      %v518 = vadd.f32 0.0, %v517
      %v519 = vpop.f32.mrf.mxu0
      %v520 = vadd.f32 0.0, %v519
      %521 = vmatmul.bf16.gmra.mxu0 %v493
      %v522 = vpop.f32.mrf.mxu0
      %v523 = vadd.f32 0.0, %v522
      %v524 = vpop.f32.mrf.mxu0
      %v525 = vadd.f32 0.0, %v524
      %526 = vmatmul.bf16.gmra.mxu0 %v496
      %v527 = vpop.f32.mrf.mxu0
      %v528 = vadd.f32 0.0, %v527
      %v529 = vpop.f32.mrf.mxu0
      %v530 = vadd.f32 0.0, %v529
      %531 = vdwg.mxu0
      %533 = vset.pattern.permute.xlu0 0
      %534 = vperm.xlu0 %533, %v347
      %v535 = vpop.permute.xlu0 %534
      %538 = vset.pattern.permute.xlu0 0
      %539 = vperm.xlu0 %538, %v348
      %v540 = vpop.permute.xlu0 %539
      %543 = vset.pattern.permute.xlu0 0
      %544 = vperm.xlu0 %543, %v349
      %v545 = vpop.permute.xlu0 %544
      %548 = vset.pattern.permute.xlu0 0
      %549 = vperm.xlu0 %548, %v350
      %v550 = vpop.permute.xlu0 %549
      %553 = vset.pattern.permute.xlu0 0
      %554 = vperm.xlu0 %553, %v351
      %v555 = vpop.permute.xlu0 %554
      %558 = vset.pattern.permute.xlu0 0
      %559 = vperm.xlu0 %558, %v352
      %v560 = vpop.permute.xlu0 %559
      %563 = vset.pattern.permute.xlu0 0
      %564 = vperm.xlu0 %563, %v353
      %v565 = vpop.permute.xlu0 %564
      %568 = vset.pattern.permute.xlu0 0
      %569 = vperm.xlu0 %568, %v354
      %v570 = vpop.permute.xlu0 %569
      %v572 = vmul.f32 %v513, %v535
      %v573 = vmul.f32 %v515, %v540
      %v574 = vmul.f32 %v518, %v545
      %v575 = vmul.f32 %v520, %v550
      %v576 = vmul.f32 %v523, %v555
      %v577 = vmul.f32 %v525, %v560
      %v578 = vmul.f32 %v528, %v565
      %v579 = vmul.f32 %v530, %v570
      %581 = vset.pattern.permute.xlu0 0
      %582 = vperm.xlu0 %581, %v355
      %v583 = vpop.permute.xlu0 %582
      %586 = vset.pattern.permute.xlu0 0
      %587 = vperm.xlu0 %586, %v356
      %v588 = vpop.permute.xlu0 %587
      %591 = vset.pattern.permute.xlu0 0
      %592 = vperm.xlu0 %591, %v357
      %v593 = vpop.permute.xlu0 %592
      %596 = vset.pattern.permute.xlu0 0
      %597 = vperm.xlu0 %596, %v358
      %v598 = vpop.permute.xlu0 %597
      %601 = vset.pattern.permute.xlu0 0
      %602 = vperm.xlu0 %601, %v359
      %v603 = vpop.permute.xlu0 %602
      %606 = vset.pattern.permute.xlu0 0
      %607 = vperm.xlu0 %606, %v360
      %v608 = vpop.permute.xlu0 %607
      %611 = vset.pattern.permute.xlu0 0
      %612 = vperm.xlu0 %611, %v361
      %v613 = vpop.permute.xlu0 %612
      %616 = vset.pattern.permute.xlu0 0
      %617 = vperm.xlu0 %616, %v362
      %v618 = vpop.permute.xlu0 %617
      %v620 = vadd.f32 %v572, %v583
      %v621 = vadd.f32 %v573, %v588
      %v622 = vadd.f32 %v574, %v593
      %v623 = vadd.f32 %v575, %v598
      %v624 = vadd.f32 %v576, %v603
      %v625 = vadd.f32 %v577, %v608
      %v626 = vadd.f32 %v578, %v613
      %v627 = vadd.f32 %v579, %v618
      %v628 = vmax.f32 %v620, 0.0
      %v629 = vmax.f32 %v621, 0.0
      %v630 = vmax.f32 %v622, 0.0
      %v631 = vmax.f32 %v623, 0.0
      %v632 = vmax.f32 %v624, 0.0
      %v633 = vmax.f32 %v625, 0.0
      %v634 = vmax.f32 %v626, 0.0
      %v635 = vmax.f32 %v627, 0.0
      %636 = vst [vmem:[#allocation1] ss:$4 sm:$0xff] %v336
      %v637 = vld.sshfl [vmem:[#allocation1] sm:$0xff pattern:$0x73625140]
      %v638 = vshll.u32 %v637, 16
      %v640 = vrot.slane %v638, 7
      %642 = vst [vmem:[#allocation1] ss:$4 sm:$0xff] %v336
      %v643 = vld.sshfl [vmem:[#allocation1] sm:$0xff pattern:$0x73625140]
      %v644 = vshrl.u32 %v643, 16
      %v646 = vrot.slane %v644, 6
      %647 = vst [vmem:[#allocation1] ss:$4 sm:$0xff] %v336
      %v648 = vld.sshfl [vmem:[#allocation1] sm:$0xff pattern:$0x73625140]
      %v649 = vshll.u32 %v648, 16
      %v651 = vrot.slane %v649, 7
      %653 = vst [vmem:[#allocation1] ss:$4 sm:$0xff] %v337
      %v654 = vld.sshfl [vmem:[#allocation1] sm:$0xff pattern:$0x73625140]
      %v656 = vrot.slane %v654, 5
      %657 = vst [vmem:[#allocation1] ss:$4 sm:$0xff] %v337
      %v658 = vld.sshfl [vmem:[#allocation1] sm:$0xff pattern:$0x73625140]
      %v660 = vrot.slane %v658, 5
      %662 = vst [vmem:[#allocation1] ss:$4 sm:$0xff] %v337
      %v663 = vld.sshfl [vmem:[#allocation1] sm:$0xff pattern:$0x73625140]
      %v665 = vrot.slane %v663, 5
      %v667 = vsel %vm442, %v335, %v640
      %v670 = vsel %vm444, %v667, %v646
      %v672 = vsel %vm450, %v670, %v651
      %v675 = vsel %vm452, %v672, %v656
      %v677 = vsel %vm459, %v675, %v660
      %v680 = vsel %vm461, %v677, %v665
      %v681 = vand.u32 %v680, %v500
      %683 = vmatpush.bf16.msra.mxu0 0
      %684 = vmatpush.bf16.msra.mxu0 0
      %685 = vmatpush.bf16.msra.mxu0 0
      %686 = vmatpush.bf16.msra.mxu0 0
      %687 = vmatpush.bf16.msra.mxu0 0
      %688 = vmatpush.bf16.msra.mxu0 0
      %689 = vmatpush.bf16.msra.mxu0 0
      %690 = vmatpush.bf16.msra.mxu0 %v681
      %691 = vmatmul.bf16.gmra.mxu0 %v487
      %v692 = vpop.f32.mrf.mxu0
      %v693 = vadd.f32 0.0, %v692
      %v694 = vpop.f32.mrf.mxu0
      %v695 = vadd.f32 0.0, %v694
      %696 = vmatmul.bf16.gmra.mxu0 %v490
      %v697 = vpop.f32.mrf.mxu0
      %v698 = vadd.f32 0.0, %v697
      %v699 = vpop.f32.mrf.mxu0
      %v700 = vadd.f32 0.0, %v699
      %701 = vmatmul.bf16.gmra.mxu0 %v493
      %v702 = vpop.f32.mrf.mxu0
      %v703 = vadd.f32 0.0, %v702
      %v704 = vpop.f32.mrf.mxu0
      %v705 = vadd.f32 0.0, %v704
      %706 = vmatmul.bf16.gmra.mxu0 %v496
      %v707 = vpop.f32.mrf.mxu0
      %v708 = vadd.f32 0.0, %v707
      %v709 = vpop.f32.mrf.mxu0
      %v710 = vadd.f32 0.0, %v709
      %711 = vdwg.mxu0
      %v712 = vmul.f32 %v693, %v535
      %v713 = vmul.f32 %v695, %v540
      %v714 = vmul.f32 %v698, %v545
      %v715 = vmul.f32 %v700, %v550
      %v716 = vmul.f32 %v703, %v555
      %v717 = vmul.f32 %v705, %v560
      %v718 = vmul.f32 %v708, %v565
      %v719 = vmul.f32 %v710, %v570
      %v720 = vadd.f32 %v712, %v583
      %v721 = vadd.f32 %v713, %v588
      %v722 = vadd.f32 %v714, %v593
      %v723 = vadd.f32 %v715, %v598
      %v724 = vadd.f32 %v716, %v603
      %v725 = vadd.f32 %v717, %v608
      %v726 = vadd.f32 %v718, %v613
      %v727 = vadd.f32 %v719, %v618
      %v728 = vmax.f32 %v720, 0.0
      %v729 = vmax.f32 %v721, 0.0
      %v730 = vmax.f32 %v722, 0.0
      %v731 = vmax.f32 %v723, 0.0
      %v732 = vmax.f32 %v724, 0.0
      %v733 = vmax.f32 %v725, 0.0
      %v734 = vmax.f32 %v726, 0.0
      %v735 = vmax.f32 %v727, 0.0
      %v736 = vmax.f32 %v628, %v728
      %v737 = vmax.f32 %v629, %v729
      %v738 = vmax.f32 %v630, %v730
      %v739 = vmax.f32 %v631, %v731
      %v740 = vmax.f32 %v632, %v732
      %v741 = vmax.f32 %v633, %v733
      %v742 = vmax.f32 %v634, %v734
      %v743 = vmax.f32 %v635, %v735
      %745 = vst [vmem:[#allocation1] ss:$4 sm:$0xff] %v338
      %v746 = vld.sshfl [vmem:[#allocation1] sm:$0xff pattern:$0x73625140]
      %v747 = vshrl.u32 %v746, 16
      %v749 = vrot.slane %v747, 1
      %750 = vrot.lane.b32.xlu0 %v749, 1
      %v751 = vpop.permute.xlu0 %750
      %v753 = vsel %vm371, 0, %v751
      %754 = vst [vmem:[#allocation1] ss:$4 sm:$0xff] %v336
      %v755 = vld.sshfl [vmem:[#allocation1] sm:$0xff pattern:$0x73625140]
      %v756 = vshll.u32 %v755, 16
      %759 = vst [vmem:[#allocation1] ss:$4 sm:$0xff] %v336
      %v760 = vld.sshfl [vmem:[#allocation1] sm:$0xff pattern:$0x73625140]
      %v761 = vshrl.u32 %v760, 16
      %v763 = vrot.slane %v761, 7
      %v764 = vshll.u32 %v396, 16
      %v766 = vrot.slane %v764, 7
      %s768 = scalar_lea.vmem [#allocation1], 1
      %769 = vst [vmem:[%s768] ss:$4 sm:$0xff] %v337
      %v770 = vld.sshfl [vmem:[#allocation1] sm:$0xff pattern:$0x73625140]
      %s771 = scalar_lea.vmem [#allocation1], 1
      %772 = vst [vmem:[%s771] ss:$4 sm:$0xff] %v337
      %v773 = vld.sshfl [vmem:[#allocation1] sm:$0xff pattern:$0x73625140]
      %v776 = vrot.slane %v753, 5
      %777 = vst [vmem:[#allocation1] ss:$4 sm:$0xff] %v338
      %v778 = vld.sshfl [vmem:[#allocation1] sm:$0xff pattern:$0x73625140]
      %v779 = vshll.u32 %v778, 16
      %v781 = vrot.slane %v779, 5
      %783 = vst [vmem:[#allocation1] ss:$4 sm:$0xff] %v338
      %v784 = vld.sshfl [vmem:[#allocation1] sm:$0xff pattern:$0x73625140]
      %v785 = vshrl.u32 %v784, 16
      %v787 = vrot.slane %v785, 4
      %v788 = vsel %vm433, %v385, %v756
      %v791 = vsel %vm435, %v788, %v763
      %v793 = vsel %vm442, %v791, %v766
      %v795 = vsel %vm444, %v793, %v770
      %v797 = vsel %vm450, %v795, %v773
      %v800 = vsel %vm452, %v797, %v776
      %v802 = vsel %vm459, %v800, %v781
      %v805 = vsel %vm461, %v802, %v787
      %v806 = vand.u32 %v805, %v500
      %808 = vmatpush.bf16.msra.mxu0 0
      %809 = vmatpush.bf16.msra.mxu0 0
      %810 = vmatpush.bf16.msra.mxu0 0
      %811 = vmatpush.bf16.msra.mxu0 0
      %812 = vmatpush.bf16.msra.mxu0 0
      %813 = vmatpush.bf16.msra.mxu0 0
      %814 = vmatpush.bf16.msra.mxu0 0
      %815 = vmatpush.bf16.msra.mxu0 %v806
      %816 = vmatmul.bf16.gmra.mxu0 %v487
      %v817 = vpop.f32.mrf.mxu0
      %v818 = vadd.f32 0.0, %v817
      %v819 = vpop.f32.mrf.mxu0
      %v820 = vadd.f32 0.0, %v819
      %821 = vmatmul.bf16.gmra.mxu0 %v490
      %v822 = vpop.f32.mrf.mxu0
      %v823 = vadd.f32 0.0, %v822
      %v824 = vpop.f32.mrf.mxu0
      %v825 = vadd.f32 0.0, %v824
      %826 = vmatmul.bf16.gmra.mxu0 %v493
      %v827 = vpop.f32.mrf.mxu0
      %v828 = vadd.f32 0.0, %v827
      %v829 = vpop.f32.mrf.mxu0
      %v830 = vadd.f32 0.0, %v829
      %831 = vmatmul.bf16.gmra.mxu0 %v496
      %v832 = vpop.f32.mrf.mxu0
      %v833 = vadd.f32 0.0, %v832
      %v834 = vpop.f32.mrf.mxu0
      %v835 = vadd.f32 0.0, %v834
      %836 = vdwg.mxu0
      %v837 = vmul.f32 %v818, %v535
      %v838 = vmul.f32 %v820, %v540
      %v839 = vmul.f32 %v823, %v545
      %v840 = vmul.f32 %v825, %v550
      %v841 = vmul.f32 %v828, %v555
      %v842 = vmul.f32 %v830, %v560
      %v843 = vmul.f32 %v833, %v565
      %v844 = vmul.f32 %v835, %v570
      %v845 = vadd.f32 %v837, %v583
      %v846 = vadd.f32 %v838, %v588
      %v847 = vadd.f32 %v839, %v593
      %v848 = vadd.f32 %v840, %v598
      %v849 = vadd.f32 %v841, %v603
      %v850 = vadd.f32 %v842, %v608
      %v851 = vadd.f32 %v843, %v613
      %v852 = vadd.f32 %v844, %v618
      %v853 = vmax.f32 %v845, 0.0
      %v854 = vmax.f32 %v846, 0.0
      %v855 = vmax.f32 %v847, 0.0
      %v856 = vmax.f32 %v848, 0.0
      %v857 = vmax.f32 %v849, 0.0
      %v858 = vmax.f32 %v850, 0.0
      %v859 = vmax.f32 %v851, 0.0
      %v860 = vmax.f32 %v852, 0.0
      %v861 = vmax.f32 %v736, %v853
      %v862 = vmax.f32 %v737, %v854
      %v863 = vmax.f32 %v738, %v855
      %v864 = vmax.f32 %v739, %v856
      %v865 = vmax.f32 %v740, %v857
      %v866 = vmax.f32 %v741, %v858
      %v867 = vmax.f32 %v742, %v859
      %v868 = vmax.f32 %v743, %v860
      %869 = vst [vmem:[#allocation1] ss:$4 sm:$0xff] %v337
      %v870 = vld.sshfl [vmem:[#allocation1] sm:$0xff pattern:$0x73625140]
      %v871 = vshll.u32 %v870, 16
      %v873 = vrot.slane %v871, 7
      %875 = vst [vmem:[#allocation1] ss:$4 sm:$0xff] %v337
      %v876 = vld.sshfl [vmem:[#allocation1] sm:$0xff pattern:$0x73625140]
      %v877 = vshrl.u32 %v876, 16
      %v879 = vrot.slane %v877, 6
      %880 = vst [vmem:[#allocation1] ss:$4 sm:$0xff] %v337
      %v881 = vld.sshfl [vmem:[#allocation1] sm:$0xff pattern:$0x73625140]
      %v882 = vshll.u32 %v881, 16
      %v884 = vrot.slane %v882, 7
      %886 = vst [vmem:[#allocation1] ss:$4 sm:$0xff] %v338
      %v887 = vld.sshfl [vmem:[#allocation1] sm:$0xff pattern:$0x73625140]
      %v889 = vrot.slane %v887, 5
      %890 = vst [vmem:[#allocation1] ss:$4 sm:$0xff] %v338
      %v891 = vld.sshfl [vmem:[#allocation1] sm:$0xff pattern:$0x73625140]
      %v893 = vrot.slane %v891, 5
      %895 = vst [vmem:[#allocation1] ss:$4 sm:$0xff] %v338
      %v896 = vld.sshfl [vmem:[#allocation1] sm:$0xff pattern:$0x73625140]
      %v898 = vrot.slane %v896, 5
      %v900 = vsel %vm442, %v336, %v873
      %v903 = vsel %vm444, %v900, %v879
      %v905 = vsel %vm450, %v903, %v884
      %v908 = vsel %vm452, %v905, %v889
      %v910 = vsel %vm459, %v908, %v893
      %v913 = vsel %vm461, %v910, %v898
      %v914 = vand.u32 %v913, %v500
      %916 = vmatpush.bf16.msra.mxu0 0
      %917 = vmatpush.bf16.msra.mxu0 0
      %918 = vmatpush.bf16.msra.mxu0 0
      %919 = vmatpush.bf16.msra.mxu0 0
      %920 = vmatpush.bf16.msra.mxu0 0
      %921 = vmatpush.bf16.msra.mxu0 0
      %922 = vmatpush.bf16.msra.mxu0 0
      %923 = vmatpush.bf16.msra.mxu0 %v914
      %924 = vmatmul.bf16.gmra.mxu0 %v487
      %v925 = vpop.f32.mrf.mxu0
      %v926 = vadd.f32 0.0, %v925
      %v927 = vpop.f32.mrf.mxu0
      %v928 = vadd.f32 0.0, %v927
      %929 = vmatmul.bf16.gmra.mxu0 %v490
      %v930 = vpop.f32.mrf.mxu0
      %v931 = vadd.f32 0.0, %v930
      %v932 = vpop.f32.mrf.mxu0
      %v933 = vadd.f32 0.0, %v932
      %934 = vmatmul.bf16.gmra.mxu0 %v493
      %v935 = vpop.f32.mrf.mxu0
      %v936 = vadd.f32 0.0, %v935
      %v937 = vpop.f32.mrf.mxu0
      %v938 = vadd.f32 0.0, %v937
      %939 = vmatmul.bf16.gmra.mxu0 %v496
      %v940 = vpop.f32.mrf.mxu0
      %v941 = vadd.f32 0.0, %v940
      %v942 = vpop.f32.mrf.mxu0
      %v943 = vadd.f32 0.0, %v942
      %944 = vdwg.mxu0
      %v945 = vmul.f32 %v926, %v535
      %v946 = vmul.f32 %v928, %v540
      %v947 = vmul.f32 %v931, %v545
      %v948 = vmul.f32 %v933, %v550
      %v949 = vmul.f32 %v936, %v555
      %v950 = vmul.f32 %v938, %v560
      %v951 = vmul.f32 %v941, %v565
      %v952 = vmul.f32 %v943, %v570
      %v953 = vadd.f32 %v945, %v583
      %v954 = vadd.f32 %v946, %v588
      %v955 = vadd.f32 %v947, %v593
      %v956 = vadd.f32 %v948, %v598
      %v957 = vadd.f32 %v949, %v603
      %v958 = vadd.f32 %v950, %v608
      %v959 = vadd.f32 %v951, %v613
      %v960 = vadd.f32 %v952, %v618
      %v961 = vmax.f32 %v953, 0.0
      %v962 = vmax.f32 %v954, 0.0
      %v963 = vmax.f32 %v955, 0.0
      %v964 = vmax.f32 %v956, 0.0
      %v965 = vmax.f32 %v957, 0.0
      %v966 = vmax.f32 %v958, 0.0
      %v967 = vmax.f32 %v959, 0.0
      %v968 = vmax.f32 %v960, 0.0
      %v969 = vmax.f32 %v861, %v961
      %v970 = vmax.f32 %v862, %v962
      %v971 = vmax.f32 %v863, %v963
      %v972 = vmax.f32 %v864, %v964
      %v973 = vmax.f32 %v865, %v965
      %v974 = vmax.f32 %v866, %v966
      %v975 = vmax.f32 %v867, %v967
      %v976 = vmax.f32 %v868, %v968
      %977 = vst [vmem:[#allocation1] ss:$4 sm:$0xff] %v335
      %v978 = vld.sshfl [vmem:[#allocation1] sm:$0xff pattern:$0x73625140]
      %v979 = vshrl.u32 %v978, 16
      %982 = vst [vmem:[#allocation1] ss:$4 sm:$0xff] %v335
      %v983 = vld.sshfl [vmem:[#allocation1] sm:$0xff pattern:$0x73625140]
      %v984 = vshll.u32 %v983, 16
      %v986 = vrot.slane %v984, 1
      %988 = vst [vmem:[#allocation1] ss:$4 sm:$0xff] %v335
      %v989 = vld.sshfl [vmem:[#allocation1] sm:$0xff pattern:$0x73625140]
      %v990 = vshrl.u32 %v989, 16
      %992 = vst [vmem:[#allocation1] ss:$4 sm:$0xff] %v336
      %v993 = vld.sshfl [vmem:[#allocation1] sm:$0xff pattern:$0x73625140]
      %v995 = vrot.slane %v993, 7
      %997 = vst [vmem:[#allocation1] ss:$4 sm:$0xff] %v336
      %v998 = vld.sshfl [vmem:[#allocation1] sm:$0xff pattern:$0x73625140]
      %v1000 = vrot.slane %v998, 7
      %1001 = vst [vmem:[#allocation1] ss:$4 sm:$0xff] %v336
      %v1002 = vld.sshfl [vmem:[#allocation1] sm:$0xff pattern:$0x73625140]
      %v1004 = vrot.slane %v1002, 7
      %1006 = vst [vmem:[#allocation1] ss:$4 sm:$0xff] %v337
      %v1007 = vld.sshfl [vmem:[#allocation1] sm:$0xff pattern:$0x73625140]
      %v1008 = vshrl.u32 %v1007, 16
      %v1010 = vrot.slane %v1008, 5
      %1011 = vst [vmem:[#allocation1] ss:$4 sm:$0xff] %v337
      %v1012 = vld.sshfl [vmem:[#allocation1] sm:$0xff pattern:$0x73625140]
      %v1013 = vshll.u32 %v1012, 16
      %v1015 = vrot.slane %v1013, 6
      %1017 = vst [vmem:[#allocation1] ss:$4 sm:$0xff] %v337
      %v1018 = vld.sshfl [vmem:[#allocation1] sm:$0xff pattern:$0x73625140]
      %v1019 = vshrl.u32 %v1018, 16
      %v1021 = vrot.slane %v1019, 5
      %v1022 = vsel %vm433, %v979, %v986
      %v1025 = vsel %vm435, %v1022, %v990
      %v1027 = vsel %vm442, %v1025, %v995
      %v1030 = vsel %vm444, %v1027, %v1000
      %v1032 = vsel %vm450, %v1030, %v1004
      %v1035 = vsel %vm452, %v1032, %v1010
      %v1037 = vsel %vm459, %v1035, %v1015
      %v1040 = vsel %vm461, %v1037, %v1021
      %v1041 = vand.u32 %v1040, %v500
      %1043 = vmatpush.bf16.msra.mxu0 0
      %1044 = vmatpush.bf16.msra.mxu0 0
      %1045 = vmatpush.bf16.msra.mxu0 0
      %1046 = vmatpush.bf16.msra.mxu0 0
      %1047 = vmatpush.bf16.msra.mxu0 0
      %1048 = vmatpush.bf16.msra.mxu0 0
      %1049 = vmatpush.bf16.msra.mxu0 0
      %1050 = vmatpush.bf16.msra.mxu0 %v1041
      %1051 = vmatmul.bf16.gmra.mxu0 %v487
      %v1052 = vpop.f32.mrf.mxu0
      %v1053 = vadd.f32 0.0, %v1052
      %v1054 = vpop.f32.mrf.mxu0
      %v1055 = vadd.f32 0.0, %v1054
      %1056 = vmatmul.bf16.gmra.mxu0 %v490
      %v1057 = vpop.f32.mrf.mxu0
      %v1058 = vadd.f32 0.0, %v1057
      %v1059 = vpop.f32.mrf.mxu0
      %v1060 = vadd.f32 0.0, %v1059
      %1061 = vmatmul.bf16.gmra.mxu0 %v493
      %v1062 = vpop.f32.mrf.mxu0
      %v1063 = vadd.f32 0.0, %v1062
      %v1064 = vpop.f32.mrf.mxu0
      %v1065 = vadd.f32 0.0, %v1064
      %1066 = vmatmul.bf16.gmra.mxu0 %v496
      %v1067 = vpop.f32.mrf.mxu0
      %v1068 = vadd.f32 0.0, %v1067
      %v1069 = vpop.f32.mrf.mxu0
      %v1070 = vadd.f32 0.0, %v1069
      %1071 = vdwg.mxu0
      %v1072 = vmul.f32 %v1053, %v535
      %v1073 = vmul.f32 %v1055, %v540
      %v1074 = vmul.f32 %v1058, %v545
      %v1075 = vmul.f32 %v1060, %v550
      %v1076 = vmul.f32 %v1063, %v555
      %v1077 = vmul.f32 %v1065, %v560
      %v1078 = vmul.f32 %v1068, %v565
      %v1079 = vmul.f32 %v1070, %v570
      %v1080 = vadd.f32 %v1072, %v583
      %v1081 = vadd.f32 %v1073, %v588
      %v1082 = vadd.f32 %v1074, %v593
      %v1083 = vadd.f32 %v1075, %v598
      %v1084 = vadd.f32 %v1076, %v603
      %v1085 = vadd.f32 %v1077, %v608
      %v1086 = vadd.f32 %v1078, %v613
      %v1087 = vadd.f32 %v1079, %v618
      %v1088 = vmax.f32 %v1080, 0.0
      %v1089 = vmax.f32 %v1081, 0.0
      %v1090 = vmax.f32 %v1082, 0.0
      %v1091 = vmax.f32 %v1083, 0.0
      %v1092 = vmax.f32 %v1084, 0.0
      %v1093 = vmax.f32 %v1085, 0.0
      %v1094 = vmax.f32 %v1086, 0.0
      %v1095 = vmax.f32 %v1087, 0.0
      %1096 = vst [vmem:[#allocation1] ss:$4 sm:$0xff] %v335
      %v1097 = vld.sshfl [vmem:[#allocation1] sm:$0xff pattern:$0x73625140]
      %1099 = vrot.lane.b32.xlu0 %v1097, 127
      %v1100 = vpop.permute.xlu0 %1099
      %v1102 = vsel %vm371, %v1100, 0
      %1103 = vst [vmem:[#allocation1] ss:$4 sm:$0xff] %v336
      %v1104 = vld.sshfl [vmem:[#allocation1] sm:$0xff pattern:$0x73625140]
      %1106 = vrot.lane.b32.xlu0 %v1104, 127
      %v1107 = vpop.permute.xlu0 %1106
      %v1109 = vsel %vm371, %v1107, 0
      %1110 = vst [vmem:[#allocation1] ss:$4 sm:$0xff] %v337
      %v1111 = vld.sshfl [vmem:[#allocation1] sm:$0xff pattern:$0x73625140]
      %1113 = vrot.lane.b32.xlu0 %v1111, 127
      %v1114 = vpop.permute.xlu0 %1113
      %v1116 = vsel %vm371, %v1114, 0
      %1117 = vst [vmem:[#allocation1] ss:$4 sm:$0xff] %v335
      %v1118 = vld.sshfl [vmem:[#allocation1] sm:$0xff pattern:$0x73625140]
      %v1120 = vrot.slane %v1118, 1
      %1122 = vst [vmem:[#allocation1] ss:$4 sm:$0xff] %v335
      %v1123 = vld.sshfl [vmem:[#allocation1] sm:$0xff pattern:$0x73625140]
      %v1125 = vrot.slane %v1123, 1
      %v1128 = vrot.slane %v1102, 7
      %1129 = vst [vmem:[#allocation1] ss:$4 sm:$0xff] %v336
      %v1130 = vld.sshfl [vmem:[#allocation1] sm:$0xff pattern:$0x73625140]
      %v1131 = vshll.u32 %v1130, 16
      %1134 = vst [vmem:[#allocation1] ss:$4 sm:$0xff] %v336
      %v1135 = vld.sshfl [vmem:[#allocation1] sm:$0xff pattern:$0x73625140]
      %v1136 = vshrl.u32 %v1135, 16
      %v1138 = vrot.slane %v1136, 7
      %v1139 = vshll.u32 %v1109, 16
      %v1141 = vrot.slane %v1139, 6
      %s1143 = scalar_lea.vmem [#allocation1], 1
      %1144 = vst [vmem:[%s1143] ss:$4 sm:$0xff] %v337
      %v1145 = vld.sshfl [vmem:[#allocation1] sm:$0xff pattern:$0x73625140]
      %s1146 = scalar_lea.vmem [#allocation1], 1
      %1147 = vst [vmem:[%s1146] ss:$4 sm:$0xff] %v337
      %v1148 = vld.sshfl [vmem:[#allocation1] sm:$0xff pattern:$0x73625140]
      %v1151 = vrot.slane %v1116, 4
      %v1152 = vsel %vm433, %v1120, %v1125
      %v1155 = vsel %vm435, %v1152, %v1128
      %v1157 = vsel %vm442, %v1155, %v1131
      %v1160 = vsel %vm444, %v1157, %v1138
      %v1162 = vsel %vm450, %v1160, %v1141
      %v1164 = vsel %vm452, %v1162, %v1145
      %v1166 = vsel %vm459, %v1164, %v1148
      %v1169 = vsel %vm461, %v1166, %v1151
      %v1170 = vand.u32 %v1169, %v500
      %1172 = vmatpush.bf16.msra.mxu0 0
      %1173 = vmatpush.bf16.msra.mxu0 0
      %1174 = vmatpush.bf16.msra.mxu0 0
      %1175 = vmatpush.bf16.msra.mxu0 0
      %1176 = vmatpush.bf16.msra.mxu0 0
      %1177 = vmatpush.bf16.msra.mxu0 0
      %1178 = vmatpush.bf16.msra.mxu0 0
      %1179 = vmatpush.bf16.msra.mxu0 %v1170
      %1180 = vmatmul.bf16.gmra.mxu0 %v487
      %v1181 = vpop.f32.mrf.mxu0
      %v1182 = vadd.f32 0.0, %v1181
      %v1183 = vpop.f32.mrf.mxu0
      %v1184 = vadd.f32 0.0, %v1183
      %1185 = vmatmul.bf16.gmra.mxu0 %v490
      %v1186 = vpop.f32.mrf.mxu0
      %v1187 = vadd.f32 0.0, %v1186
      %v1188 = vpop.f32.mrf.mxu0
      %v1189 = vadd.f32 0.0, %v1188
      %1190 = vmatmul.bf16.gmra.mxu0 %v493
      %v1191 = vpop.f32.mrf.mxu0
      %v1192 = vadd.f32 0.0, %v1191
      %v1193 = vpop.f32.mrf.mxu0
      %v1194 = vadd.f32 0.0, %v1193
      %1195 = vmatmul.bf16.gmra.mxu0 %v496
      %v1196 = vpop.f32.mrf.mxu0
      %v1197 = vadd.f32 0.0, %v1196
      %v1198 = vpop.f32.mrf.mxu0
      %v1199 = vadd.f32 0.0, %v1198
      %1200 = vdwg.mxu0
      %v1201 = vmul.f32 %v1182, %v535
      %v1202 = vmul.f32 %v1184, %v540
      %v1203 = vmul.f32 %v1187, %v545
      %v1204 = vmul.f32 %v1189, %v550
      %v1205 = vmul.f32 %v1192, %v555
      %v1206 = vmul.f32 %v1194, %v560
      %v1207 = vmul.f32 %v1197, %v565
      %v1208 = vmul.f32 %v1199, %v570
      %v1209 = vadd.f32 %v1201, %v583
      %v1210 = vadd.f32 %v1202, %v588
      %v1211 = vadd.f32 %v1203, %v593
      %v1212 = vadd.f32 %v1204, %v598
      %v1213 = vadd.f32 %v1205, %v603
      %v1214 = vadd.f32 %v1206, %v608
      %v1215 = vadd.f32 %v1207, %v613
      %v1216 = vadd.f32 %v1208, %v618
      %v1217 = vmax.f32 %v1209, 0.0
      %v1218 = vmax.f32 %v1210, 0.0
      %v1219 = vmax.f32 %v1211, 0.0
      %v1220 = vmax.f32 %v1212, 0.0
      %v1221 = vmax.f32 %v1213, 0.0
      %v1222 = vmax.f32 %v1214, 0.0
      %v1223 = vmax.f32 %v1215, 0.0
      %v1224 = vmax.f32 %v1216, 0.0
      %v1225 = vmax.f32 %v1088, %v1217
      %v1226 = vmax.f32 %v1089, %v1218
      %v1227 = vmax.f32 %v1090, %v1219
      %v1228 = vmax.f32 %v1091, %v1220
      %v1229 = vmax.f32 %v1092, %v1221
      %v1230 = vmax.f32 %v1093, %v1222
      %v1231 = vmax.f32 %v1094, %v1223
      %v1232 = vmax.f32 %v1095, %v1224
      %1233 = vst [vmem:[#allocation1] ss:$4 sm:$0xff] %v336
      %v1234 = vld.sshfl [vmem:[#allocation1] sm:$0xff pattern:$0x73625140]
      %v1235 = vshrl.u32 %v1234, 16
      %1238 = vst [vmem:[#allocation1] ss:$4 sm:$0xff] %v336
      %v1239 = vld.sshfl [vmem:[#allocation1] sm:$0xff pattern:$0x73625140]
      %v1240 = vshll.u32 %v1239, 16
      %v1242 = vrot.slane %v1240, 1
      %1244 = vst [vmem:[#allocation1] ss:$4 sm:$0xff] %v336
      %v1245 = vld.sshfl [vmem:[#allocation1] sm:$0xff pattern:$0x73625140]
      %v1246 = vshrl.u32 %v1245, 16
      %1248 = vst [vmem:[#allocation1] ss:$4 sm:$0xff] %v337
      %v1249 = vld.sshfl [vmem:[#allocation1] sm:$0xff pattern:$0x73625140]
      %v1251 = vrot.slane %v1249, 7
      %1253 = vst [vmem:[#allocation1] ss:$4 sm:$0xff] %v337
      %v1254 = vld.sshfl [vmem:[#allocation1] sm:$0xff pattern:$0x73625140]
      %v1256 = vrot.slane %v1254, 7
      %1257 = vst [vmem:[#allocation1] ss:$4 sm:$0xff] %v337
      %v1258 = vld.sshfl [vmem:[#allocation1] sm:$0xff pattern:$0x73625140]
      %v1260 = vrot.slane %v1258, 7
      %1262 = vst [vmem:[#allocation1] ss:$4 sm:$0xff] %v338
      %v1263 = vld.sshfl [vmem:[#allocation1] sm:$0xff pattern:$0x73625140]
      %v1264 = vshrl.u32 %v1263, 16
      %v1266 = vrot.slane %v1264, 5
      %1267 = vst [vmem:[#allocation1] ss:$4 sm:$0xff] %v338
      %v1268 = vld.sshfl [vmem:[#allocation1] sm:$0xff pattern:$0x73625140]
      %v1269 = vshll.u32 %v1268, 16
      %v1271 = vrot.slane %v1269, 6
      %1273 = vst [vmem:[#allocation1] ss:$4 sm:$0xff] %v338
      %v1274 = vld.sshfl [vmem:[#allocation1] sm:$0xff pattern:$0x73625140]
      %v1275 = vshrl.u32 %v1274, 16
      %v1277 = vrot.slane %v1275, 5
      %v1278 = vsel %vm433, %v1235, %v1242
      %v1281 = vsel %vm435, %v1278, %v1246
      %v1283 = vsel %vm442, %v1281, %v1251
      %v1286 = vsel %vm444, %v1283, %v1256
      %v1288 = vsel %vm450, %v1286, %v1260
      %v1291 = vsel %vm452, %v1288, %v1266
      %v1293 = vsel %vm459, %v1291, %v1271
      %v1296 = vsel %vm461, %v1293, %v1277
      %v1297 = vand.u32 %v1296, %v500
      %1299 = vmatpush.bf16.msra.mxu0 0
      %1300 = vmatpush.bf16.msra.mxu0 0
      %1301 = vmatpush.bf16.msra.mxu0 0
      %1302 = vmatpush.bf16.msra.mxu0 0
      %1303 = vmatpush.bf16.msra.mxu0 0
      %1304 = vmatpush.bf16.msra.mxu0 0
      %1305 = vmatpush.bf16.msra.mxu0 0
      %1306 = vmatpush.bf16.msra.mxu0 %v1297
      %1307 = vmatmul.bf16.gmra.mxu0 %v487
      %v1308 = vpop.f32.mrf.mxu0
      %v1309 = vadd.f32 0.0, %v1308
      %v1310 = vpop.f32.mrf.mxu0
      %v1311 = vadd.f32 0.0, %v1310
      %1312 = vmatmul.bf16.gmra.mxu0 %v490
      %v1313 = vpop.f32.mrf.mxu0
      %v1314 = vadd.f32 0.0, %v1313
      %v1315 = vpop.f32.mrf.mxu0
      %v1316 = vadd.f32 0.0, %v1315
      %1317 = vmatmul.bf16.gmra.mxu0 %v493
      %v1318 = vpop.f32.mrf.mxu0
      %v1319 = vadd.f32 0.0, %v1318
      %v1320 = vpop.f32.mrf.mxu0
      %v1321 = vadd.f32 0.0, %v1320
      %1322 = vmatmul.bf16.gmra.mxu0 %v496
      %v1323 = vpop.f32.mrf.mxu0
      %v1324 = vadd.f32 0.0, %v1323
      %v1325 = vpop.f32.mrf.mxu0
      %v1326 = vadd.f32 0.0, %v1325
      %1327 = vdwg.mxu0
      %v1328 = vmul.f32 %v1309, %v535
      %v1329 = vmul.f32 %v1311, %v540
      %v1330 = vmul.f32 %v1314, %v545
      %v1331 = vmul.f32 %v1316, %v550
      %v1332 = vmul.f32 %v1319, %v555
      %v1333 = vmul.f32 %v1321, %v560
      %v1334 = vmul.f32 %v1324, %v565
      %v1335 = vmul.f32 %v1326, %v570
      %v1336 = vadd.f32 %v1328, %v583
      %v1337 = vadd.f32 %v1329, %v588
      %v1338 = vadd.f32 %v1330, %v593
      %v1339 = vadd.f32 %v1331, %v598
      %v1340 = vadd.f32 %v1332, %v603
      %v1341 = vadd.f32 %v1333, %v608
      %v1342 = vadd.f32 %v1334, %v613
      %v1343 = vadd.f32 %v1335, %v618
      %v1344 = vmax.f32 %v1336, 0.0
      %v1345 = vmax.f32 %v1337, 0.0
      %v1346 = vmax.f32 %v1338, 0.0
      %v1347 = vmax.f32 %v1339, 0.0
      %v1348 = vmax.f32 %v1340, 0.0
      %v1349 = vmax.f32 %v1341, 0.0
      %v1350 = vmax.f32 %v1342, 0.0
      %v1351 = vmax.f32 %v1343, 0.0
      %v1352 = vmax.f32 %v1225, %v1344
      %v1353 = vmax.f32 %v1226, %v1345
      %v1354 = vmax.f32 %v1227, %v1346
      %v1355 = vmax.f32 %v1228, %v1347
      %v1356 = vmax.f32 %v1229, %v1348
      %v1357 = vmax.f32 %v1230, %v1349
      %v1358 = vmax.f32 %v1231, %v1350
      %v1359 = vmax.f32 %v1232, %v1351
      %1360 = vst [vmem:[#allocation1] ss:$4 sm:$0xff] %v338
      %v1361 = vld.sshfl [vmem:[#allocation1] sm:$0xff pattern:$0x73625140]
      %1363 = vrot.lane.b32.xlu0 %v1361, 127
      %v1364 = vpop.permute.xlu0 %1363
      %v1366 = vsel %vm371, %v1364, 0
      %1367 = vst [vmem:[#allocation1] ss:$4 sm:$0xff] %v336
      %v1368 = vld.sshfl [vmem:[#allocation1] sm:$0xff pattern:$0x73625140]
      %v1370 = vrot.slane %v1368, 1
      %1372 = vst [vmem:[#allocation1] ss:$4 sm:$0xff] %v336
      %v1373 = vld.sshfl [vmem:[#allocation1] sm:$0xff pattern:$0x73625140]
      %v1375 = vrot.slane %v1373, 1
      %v1378 = vrot.slane %v1109, 7
      %1379 = vst [vmem:[#allocation1] ss:$4 sm:$0xff] %v337
      %v1380 = vld.sshfl [vmem:[#allocation1] sm:$0xff pattern:$0x73625140]
      %v1381 = vshll.u32 %v1380, 16
      %1384 = vst [vmem:[#allocation1] ss:$4 sm:$0xff] %v337
      %v1385 = vld.sshfl [vmem:[#allocation1] sm:$0xff pattern:$0x73625140]
      %v1386 = vshrl.u32 %v1385, 16
      %v1388 = vrot.slane %v1386, 7
      %v1389 = vshll.u32 %v1116, 16
      %v1391 = vrot.slane %v1389, 6
      %s1393 = scalar_lea.vmem [#allocation1], 1
      %1394 = vst [vmem:[%s1393] ss:$4 sm:$0xff] %v338
      %v1395 = vld.sshfl [vmem:[#allocation1] sm:$0xff pattern:$0x73625140]
      %s1396 = scalar_lea.vmem [#allocation1], 1
      %1397 = vst [vmem:[%s1396] ss:$4 sm:$0xff] %v338
      %v1398 = vld.sshfl [vmem:[#allocation1] sm:$0xff pattern:$0x73625140]
      %v1401 = vrot.slane %v1366, 4
      %v1402 = vsel %vm433, %v1370, %v1375
      %v1405 = vsel %vm435, %v1402, %v1378
      %v1407 = vsel %vm442, %v1405, %v1381
      %v1410 = vsel %vm444, %v1407, %v1388
      %v1412 = vsel %vm450, %v1410, %v1391
      %v1414 = vsel %vm452, %v1412, %v1395
      %v1416 = vsel %vm459, %v1414, %v1398
      %v1419 = vsel %vm461, %v1416, %v1401
      %v1420 = vand.u32 %v1419, %v500
      %1422 = vmatpush.bf16.msra.mxu0 0
      %1423 = vmatpush.bf16.msra.mxu0 0
      %1424 = vmatpush.bf16.msra.mxu0 0
      %1425 = vmatpush.bf16.msra.mxu0 0
      %1426 = vmatpush.bf16.msra.mxu0 0
      %1427 = vmatpush.bf16.msra.mxu0 0
      %1428 = vmatpush.bf16.msra.mxu0 0
      %1429 = vmatpush.bf16.msra.mxu0 %v1420
      %1430 = vmatmul.bf16.gmra.mxu0 %v487
      %v1431 = vpop.f32.mrf.mxu0
      %v1432 = vadd.f32 0.0, %v1431
      %v1433 = vpop.f32.mrf.mxu0
      %v1434 = vadd.f32 0.0, %v1433
      %1435 = vmatmul.bf16.gmra.mxu0 %v490
      %v1436 = vpop.f32.mrf.mxu0
      %v1437 = vadd.f32 0.0, %v1436
      %v1438 = vpop.f32.mrf.mxu0
      %v1439 = vadd.f32 0.0, %v1438
      %1440 = vmatmul.bf16.gmra.mxu0 %v493
      %v1441 = vpop.f32.mrf.mxu0
      %v1442 = vadd.f32 0.0, %v1441
      %v1443 = vpop.f32.mrf.mxu0
      %v1444 = vadd.f32 0.0, %v1443
      %1445 = vmatmul.bf16.gmra.mxu0 %v496
      %v1446 = vpop.f32.mrf.mxu0
      %v1447 = vadd.f32 0.0, %v1446
      %v1448 = vpop.f32.mrf.mxu0
      %v1449 = vadd.f32 0.0, %v1448
      %1450 = vdwg.mxu0
      %v1451 = vmul.f32 %v1432, %v535
      %v1452 = vmul.f32 %v1434, %v540
      %v1453 = vmul.f32 %v1437, %v545
      %v1454 = vmul.f32 %v1439, %v550
      %v1455 = vmul.f32 %v1442, %v555
      %v1456 = vmul.f32 %v1444, %v560
      %v1457 = vmul.f32 %v1447, %v565
      %v1458 = vmul.f32 %v1449, %v570
      %v1459 = vadd.f32 %v1451, %v583
      %v1460 = vadd.f32 %v1452, %v588
      %v1461 = vadd.f32 %v1453, %v593
      %v1462 = vadd.f32 %v1454, %v598
      %v1463 = vadd.f32 %v1455, %v603
      %v1464 = vadd.f32 %v1456, %v608
      %v1465 = vadd.f32 %v1457, %v613
      %v1466 = vadd.f32 %v1458, %v618
      %v1467 = vmax.f32 %v1459, 0.0
      %v1468 = vmax.f32 %v1460, 0.0
      %v1469 = vmax.f32 %v1461, 0.0
      %v1470 = vmax.f32 %v1462, 0.0
      %v1471 = vmax.f32 %v1463, 0.0
      %v1472 = vmax.f32 %v1464, 0.0
      %v1473 = vmax.f32 %v1465, 0.0
      %v1474 = vmax.f32 %v1466, 0.0
      %v1475 = vmax.f32 %v1352, %v1467
      %v1476 = vmax.f32 %v1353, %v1468
      %v1477 = vmax.f32 %v1354, %v1469
      %v1478 = vmax.f32 %v1355, %v1470
      %v1479 = vmax.f32 %v1356, %v1471
      %v1480 = vmax.f32 %v1357, %v1472
      %v1481 = vmax.f32 %v1358, %v1473
      %v1482 = vmax.f32 %v1359, %v1474
      %1491 = vrot.lane.b32.xlu0 %v1475, 1
      %v1492 = vpop.permute.xlu0 %1491
      %1493 = vrot.lane.b32.xlu0 %v1476, 1
      %v1494 = vpop.permute.xlu0 %1493
      %1495 = vrot.lane.b32.xlu0 %v1477, 1
      %v1496 = vpop.permute.xlu0 %1495
      %1497 = vrot.lane.b32.xlu0 %v1478, 1
      %v1498 = vpop.permute.xlu0 %1497
      %1499 = vrot.lane.b32.xlu0 %v1479, 1
      %v1500 = vpop.permute.xlu0 %1499
      %1501 = vrot.lane.b32.xlu0 %v1480, 1
      %v1502 = vpop.permute.xlu0 %1501
      %1503 = vrot.lane.b32.xlu0 %v1481, 1
      %v1504 = vpop.permute.xlu0 %1503
      %1505 = vrot.lane.b32.xlu0 %v1482, 1
      %v1506 = vpop.permute.xlu0 %1505
      %v1515 = vsel %vm371, 0.0, %v1492
      %v1516 = vsel %vm371, 0.0, %v1494
      %v1517 = vsel %vm371, 0.0, %v1496
      %v1518 = vsel %vm371, 0.0, %v1498
      %v1519 = vsel %vm371, 0.0, %v1500
      %v1520 = vsel %vm371, 0.0, %v1502
      %v1521 = vsel %vm371, 0.0, %v1504
      %v1522 = vsel %vm371, 0.0, %v1506
      %vm1523 = vcmask 15360
      %v1524 = vsel %vm1523, %v969, 0.0
      %v1525 = vsel %vm1523, %v970, 0.0
      %v1526 = vsel %vm1523, %v971, 0.0
      %v1527 = vsel %vm1523, %v972, 0.0
      %v1528 = vsel %vm1523, %v973, 0.0
      %v1529 = vsel %vm1523, %v974, 0.0
      %v1530 = vsel %vm1523, %v975, 0.0
      %v1531 = vsel %vm1523, %v976, 0.0
      %p1532 = scmp.gt.s32.totalorder %s21, 0
      %p1533 = scmp.lt.s32.totalorder %s21, 17
      %p1534 = pnand %p1532, %p1533
      %p1535 = pneg %p1534
      %s1536 = scalar_select %p1535, 1, 0
      %v1537 = vstv %s1536
      %vm1538 = vcmp.eq.s32.totalorder %v1537, 1
      %v1539 = vsel %vm1538, %v1515, 0.0
      %v1540 = vsel %vm1538, %v1516, 0.0
      %v1541 = vsel %vm1538, %v1517, 0.0
      %v1542 = vsel %vm1538, %v1518, 0.0
      %v1543 = vsel %vm1538, %v1519, 0.0
      %v1544 = vsel %vm1538, %v1520, 0.0
      %v1545 = vsel %vm1538, %v1521, 0.0
      %v1546 = vsel %vm1538, %v1522, 0.0
      %v1547 = vsel %vm1538, %v1524, 0.0
      %v1548 = vsel %vm1538, %v1525, 0.0
      %v1549 = vsel %vm1538, %v1526, 0.0
      %v1550 = vsel %vm1538, %v1527, 0.0
      %v1551 = vsel %vm1538, %v1528, 0.0
      %v1552 = vsel %vm1538, %v1529, 0.0
      %v1553 = vsel %vm1538, %v1530, 0.0
      %v1554 = vsel %vm1538, %v1531, 0.0
      %v1555 = vpack.c.bf16 %v1539, %v1539
      %v1556 = vpack.c.bf16 %v1540, %v1540
      %v1557 = vpack.c.bf16 %v1541, %v1541
      %v1558 = vpack.c.bf16 %v1542, %v1542
      %v1559 = vpack.c.bf16 %v1543, %v1543
      %v1560 = vpack.c.bf16 %v1544, %v1544
      %v1561 = vpack.c.bf16 %v1545, %v1545
      %v1562 = vpack.c.bf16 %v1546, %v1546
      %vm1563 = vcmask 19456
      %1564 = vst.msk [vmem:[%s333] sm:$0xf] %vm1563, %v1555
      %1565 = vst.msk [vmem:[%s333 + $0x4] sm:$0xf] %vm1563, %v1556
      %1566 = vst.msk [vmem:[%s333 + $0x8] sm:$0xf] %vm1563, %v1557
      %1567 = vst.msk [vmem:[%s333 + $0xc] sm:$0xf] %vm1563, %v1558
      %1568 = vst.msk [vmem:[%s333 + $0x10] sm:$0xf] %vm1563, %v1559
      %1569 = vst.msk [vmem:[%s333 + $0x14] sm:$0xf] %vm1563, %v1560
      %1570 = vst.msk [vmem:[%s333 + $0x18] sm:$0xf] %vm1563, %v1561
      %1571 = vst.msk [vmem:[%s333 + $0x1c] sm:$0xf] %vm1563, %v1562
      %v1572 = vpack.c.bf16 %v1547, %v1547
      %v1573 = vpack.c.bf16 %v1548, %v1548
      %v1574 = vpack.c.bf16 %v1549, %v1549
      %v1575 = vpack.c.bf16 %v1550, %v1550
      %v1576 = vpack.c.bf16 %v1551, %v1551
      %v1577 = vpack.c.bf16 %v1552, %v1552
      %v1578 = vpack.c.bf16 %v1553, %v1553
      %v1579 = vpack.c.bf16 %v1554, %v1554
      %s1580 = scalar_lea.vmem %s333, 32
      %1581 = vst.msk [vmem:[%s1580] sm:$0xf] %vm1563, %v1572
      %1582 = vst.msk [vmem:[%s1580 + $0x4] sm:$0xf] %vm1563, %v1573
      %1583 = vst.msk [vmem:[%s1580 + $0x8] sm:$0xf] %vm1563, %v1574
      %1584 = vst.msk [vmem:[%s1580 + $0xc] sm:$0xf] %vm1563, %v1575
      %1585 = vst.msk [vmem:[%s1580 + $0x10] sm:$0xf] %vm1563, %v1576
      %1586 = vst.msk [vmem:[%s1580 + $0x14] sm:$0xf] %vm1563, %v1577
      %1587 = vst.msk [vmem:[%s1580 + $0x18] sm:$0xf] %vm1563, %v1578
      %1588 = vst.msk [vmem:[%s1580 + $0x1c] sm:$0xf] %vm1563, %v1579
      %p1589 = scmp.lt.s32.totalorder %s20, 1
      %s1590 = scalar_select %p1589, %s20, 1
      %p1591 = scmp.lt.s32.totalorder %s21, 17
      %s1592 = scalar_select %p1591, %s21, 17
      %s1593 = smul.addr %s1592, 16
      %s1594 = smul.addr %s1590, 288
      %s1595 = sadd.s32 %s1593, %s1594
      %s1596 = smul.addr %s1595, 4
      %s1597 = scalar_lea.vmem %s5, %s1596
      // Predicated region
      $region41: #{forward.5} parent=39 // pred_check
        %p1598 = pneg %p177
      $region42: #{forward.5} parent=39 // pred_check_branch
        %1600 = sbr.rel (%p1598) target = $region44
      $region43: #{forward.5} parent=39 // pred_region
        _
      $region44: #{forward.5} parent=39 // pred_fallthru
        _
    $region40: #{forward.5} parent=5 // pred_fallthru
      _
    %p1601 = scmp.le.s32.totalorder 2, %s11
    // Predicated region
    $region45: #{forward.5} parent=5 // pred_check
      %p1602 = pneg %p1601
    $region46: #{forward.5} parent=5 // pred_check_branch
      %1604 = sbr.rel (%p1602) target = $region48
    $region47: #{forward.5} parent=5 // pred_region
      %s1605 = ssub.s32 %s11, 2
      // Predicated region
      $region49: #{forward.5} parent=47 // pred_check
        %p1606 = pneg %p183
      $region50: #{forward.5} parent=47 // pred_check_branch
        %1608 = sbr.rel (%p1606) target = $region52
      $region51: #{forward.5} parent=47 // pred_region
        %p1609 = scmp.lt.s32.totalorder %s22, 1
        %s1610 = scalar_select %p1609, %s22, 1
        %p1611 = scmp.lt.s32.totalorder %s23, 17
        %s1612 = scalar_select %p1611, %s23, 17
        %s1613 = smul.addr %s1612, 16
        %s1614 = smul.addr %s1610, 288
        %s1615 = sadd.s32 %s1613, %s1614
        %s1616 = smul.addr %s1615, 4
        %s1617 = scalar_lea.vmem %s5, %s1616
      $region52: #{forward.5} parent=47 // pred_fallthru
        _
    $region48: #{forward.5} parent=5 // pred_fallthru
      _
  $region6: #{forward.5} parent=0 // loop_footer
    %s15 = sadd.s32 1, %s11
  $region7: #{forward.5} parent=0 // loop_footer_branch
    %10 = sbr.rel target = $region3
  $region8: #{forward.5} parent=0 // loop_exit
    _

</llo_original>
